<compile_context>
chip_gen: v7x
topology: tpu7x:2x2x1
jax: 0.10.0
libtpu: 0.0.40
codegen_flags: <defaults>
</compile_context>

<pallas_src>
import jax
import jax.numpy as jnp
from jax import lax
from jax.experimental import pallas as pl
from jax.experimental.pallas import tpu as pltpu

HIDDEN = 384           # config.hidden_dim  (= 3 * 128 lanes)
CLIP_DIM = 512         # CLIP image feature dim (img_map input)
GP_DIM = 128           # config.global_pref_dim
NUM_LAYERS = 2         # config.cross_attention_layers
LN_EPS = 1e-5          # torch.nn.LayerNorm default eps
L2_EPS = 1e-12         # torch F.normalize eps


def _layernorm(x, g, b):
    mu = jnp.mean(x, axis=-1, keepdims=True)
    xc = x - mu
    var = jnp.mean(xc * xc, axis=-1, keepdims=True)
    return xc * lax.rsqrt(var + LN_EPS) * g + b


def integrated_kernel(
    # data
    text_ref, img_ref, sent_ref, rat_ref, mask_ref,
    # img_map
    wi_ref, bi_ref,
    # fused cross-attention (both layers concatenated along output: (384, 768))
    wattn_ref, battn_ref,
    # per-layer LayerNorm / FFN weights (stacked over NUM_LAYERS)
    ln1g_ref, ln1b_ref, w1_ref, b1_ref, w2_ref, b2_ref, ln2g_ref, ln2b_ref,
    # cond_proj + FiLM fully folded: gamma|beta = film_bias + s * film_scale
    film_scale_ref, film_bias_ref,
    # pred head
    wp_ref, bp_ref,
    # outputs
    pred_ref, loss_ref,
):
    f32 = jnp.float32
    bf16 = jnp.bfloat16

    # --- encode_images tail: img_map Linear(512->384) + L2 normalize ---
    img = jnp.dot(img_ref[...].astype(bf16), wi_ref[...],
                  preferred_element_type=f32) + bi_ref[...]
    img = img * lax.rsqrt(jnp.sum(img * img, axis=-1, keepdims=True) + L2_EPS)

    # --- 2x CrossAttentionBlock ---
    # nn.MultiheadAttention with a single key/value token: softmax over a
    # length-1 key axis is exactly 1 for every head, so the attention output
    # reduces exactly to out_proj(v_proj(key_value)) (eval mode, dropout=0).
    # kv is identical for both layers, so both layers' fused (Wv@Wo) products
    # are evaluated with one 768-wide MXU pass.
    attn_both = jnp.dot(img.astype(bf16), wattn_ref[...],
                        preferred_element_type=f32) + battn_ref[...]  # (B, 2H)

    q = text_ref[...]   # (B, H) query (seq length 1, squeezed)
    for l in range(NUM_LAYERS):
        attn_out = attn_both[:, l * HIDDEN:(l + 1) * HIDDEN]
        x = _layernorm(q + attn_out, ln1g_ref[l], ln1b_ref[l])
        h = jnp.maximum(
            jnp.dot(x.astype(bf16), w1_ref[l],
                    preferred_element_type=f32) + b1_ref[l], 0.0)
        ff = jnp.dot(h.astype(bf16), w2_ref[l],
                     preferred_element_type=f32) + b2_ref[l]
        q = _layernorm(x + ff, ln2g_ref[l], ln2b_ref[l])

    fused = q  # (B, H)

    # --- cond_proj + FiLM gate (host-folded; affine in the sentiment scalar):
    #   cond_vec       = (gp @ Wc_gp + bc) + s * Wc_s
    #   [gamma | beta] = cond_vec @ [Wg|Wb] + [bg|bb]
    #                  = film_bias + s * film_scale           (both (1, 2H))
    gb = film_bias_ref[...] + sent_ref[...] * film_scale_ref[...]       # (B, 2H)
    gated = fused * gb[:, :HIDDEN] + gb[:, HIDDEN:]

    # --- pred head + masked MSE loss (mask zeroes padded rows, sums to 1/B) ---
    pred = jnp.dot(gated, wp_ref[...], preferred_element_type=f32) + bp_ref[...]
    pred_ref[...] = pred

    diff = pred - rat_ref[...]
    loss_ref[...] = jnp.sum(mask_ref[...] * diff * diff, keepdims=True)  # (1,1)


PARAM_ORDER = [
    "wi", "bi",
    "wattn", "battn",
    "ln1g", "ln1b", "w1", "b1", "w2", "b2", "ln2g", "ln2b",
    "film_scale", "film_bias",
    "wp", "bp",
]


def integrated_model_forward(text_emb, img_raw, sentiment, ratings, params):
    B = text_emb.shape[0]
    Bp = ((B + 7) // 8) * 8          # pad batch to the f32 sublane tile
    pad = Bp - B

    def pad_rows(x):
        return jnp.pad(x, ((0, pad), (0, 0))) if pad else x

    text = pad_rows(text_emb.astype(jnp.float32))
    img = pad_rows(img_raw.astype(jnp.float32))
    sent = pad_rows(sentiment.reshape(B, 1).astype(jnp.float32))
    rat = pad_rows(ratings.reshape(B, 1).astype(jnp.float32))
    mask = jnp.concatenate(
        [jnp.full((B, 1), 1.0 / B, jnp.float32),
         jnp.zeros((pad, 1), jnp.float32)], axis=0) if pad else \
        jnp.full((B, 1), 1.0 / B, jnp.float32)

    inputs = [text, img, sent, rat, mask] + [params[k] for k in PARAM_ORDER]

    vspec = pl.BlockSpec(memory_space=pltpu.MemorySpace.VMEM)
    pred, loss = pl.pallas_call(
        integrated_kernel,
        out_shape=(
            jax.ShapeDtypeStruct((Bp, 1), jnp.float32),
            jax.ShapeDtypeStruct((1, 1), jnp.float32),
        ),
        in_specs=[vspec] * len(inputs),
        out_specs=(vspec, vspec),
        compiler_params=pltpu.CompilerParams(vmem_limit_bytes=16 << 20),
    )(*inputs)
    return pred[:B, 0], loss[0, 0]
    # NOTE: at production batch sizes, add a 1-D grid over batch tiles with
    # constant-index weight BlockSpecs and dimension_semantics=("parallel",).


def init_params(key):
    keys = iter(jax.random.split(key, 128))
    bf16 = jnp.bfloat16

    def lin(in_d, out_d):
        # deterministic synthetic init; weight stored (in, out) = torch W^T
        w = jax.random.normal(next(keys), (in_d, out_d), jnp.float32) / jnp.sqrt(
            jnp.float32(in_d))
        b = 0.01 * jax.random.normal(next(keys), (1, out_d), jnp.float32)
        return w, b

    def ln_params():
        g = 1.0 + 0.1 * jax.random.normal(next(keys), (1, HIDDEN), jnp.float32)
        b = 0.1 * jax.random.normal(next(keys), (1, HIDDEN), jnp.float32)
        return g, b

    p = {}
    wi, p["bi"] = lin(CLIP_DIM, HIDDEN)
    p["wi"] = wi.astype(bf16)

    wattn_list, battn_list = [], []
    stacks = {k: [] for k in
              ["ln1g", "ln1b", "w1", "b1", "w2", "b2", "ln2g", "ln2b"]}
    for _ in range(NUM_LAYERS):
        wv, bv = lin(HIDDEN, HIDDEN)      # v_proj (length-1 KV: q/k proj unused)
        wo, bo = lin(HIDDEN, HIDDEN)      # out_proj
        # Host-fold attention: attn_out = kv @ (Wv @ Wo) + (bv @ Wo + bo)
        wattn_list.append(jnp.dot(wv, wo))
        battn_list.append(jnp.dot(bv, wo) + bo)
        g1, b1ln = ln_params()
        w1, b1 = lin(HIDDEN, HIDDEN)
        w2, b2 = lin(HIDDEN, HIDDEN)
        g2, b2ln = ln_params()
        for k, v in [("ln1g", g1), ("ln1b", b1ln),
                     ("w1", w1), ("b1", b1), ("w2", w2), ("b2", b2),
                     ("ln2g", g2), ("ln2b", b2ln)]:
            stacks[k].append(v)

    # both layers' fused attention weights side by side -> one 768-wide matmul
    p["wattn"] = jnp.concatenate(wattn_list, axis=1).astype(bf16)   # (H, 2H)
    p["battn"] = jnp.concatenate(battn_list, axis=1)                # (1, 2H)
    for k, v in stacks.items():
        arr = jnp.stack(v, axis=0)                    # (NUM_LAYERS, ...)
        p[k] = arr.astype(bf16) if k in ("w1", "w2") else arr

    # global_pref + cond_proj (Linear(129, 384)) + FiLM gamma/beta Linears,
    # all folded on the host into two (1, 2H) vectors affine in sentiment s:
    #   cond_vec       = condb + s * wcs
    #   [gamma | beta] = condb @ [Wg|Wb] + [bg|bb]  +  s * (wcs @ [Wg|Wb])
    gp = jax.random.normal(next(keys), (1, GP_DIM), jnp.float32)
    wc, bc = lin(GP_DIM + 1, HIDDEN)                  # cond_proj: Linear(129, 384)
    condb = jnp.dot(gp, wc[:GP_DIM, :]) + bc          # (1, H)  gp term
    wcs = wc[GP_DIM:, :]                              # (1, H)  sentiment row
    wg, bg = lin(HIDDEN, HIDDEN)                      # FiLM gamma
    wb, bb = lin(HIDDEN, HIDDEN)                      # FiLM beta
    wfilm = jnp.concatenate([wg, wb], axis=1)         # (H, 2H)
    bfilm = jnp.concatenate([bg, bb], axis=1)         # (1, 2H)
    p["film_scale"] = jnp.dot(wcs, wfilm)             # (1, 2H)
    p["film_bias"] = jnp.dot(condb, wfilm) + bfilm    # (1, 2H)

    p["wp"], p["bp"] = lin(HIDDEN, 1)                 # pred head (tiny, kept f32)
    return p


if __name__ == "__main__":
    key = jax.random.PRNGKey(0)
    kp, kt, ki, ks, kr = jax.random.split(key, 5)

    B = 4  # config.batch_size
    params = init_params(kp)

    # Synthetic encoder outputs (CLIP / SentenceTransformer / sentiment model
    # are external pretrained nets — see TODO below).
    text_emb = jax.random.normal(kt, (B, HIDDEN), jnp.float32)
    text_emb = text_emb / jnp.linalg.norm(text_emb, axis=-1, keepdims=True)
    img_raw = jax.random.normal(ki, (B, CLIP_DIM), jnp.float32)
    sentiment = jax.random.uniform(ks, (B,), jnp.float32)
    ratings = 1.0 + 4.0 * jax.random.uniform(kr, (B,), jnp.float32)

    # TODO(synk): CLIP image encoding, SentenceTransformer text encoding and
    # DistilBERT sentiment_analysis are pretrained external models with no
    # Pallas equivalent; their outputs are synthesized above.

    pred, loss = integrated_model_forward(text_emb, img_raw, sentiment, ratings, params)
    jax.block_until_ready((pred, loss))
    assert pred.shape == (B,) and bool(jnp.all(jnp.isfinite(pred)))
    assert loss.shape == () and bool(jnp.isfinite(loss))
    print("KERNEL_OK")
</pallas_src>

<mosaic_0001>
module attributes {stable_mosaic.version = 11 : i64} {
  func.func @integrated_kernel(%arg0: memref<8x384xf32, #tpu.memory_space<vmem>>, %arg1: memref<8x512xf32, #tpu.memory_space<vmem>>, %arg2: memref<8x1xf32, #tpu.memory_space<vmem>>, %arg3: memref<8x1xf32, #tpu.memory_space<vmem>>, %arg4: memref<8x1xf32, #tpu.memory_space<vmem>>, %arg5: memref<512x384xbf16, #tpu.memory_space<vmem>>, %arg6: memref<1x384xf32, #tpu.memory_space<vmem>>, %arg7: memref<384x768xbf16, #tpu.memory_space<vmem>>, %arg8: memref<1x768xf32, #tpu.memory_space<vmem>>, %arg9: memref<2x1x384xf32, #tpu.memory_space<vmem>>, %arg10: memref<2x1x384xf32, #tpu.memory_space<vmem>>, %arg11: memref<2x384x384xbf16, #tpu.memory_space<vmem>>, %arg12: memref<2x1x384xf32, #tpu.memory_space<vmem>>, %arg13: memref<2x384x384xbf16, #tpu.memory_space<vmem>>, %arg14: memref<2x1x384xf32, #tpu.memory_space<vmem>>, %arg15: memref<2x1x384xf32, #tpu.memory_space<vmem>>, %arg16: memref<2x1x384xf32, #tpu.memory_space<vmem>>, %arg17: memref<1x768xf32, #tpu.memory_space<vmem>>, %arg18: memref<1x768xf32, #tpu.memory_space<vmem>>, %arg19: memref<384x1xf32, #tpu.memory_space<vmem>>, %arg20: memref<1x1xf32, #tpu.memory_space<vmem>>, %arg21: memref<8x1xf32, #tpu.memory_space<vmem>>, %arg22: memref<1x1xf32, #tpu.memory_space<vmem>>) attributes {dimension_semantics = [], scalar_prefetch = 0 : i64, scratch_operands = 0 : i64, tpu.core_type = #tpu.core_type<tc>} {
    %c0 = arith.constant 0 : index
    %c0_0 = arith.constant 0 : index
    %0 = vector.load %arg1[%c0, %c0_0] : memref<8x512xf32, #tpu.memory_space<vmem>>, vector<8x512xf32>
    %1 = arith.truncf %0 : vector<8x512xf32> to vector<8x512xbf16>
    %c0_1 = arith.constant 0 : index
    %c0_2 = arith.constant 0 : index
    %2 = vector.load %arg5[%c0_1, %c0_2] : memref<512x384xbf16, #tpu.memory_space<vmem>>, vector<512x384xbf16>
    %cst = arith.constant dense<0.000000e+00> : vector<8x384xf32>
    %3 = tpu.matmul %1, %2, %cst {dimension_numbers = #tpu.dot_dimension_numbers<[1], [0], [0], [1], [0, 0, 1, 1], [], []>} : vector<8x512xbf16>, vector<512x384xbf16>, vector<8x384xf32> -> vector<8x384xf32>
    %c0_3 = arith.constant 0 : index
    %c0_4 = arith.constant 0 : index
    %4 = vector.load %arg6[%c0_3, %c0_4] : memref<1x384xf32, #tpu.memory_space<vmem>>, vector<1x384xf32>
    %5 = vector.broadcast %4 : vector<1x384xf32> to vector<8x384xf32>
    %6 = arith.addf %3, %5 : vector<8x384xf32>
    %7 = arith.mulf %6, %6 : vector<8x384xf32>
    %cst_5 = arith.constant dense<0.000000e+00> : vector<8xf32>
    %8 = vector.multi_reduction <add>, %7, %cst_5 [1] : vector<8x384xf32> to vector<8xf32>
    %9 = vector.shape_cast %8 : vector<8xf32> to vector<8x1xf32>
    %cst_6 = arith.constant 9.99999996E-13 : f32
    %10 = vector.broadcast %cst_6 : f32 to vector<8x1xf32>
    %11 = arith.addf %9, %10 : vector<8x1xf32>
    %12 = math.rsqrt %11 : vector<8x1xf32>
    %13 = vector.broadcast %12 : vector<8x1xf32> to vector<8x384xf32>
    %14 = arith.mulf %6, %13 : vector<8x384xf32>
    %15 = arith.truncf %14 : vector<8x384xf32> to vector<8x384xbf16>
    %c0_7 = arith.constant 0 : index
    %c0_8 = arith.constant 0 : index
    %16 = vector.load %arg7[%c0_7, %c0_8] : memref<384x768xbf16, #tpu.memory_space<vmem>>, vector<384x768xbf16>
    %cst_9 = arith.constant dense<0.000000e+00> : vector<8x768xf32>
    %17 = tpu.matmul %15, %16, %cst_9 {dimension_numbers = #tpu.dot_dimension_numbers<[1], [0], [0], [1], [0, 0, 1, 1], [], []>} : vector<8x384xbf16>, vector<384x768xbf16>, vector<8x768xf32> -> vector<8x768xf32>
    %c0_10 = arith.constant 0 : index
    %c0_11 = arith.constant 0 : index
    %18 = vector.load %arg8[%c0_10, %c0_11] : memref<1x768xf32, #tpu.memory_space<vmem>>, vector<1x768xf32>
    %19 = vector.broadcast %18 : vector<1x768xf32> to vector<8x768xf32>
    %20 = arith.addf %17, %19 : vector<8x768xf32>
    %c0_12 = arith.constant 0 : index
    %c0_13 = arith.constant 0 : index
    %21 = vector.load %arg0[%c0_12, %c0_13] : memref<8x384xf32, #tpu.memory_space<vmem>>, vector<8x384xf32>
    %22 = vector.extract_strided_slice %20 {offsets = [0, 0], sizes = [8, 384], strides = [1, 1]} : vector<8x768xf32> to vector<8x384xf32>
    %23 = arith.addf %21, %22 : vector<8x384xf32>
    %c0_14 = arith.constant 0 : index
    %c0_15 = arith.constant 0 : index
    %c0_16 = arith.constant 0 : index
    %24 = vector.load %arg9[%c0_14, %c0_15, %c0_16] : memref<2x1x384xf32, #tpu.memory_space<vmem>>, vector<1x1x384xf32>
    %25 = vector.shape_cast %24 : vector<1x1x384xf32> to vector<1x384xf32>
    %c0_17 = arith.constant 0 : index
    %c0_18 = arith.constant 0 : index
    %c0_19 = arith.constant 0 : index
    %26 = vector.load %arg10[%c0_17, %c0_18, %c0_19] : memref<2x1x384xf32, #tpu.memory_space<vmem>>, vector<1x1x384xf32>
    %27 = vector.shape_cast %26 : vector<1x1x384xf32> to vector<1x384xf32>
    %cst_20 = arith.constant dense<0.000000e+00> : vector<8xf32>
    %28 = vector.multi_reduction <add>, %23, %cst_20 [1] : vector<8x384xf32> to vector<8xf32>
    %29 = vector.shape_cast %28 : vector<8xf32> to vector<8x1xf32>
    %cst_21 = arith.constant 3.840000e+02 : f32
    %30 = vector.broadcast %cst_21 : f32 to vector<8x1xf32>
    %31 = arith.divf %29, %30 : vector<8x1xf32>
    %32 = vector.broadcast %31 : vector<8x1xf32> to vector<8x384xf32>
    %33 = arith.subf %23, %32 : vector<8x384xf32>
    %34 = arith.mulf %33, %33 : vector<8x384xf32>
    %cst_22 = arith.constant dense<0.000000e+00> : vector<8xf32>
    %35 = vector.multi_reduction <add>, %34, %cst_22 [1] : vector<8x384xf32> to vector<8xf32>
    %36 = vector.shape_cast %35 : vector<8xf32> to vector<8x1xf32>
    %cst_23 = arith.constant 3.840000e+02 : f32
    %37 = vector.broadcast %cst_23 : f32 to vector<8x1xf32>
    %38 = arith.divf %36, %37 : vector<8x1xf32>
    %cst_24 = arith.constant 9.99999974E-6 : f32
    %39 = vector.broadcast %cst_24 : f32 to vector<8x1xf32>
    %40 = arith.addf %38, %39 : vector<8x1xf32>
    %41 = math.rsqrt %40 : vector<8x1xf32>
    %42 = vector.broadcast %41 : vector<8x1xf32> to vector<8x384xf32>
    %43 = arith.mulf %33, %42 : vector<8x384xf32>
    %44 = vector.broadcast %25 : vector<1x384xf32> to vector<8x384xf32>
    %45 = arith.mulf %43, %44 : vector<8x384xf32>
    %46 = vector.broadcast %27 : vector<1x384xf32> to vector<8x384xf32>
    %47 = arith.addf %45, %46 : vector<8x384xf32>
    %48 = arith.truncf %47 : vector<8x384xf32> to vector<8x384xbf16>
    %c0_25 = arith.constant 0 : index
    %c0_26 = arith.constant 0 : index
    %c0_27 = arith.constant 0 : index
    %49 = vector.load %arg11[%c0_25, %c0_26, %c0_27] : memref<2x384x384xbf16, #tpu.memory_space<vmem>>, vector<1x384x384xbf16>
    %50 = vector.shape_cast %49 : vector<1x384x384xbf16> to vector<384x384xbf16>
    %cst_28 = arith.constant dense<0.000000e+00> : vector<8x384xf32>
    %51 = tpu.matmul %48, %50, %cst_28 {dimension_numbers = #tpu.dot_dimension_numbers<[1], [0], [0], [1], [0, 0, 1, 1], [], []>} : vector<8x384xbf16>, vector<384x384xbf16>, vector<8x384xf32> -> vector<8x384xf32>
    %c0_29 = arith.constant 0 : index
    %c0_30 = arith.constant 0 : index
    %c0_31 = arith.constant 0 : index
    %52 = vector.load %arg12[%c0_29, %c0_30, %c0_31] : memref<2x1x384xf32, #tpu.memory_space<vmem>>, vector<1x1x384xf32>
    %53 = vector.shape_cast %52 : vector<1x1x384xf32> to vector<1x384xf32>
    %54 = vector.broadcast %53 : vector<1x384xf32> to vector<8x384xf32>
    %55 = arith.addf %51, %54 : vector<8x384xf32>
    %cst_32 = arith.constant 0.000000e+00 : f32
    %56 = vector.broadcast %cst_32 : f32 to vector<8x384xf32>
    %57 = arith.maximumf %55, %56 : vector<8x384xf32>
    %58 = arith.truncf %57 : vector<8x384xf32> to vector<8x384xbf16>
    %c0_33 = arith.constant 0 : index
    %c0_34 = arith.constant 0 : index
    %c0_35 = arith.constant 0 : index
    %59 = vector.load %arg13[%c0_33, %c0_34, %c0_35] : memref<2x384x384xbf16, #tpu.memory_space<vmem>>, vector<1x384x384xbf16>
    %60 = vector.shape_cast %59 : vector<1x384x384xbf16> to vector<384x384xbf16>
    %cst_36 = arith.constant dense<0.000000e+00> : vector<8x384xf32>
    %61 = tpu.matmul %58, %60, %cst_36 {dimension_numbers = #tpu.dot_dimension_numbers<[1], [0], [0], [1], [0, 0, 1, 1], [], []>} : vector<8x384xbf16>, vector<384x384xbf16>, vector<8x384xf32> -> vector<8x384xf32>
    %c0_37 = arith.constant 0 : index
    %c0_38 = arith.constant 0 : index
    %c0_39 = arith.constant 0 : index
    %62 = vector.load %arg14[%c0_37, %c0_38, %c0_39] : memref<2x1x384xf32, #tpu.memory_space<vmem>>, vector<1x1x384xf32>
    %63 = vector.shape_cast %62 : vector<1x1x384xf32> to vector<1x384xf32>
    %64 = vector.broadcast %63 : vector<1x384xf32> to vector<8x384xf32>
    %65 = arith.addf %61, %64 : vector<8x384xf32>
    %66 = arith.addf %47, %65 : vector<8x384xf32>
    %c0_40 = arith.constant 0 : index
    %c0_41 = arith.constant 0 : index
    %c0_42 = arith.constant 0 : index
    %67 = vector.load %arg15[%c0_40, %c0_41, %c0_42] : memref<2x1x384xf32, #tpu.memory_space<vmem>>, vector<1x1x384xf32>
    %68 = vector.shape_cast %67 : vector<1x1x384xf32> to vector<1x384xf32>
    %c0_43 = arith.constant 0 : index
    %c0_44 = arith.constant 0 : index
    %c0_45 = arith.constant 0 : index
    %69 = vector.load %arg16[%c0_43, %c0_44, %c0_45] : memref<2x1x384xf32, #tpu.memory_space<vmem>>, vector<1x1x384xf32>
    %70 = vector.shape_cast %69 : vector<1x1x384xf32> to vector<1x384xf32>
    %cst_46 = arith.constant dense<0.000000e+00> : vector<8xf32>
    %71 = vector.multi_reduction <add>, %66, %cst_46 [1] : vector<8x384xf32> to vector<8xf32>
    %72 = vector.shape_cast %71 : vector<8xf32> to vector<8x1xf32>
    %cst_47 = arith.constant 3.840000e+02 : f32
    %73 = vector.broadcast %cst_47 : f32 to vector<8x1xf32>
    %74 = arith.divf %72, %73 : vector<8x1xf32>
    %75 = vector.broadcast %74 : vector<8x1xf32> to vector<8x384xf32>
    %76 = arith.subf %66, %75 : vector<8x384xf32>
    %77 = arith.mulf %76, %76 : vector<8x384xf32>
    %cst_48 = arith.constant dense<0.000000e+00> : vector<8xf32>
    %78 = vector.multi_reduction <add>, %77, %cst_48 [1] : vector<8x384xf32> to vector<8xf32>
    %79 = vector.shape_cast %78 : vector<8xf32> to vector<8x1xf32>
    %cst_49 = arith.constant 3.840000e+02 : f32
    %80 = vector.broadcast %cst_49 : f32 to vector<8x1xf32>
    %81 = arith.divf %79, %80 : vector<8x1xf32>
    %cst_50 = arith.constant 9.99999974E-6 : f32
    %82 = vector.broadcast %cst_50 : f32 to vector<8x1xf32>
    %83 = arith.addf %81, %82 : vector<8x1xf32>
    %84 = math.rsqrt %83 : vector<8x1xf32>
    %85 = vector.broadcast %84 : vector<8x1xf32> to vector<8x384xf32>
    %86 = arith.mulf %76, %85 : vector<8x384xf32>
    %87 = vector.broadcast %68 : vector<1x384xf32> to vector<8x384xf32>
    %88 = arith.mulf %86, %87 : vector<8x384xf32>
    %89 = vector.broadcast %70 : vector<1x384xf32> to vector<8x384xf32>
    %90 = arith.addf %88, %89 : vector<8x384xf32>
    %91 = vector.extract_strided_slice %20 {offsets = [0, 384], sizes = [8, 384], strides = [1, 1]} : vector<8x768xf32> to vector<8x384xf32>
    %92 = arith.addf %90, %91 : vector<8x384xf32>
    %c1 = arith.constant 1 : index
    %c0_51 = arith.constant 0 : index
    %c0_52 = arith.constant 0 : index
    %93 = vector.load %arg9[%c1, %c0_51, %c0_52] : memref<2x1x384xf32, #tpu.memory_space<vmem>>, vector<1x1x384xf32>
    %94 = vector.shape_cast %93 : vector<1x1x384xf32> to vector<1x384xf32>
    %c1_53 = arith.constant 1 : index
    %c0_54 = arith.constant 0 : index
    %c0_55 = arith.constant 0 : index
    %95 = vector.load %arg10[%c1_53, %c0_54, %c0_55] : memref<2x1x384xf32, #tpu.memory_space<vmem>>, vector<1x1x384xf32>
    %96 = vector.shape_cast %95 : vector<1x1x384xf32> to vector<1x384xf32>
    %cst_56 = arith.constant dense<0.000000e+00> : vector<8xf32>
    %97 = vector.multi_reduction <add>, %92, %cst_56 [1] : vector<8x384xf32> to vector<8xf32>
    %98 = vector.shape_cast %97 : vector<8xf32> to vector<8x1xf32>
    %cst_57 = arith.constant 3.840000e+02 : f32
    %99 = vector.broadcast %cst_57 : f32 to vector<8x1xf32>
    %100 = arith.divf %98, %99 : vector<8x1xf32>
    %101 = vector.broadcast %100 : vector<8x1xf32> to vector<8x384xf32>
    %102 = arith.subf %92, %101 : vector<8x384xf32>
    %103 = arith.mulf %102, %102 : vector<8x384xf32>
    %cst_58 = arith.constant dense<0.000000e+00> : vector<8xf32>
    %104 = vector.multi_reduction <add>, %103, %cst_58 [1] : vector<8x384xf32> to vector<8xf32>
    %105 = vector.shape_cast %104 : vector<8xf32> to vector<8x1xf32>
    %cst_59 = arith.constant 3.840000e+02 : f32
    %106 = vector.broadcast %cst_59 : f32 to vector<8x1xf32>
    %107 = arith.divf %105, %106 : vector<8x1xf32>
    %cst_60 = arith.constant 9.99999974E-6 : f32
    %108 = vector.broadcast %cst_60 : f32 to vector<8x1xf32>
    %109 = arith.addf %107, %108 : vector<8x1xf32>
    %110 = math.rsqrt %109 : vector<8x1xf32>
    %111 = vector.broadcast %110 : vector<8x1xf32> to vector<8x384xf32>
    %112 = arith.mulf %102, %111 : vector<8x384xf32>
    %113 = vector.broadcast %94 : vector<1x384xf32> to vector<8x384xf32>
    %114 = arith.mulf %112, %113 : vector<8x384xf32>
    %115 = vector.broadcast %96 : vector<1x384xf32> to vector<8x384xf32>
    %116 = arith.addf %114, %115 : vector<8x384xf32>
    %117 = arith.truncf %116 : vector<8x384xf32> to vector<8x384xbf16>
    %c1_61 = arith.constant 1 : index
    %c0_62 = arith.constant 0 : index
    %c0_63 = arith.constant 0 : index
    %118 = vector.load %arg11[%c1_61, %c0_62, %c0_63] : memref<2x384x384xbf16, #tpu.memory_space<vmem>>, vector<1x384x384xbf16>
    %119 = vector.shape_cast %118 : vector<1x384x384xbf16> to vector<384x384xbf16>
    %cst_64 = arith.constant dense<0.000000e+00> : vector<8x384xf32>
    %120 = tpu.matmul %117, %119, %cst_64 {dimension_numbers = #tpu.dot_dimension_numbers<[1], [0], [0], [1], [0, 0, 1, 1], [], []>} : vector<8x384xbf16>, vector<384x384xbf16>, vector<8x384xf32> -> vector<8x384xf32>
    %c1_65 = arith.constant 1 : index
    %c0_66 = arith.constant 0 : index
    %c0_67 = arith.constant 0 : index
    %121 = vector.load %arg12[%c1_65, %c0_66, %c0_67] : memref<2x1x384xf32, #tpu.memory_space<vmem>>, vector<1x1x384xf32>
    %122 = vector.shape_cast %121 : vector<1x1x384xf32> to vector<1x384xf32>
    %123 = vector.broadcast %122 : vector<1x384xf32> to vector<8x384xf32>
    %124 = arith.addf %120, %123 : vector<8x384xf32>
    %cst_68 = arith.constant 0.000000e+00 : f32
    %125 = vector.broadcast %cst_68 : f32 to vector<8x384xf32>
    %126 = arith.maximumf %124, %125 : vector<8x384xf32>
    %127 = arith.truncf %126 : vector<8x384xf32> to vector<8x384xbf16>
    %c1_69 = arith.constant 1 : index
    %c0_70 = arith.constant 0 : index
    %c0_71 = arith.constant 0 : index
    %128 = vector.load %arg13[%c1_69, %c0_70, %c0_71] : memref<2x384x384xbf16, #tpu.memory_space<vmem>>, vector<1x384x384xbf16>
    %129 = vector.shape_cast %128 : vector<1x384x384xbf16> to vector<384x384xbf16>
    %cst_72 = arith.constant dense<0.000000e+00> : vector<8x384xf32>
    %130 = tpu.matmul %127, %129, %cst_72 {dimension_numbers = #tpu.dot_dimension_numbers<[1], [0], [0], [1], [0, 0, 1, 1], [], []>} : vector<8x384xbf16>, vector<384x384xbf16>, vector<8x384xf32> -> vector<8x384xf32>
    %c1_73 = arith.constant 1 : index
    %c0_74 = arith.constant 0 : index
    %c0_75 = arith.constant 0 : index
    %131 = vector.load %arg14[%c1_73, %c0_74, %c0_75] : memref<2x1x384xf32, #tpu.memory_space<vmem>>, vector<1x1x384xf32>
    %132 = vector.shape_cast %131 : vector<1x1x384xf32> to vector<1x384xf32>
    %133 = vector.broadcast %132 : vector<1x384xf32> to vector<8x384xf32>
    %134 = arith.addf %130, %133 : vector<8x384xf32>
    %135 = arith.addf %116, %134 : vector<8x384xf32>
    %c1_76 = arith.constant 1 : index
    %c0_77 = arith.constant 0 : index
    %c0_78 = arith.constant 0 : index
    %136 = vector.load %arg15[%c1_76, %c0_77, %c0_78] : memref<2x1x384xf32, #tpu.memory_space<vmem>>, vector<1x1x384xf32>
    %137 = vector.shape_cast %136 : vector<1x1x384xf32> to vector<1x384xf32>
    %c1_79 = arith.constant 1 : index
    %c0_80 = arith.constant 0 : index
    %c0_81 = arith.constant 0 : index
    %138 = vector.load %arg16[%c1_79, %c0_80, %c0_81] : memref<2x1x384xf32, #tpu.memory_space<vmem>>, vector<1x1x384xf32>
    %139 = vector.shape_cast %138 : vector<1x1x384xf32> to vector<1x384xf32>
    %cst_82 = arith.constant dense<0.000000e+00> : vector<8xf32>
    %140 = vector.multi_reduction <add>, %135, %cst_82 [1] : vector<8x384xf32> to vector<8xf32>
    %141 = vector.shape_cast %140 : vector<8xf32> to vector<8x1xf32>
    %cst_83 = arith.constant 3.840000e+02 : f32
    %142 = vector.broadcast %cst_83 : f32 to vector<8x1xf32>
    %143 = arith.divf %141, %142 : vector<8x1xf32>
    %144 = vector.broadcast %143 : vector<8x1xf32> to vector<8x384xf32>
    %145 = arith.subf %135, %144 : vector<8x384xf32>
    %146 = arith.mulf %145, %145 : vector<8x384xf32>
    %cst_84 = arith.constant dense<0.000000e+00> : vector<8xf32>
    %147 = vector.multi_reduction <add>, %146, %cst_84 [1] : vector<8x384xf32> to vector<8xf32>
    %148 = vector.shape_cast %147 : vector<8xf32> to vector<8x1xf32>
    %cst_85 = arith.constant 3.840000e+02 : f32
    %149 = vector.broadcast %cst_85 : f32 to vector<8x1xf32>
    %150 = arith.divf %148, %149 : vector<8x1xf32>
    %cst_86 = arith.constant 9.99999974E-6 : f32
    %151 = vector.broadcast %cst_86 : f32 to vector<8x1xf32>
    %152 = arith.addf %150, %151 : vector<8x1xf32>
    %153 = math.rsqrt %152 : vector<8x1xf32>
    %154 = vector.broadcast %153 : vector<8x1xf32> to vector<8x384xf32>
    %155 = arith.mulf %145, %154 : vector<8x384xf32>
    %156 = vector.broadcast %137 : vector<1x384xf32> to vector<8x384xf32>
    %157 = arith.mulf %155, %156 : vector<8x384xf32>
    %158 = vector.broadcast %139 : vector<1x384xf32> to vector<8x384xf32>
    %159 = arith.addf %157, %158 : vector<8x384xf32>
    %c0_87 = arith.constant 0 : index
    %c0_88 = arith.constant 0 : index
    %160 = vector.load %arg18[%c0_87, %c0_88] : memref<1x768xf32, #tpu.memory_space<vmem>>, vector<1x768xf32>
    %c0_89 = arith.constant 0 : index
    %c0_90 = arith.constant 0 : index
    %161 = vector.load %arg2[%c0_89, %c0_90] : memref<8x1xf32, #tpu.memory_space<vmem>>, vector<8x1xf32>
    %c0_91 = arith.constant 0 : index
    %c0_92 = arith.constant 0 : index
    %162 = vector.load %arg17[%c0_91, %c0_92] : memref<1x768xf32, #tpu.memory_space<vmem>>, vector<1x768xf32>
    %163 = vector.broadcast %161 : vector<8x1xf32> to vector<8x768xf32>
    %164 = vector.broadcast %162 : vector<1x768xf32> to vector<8x768xf32>
    %165 = arith.mulf %163, %164 : vector<8x768xf32>
    %166 = vector.broadcast %160 : vector<1x768xf32> to vector<8x768xf32>
    %167 = arith.addf %166, %165 : vector<8x768xf32>
    %168 = vector.extract_strided_slice %167 {offsets = [0, 0], sizes = [8, 384], strides = [1, 1]} : vector<8x768xf32> to vector<8x384xf32>
    %169 = arith.mulf %159, %168 : vector<8x384xf32>
    %170 = vector.extract_strided_slice %167 {offsets = [0, 384], sizes = [8, 384], strides = [1, 1]} : vector<8x768xf32> to vector<8x384xf32>
    %171 = arith.addf %169, %170 : vector<8x384xf32>
    %c0_93 = arith.constant 0 : index
    %c0_94 = arith.constant 0 : index
    %172 = vector.load %arg19[%c0_93, %c0_94] : memref<384x1xf32, #tpu.memory_space<vmem>>, vector<384x1xf32>
    %cst_95 = arith.constant dense<0.000000e+00> : vector<8x1xf32>
    %173 = tpu.matmul %171, %172, %cst_95 {dimension_numbers = #tpu.dot_dimension_numbers<[1], [0], [0], [1], [0, 0, 1, 1], [], []>} : vector<8x384xf32>, vector<384x1xf32>, vector<8x1xf32> -> vector<8x1xf32>
    %c0_96 = arith.constant 0 : index
    %c0_97 = arith.constant 0 : index
    %174 = vector.load %arg20[%c0_96, %c0_97] : memref<1x1xf32, #tpu.memory_space<vmem>>, vector<1x1xf32>
    %175 = vector.broadcast %174 : vector<1x1xf32> to vector<8x1xf32>
    %176 = arith.addf %173, %175 : vector<8x1xf32>
    %c0_98 = arith.constant 0 : index
    %c0_99 = arith.constant 0 : index
    %177 = vector.load %arg21[%c0_98, %c0_99] : memref<8x1xf32, #tpu.memory_space<vmem>>, vector<8x1xf32>
    tpu.vector_store %arg21[%c0_98, %c0_99], %176 {strides = array<i32>} : memref<8x1xf32, #tpu.memory_space<vmem>>, vector<8x1xf32>,
    %c0_100 = arith.constant 0 : index
    %c0_101 = arith.constant 0 : index
    %178 = vector.load %arg3[%c0_100, %c0_101] : memref<8x1xf32, #tpu.memory_space<vmem>>, vector<8x1xf32>
    %179 = arith.subf %176, %178 : vector<8x1xf32>
    %c0_102 = arith.constant 0 : index
    %c0_103 = arith.constant 0 : index
    %180 = vector.load %arg4[%c0_102, %c0_103] : memref<8x1xf32, #tpu.memory_space<vmem>>, vector<8x1xf32>
    %181 = arith.mulf %180, %179 : vector<8x1xf32>
    %182 = arith.mulf %181, %179 : vector<8x1xf32>
    %183 = vector.shape_cast %182 : vector<8x1xf32> to vector<1x8x1xf32>
    %cst_104 = arith.constant dense<0.000000e+00> : vector<1xf32>
    %184 = vector.multi_reduction <add>, %183, %cst_104 [1, 2] : vector<1x8x1xf32> to vector<1xf32>
    %185 = vector.shape_cast %184 : vector<1xf32> to vector<1x1x1xf32>
    %186 = vector.extract %185[0, 0, 0] : f32 from vector<1x1x1xf32>
    %187 = vector.broadcast %186 : f32 to vector<1x1xf32>
    %c0_105 = arith.constant 0 : index
    %c0_106 = arith.constant 0 : index
    %188 = vector.load %arg22[%c0_105, %c0_106] : memref<1x1xf32, #tpu.memory_space<vmem>>, vector<1x1xf32>
    tpu.vector_store %arg22[%c0_105, %c0_106], %187 {strides = array<i32>} : memref<1x1xf32, #tpu.memory_space<vmem>>, vector<1x1xf32>,
    return
  }
}

</mosaic_0001>

<llo_original>
// kernel: tpu_custom_call.1
$region0: #{tpu_custom_call.1}
  #allocation0 [shape = 'u32[]', space=smem, size = 0x4, offset = 0x4, fixed_abs, tag = 'smem constant byte address 0x4 - core index']
  #allocation1 [shape = 'u32[144,128]{1,0:T(1,128)}', space=vmem, size = 0x12000, scoped, tag = 'internal scratch']
  #allocation2 [shape = 'f32[1,1]{1,0:T(1,128)S(1)}', space=vmem, size = 0x200, scoped, tag = 'scoped memory for tpu_custom_call.1']
  %s0 = inlined_call_operand.vmem [shape: f32[8,384], index: 0, kind: input, shape index: {}]
  %s1 = inlined_call_operand.vmem [shape: f32[8,512], index: 1, kind: input, shape index: {}]
  %s2 = inlined_call_operand.vmem [shape: f32[8,1], index: 2, kind: input, shape index: {}]
  %s3 = inlined_call_operand.vmem [shape: f32[8,1], index: 3, kind: input, shape index: {}]
  %s4 = inlined_call_operand.vmem [shape: f32[8,1], index: 4, kind: input, shape index: {}]
  %s5 = inlined_call_operand.hbm [shape: bf16[512,384], index: 5, kind: input, shape index: {}]
  %s6 = inlined_call_operand.vmem [shape: f32[1,384], index: 6, kind: input, shape index: {}]
  %s7 = inlined_call_operand.hbm [shape: bf16[384,768], index: 7, kind: input, shape index: {}]
  %s8 = inlined_call_operand.vmem [shape: f32[1,768], index: 8, kind: input, shape index: {}]
  %s9 = inlined_call_operand.vmem [shape: f32[2,1,384], index: 9, kind: input, shape index: {}]
  %s10 = inlined_call_operand.vmem [shape: f32[2,1,384], index: 10, kind: input, shape index: {}]
  %s11 = inlined_call_operand.hbm [shape: bf16[2,384,384], index: 11, kind: input, shape index: {}]
  %s12 = inlined_call_operand.vmem [shape: f32[2,1,384], index: 12, kind: input, shape index: {}]
  %s13 = inlined_call_operand.hbm [shape: bf16[2,384,384], index: 13, kind: input, shape index: {}]
  %s14 = inlined_call_operand.vmem [shape: f32[2,1,384], index: 14, kind: input, shape index: {}]
  %s15 = inlined_call_operand.vmem [shape: f32[2,1,384], index: 15, kind: input, shape index: {}]
  %s16 = inlined_call_operand.vmem [shape: f32[2,1,384], index: 16, kind: input, shape index: {}]
  %s17 = inlined_call_operand.vmem [shape: f32[1,768], index: 17, kind: input, shape index: {}]
  %s18 = inlined_call_operand.vmem [shape: f32[1,768], index: 18, kind: input, shape index: {}]
  %s19 = inlined_call_operand.vmem [shape: f32[384,1], index: 19, kind: input, shape index: {}]
  %s20 = inlined_call_operand.<no memory space> [shape: f32[1,1], index: 20, kind: input, shape index: {}]
  %s21 = inlined_call_operand.vmem [shape: f32[8,1], index: 21, kind: output, shape index: {0}]
  %s22 = inlined_call_operand.hbm [shape: f32[1,1], index: 22, kind: output, shape index: {1}]
  %23 = xla_tuple %s21, %s22
  %s24 = sld [smem:[#allocation0]]
  $region118: #{tpu_custom_call.1} parent=0
    _
  %s26 = ssub.s32 1, %s24
  %s27 = scalar_select 0, %s26, %s24
  %v28 = vstv %s20
  %29 = vst [vmem:[#allocation2] sm:$0x1] %v28
  $region1: #{tpu_custom_call.1} parent=0
    #allocation3 [shape = 'u8[393216]{0}', space=vmem, size = 0x60000, scoped, tag = 'input window, operand 5, single buffered']
    #allocation4 [shape = 's32[1]{0}', space=sflag, size = 0x4, scoped, tag = 'scoped memory for tpu_custom_call.1']
    #allocation5 [shape = 's32[1]{0}', space=sflag, size = 0x4, scoped, tag = 'scoped memory for tpu_custom_call.1']
    #allocation6 [shape = 'u8[589824]{0}', space=vmem, size = 0x90000, scoped, tag = 'input window, operand 7, single buffered']
    #allocation7 [shape = 's32[1]{0}', space=sflag, size = 0x4, scoped, tag = 'scoped memory for tpu_custom_call.1']
    #allocation8 [shape = 'u8[589824]{0}', space=vmem, size = 0x90000, scoped, tag = 'input window, operand 11, single buffered']
    #allocation9 [shape = 'u8[589824]{0}', space=vmem, size = 0x90000, scoped, tag = 'input window, operand 13, single buffered']
    #allocation10 [shape = 's32[1]{0}', space=sflag, size = 0x4, scoped, tag = 'scoped memory for tpu_custom_call.1']
    #allocation11 [shape = 'u8[512]{0}', space=vmem, size = 0x400, scoped, tag = 'output window, operand 1, single buffered']
    %30 = vsyncpa [#allocation4], 0
    %31 = vsyncpa [#allocation7], 0
    %32 = vsyncpa [#allocation10], 0
    %33 = vsyncpa [#allocation5], 0
    // Predicated region
    $region2: #{tpu_custom_call.1} parent=1 // pred_check
      _
    $region3: #{tpu_custom_call.1} parent=1 // pred_check_branch
      %35 = sbr.rel (0) target = $region5
    $region4: #{tpu_custom_call.1} parent=1 // pred_region
      _
    $region5: #{tpu_custom_call.1} parent=1 // pred_fallthru
      _
    // Predicated region
    $region6: #{tpu_custom_call.1} parent=1 // pred_check
      _
    $region7: #{tpu_custom_call.1} parent=1 // pred_check_branch
      %37 = sbr.rel (0) target = $region9
    $region8: #{tpu_custom_call.1} parent=1 // pred_region
      _
    $region9: #{tpu_custom_call.1} parent=1 // pred_fallthru
      _
    // Predicated region
    $region10: #{tpu_custom_call.1} parent=1 // pred_check
      _
    $region11: #{tpu_custom_call.1} parent=1 // pred_check_branch
      %39 = sbr.rel (0) target = $region13
    $region12: #{tpu_custom_call.1} parent=1 // pred_region
      _
    $region13: #{tpu_custom_call.1} parent=1 // pred_fallthru
      _
    // Predicated region
    $region14: #{tpu_custom_call.1} parent=1 // pred_check
      _
    $region15: #{tpu_custom_call.1} parent=1 // pred_check_branch
      %41 = sbr.rel (0) target = $region17
    $region16: #{tpu_custom_call.1} parent=1 // pred_region
      _
    $region17: #{tpu_custom_call.1} parent=1 // pred_fallthru
      _
    // Predicated region
    $region18: #{tpu_custom_call.1} parent=1 // pred_check
      _
    $region19: #{tpu_custom_call.1} parent=1 // pred_check_branch
      %43 = sbr.rel (0) target = $region21
    $region20: #{tpu_custom_call.1} parent=1 // pred_region
      _
    $region21: #{tpu_custom_call.1} parent=1 // pred_fallthru
      _
    // Predicated region
    $region22: #{tpu_custom_call.1} parent=1 // pred_check
      _
    $region23: #{tpu_custom_call.1} parent=1 // pred_check_branch
      %45 = sbr.rel (0) target = $region25
    $region24: #{tpu_custom_call.1} parent=1 // pred_region
      %s47 = ssub.s32 12288, 12288
      %48 = vsyncadd [#allocation4], %s47
      %s49 = sshll.u32 [#allocation3], 4
      %s50 = int_to_ptr.vmem [resolvable:$true] %s49
      %55 = dma.hbm_to_vmem [thread:$0]  %s5, 12288, %s50, [#allocation4], 192, 192, 12
    $region25: #{tpu_custom_call.1} parent=1 // pred_fallthru
      _
    // Predicated region
    $region26: #{tpu_custom_call.1} parent=1 // pred_check
      _
    $region27: #{tpu_custom_call.1} parent=1 // pred_check_branch
      %57 = sbr.rel (0) target = $region29
    $region28: #{tpu_custom_call.1} parent=1 // pred_region
      _
    $region29: #{tpu_custom_call.1} parent=1 // pred_fallthru
      _
    // Predicated region
    $region30: #{tpu_custom_call.1} parent=1 // pred_check
      _
    $region31: #{tpu_custom_call.1} parent=1 // pred_check_branch
      %59 = sbr.rel (0) target = $region33
    $region32: #{tpu_custom_call.1} parent=1 // pred_region
      %s61 = ssub.s32 18432, 18432
      %62 = vsyncadd [#allocation7], %s61
      %s63 = sshll.u32 [#allocation6], 4
      %s64 = int_to_ptr.vmem [resolvable:$true] %s63
      %69 = dma.hbm_to_vmem [thread:$0]  %s7, 18432, %s64, [#allocation7], 384, 384, 24
    $region33: #{tpu_custom_call.1} parent=1 // pred_fallthru
      _
    // Predicated region
    $region34: #{tpu_custom_call.1} parent=1 // pred_check
      _
    $region35: #{tpu_custom_call.1} parent=1 // pred_check_branch
      %71 = sbr.rel (0) target = $region37
    $region36: #{tpu_custom_call.1} parent=1 // pred_region
      _
    $region37: #{tpu_custom_call.1} parent=1 // pred_fallthru
      _
    // Predicated region
    $region38: #{tpu_custom_call.1} parent=1 // pred_check
      _
    $region39: #{tpu_custom_call.1} parent=1 // pred_check_branch
      %73 = sbr.rel (0) target = $region41
    $region40: #{tpu_custom_call.1} parent=1 // pred_region
      _
    $region41: #{tpu_custom_call.1} parent=1 // pred_fallthru
      _
    // Predicated region
    $region42: #{tpu_custom_call.1} parent=1 // pred_check
      _
    $region43: #{tpu_custom_call.1} parent=1 // pred_check_branch
      %75 = sbr.rel (0) target = $region45
    $region44: #{tpu_custom_call.1} parent=1 // pred_region
      _
    $region45: #{tpu_custom_call.1} parent=1 // pred_fallthru
      _
    // Predicated region
    $region46: #{tpu_custom_call.1} parent=1 // pred_check
      _
    $region47: #{tpu_custom_call.1} parent=1 // pred_check_branch
      %77 = sbr.rel (0) target = $region49
    $region48: #{tpu_custom_call.1} parent=1 // pred_region
      %s79 = ssub.s32 18432, 18432
      %80 = vsyncadd [#allocation7], %s79
      %s81 = sshll.u32 [#allocation8], 4
      %s82 = int_to_ptr.vmem [resolvable:$true] %s81
      %87 = dma.hbm_to_vmem [thread:$0]  %s11, 18432, %s82, [#allocation7], 192, 192, 12
    $region49: #{tpu_custom_call.1} parent=1 // pred_fallthru
      _
    // Predicated region
    $region50: #{tpu_custom_call.1} parent=1 // pred_check
      _
    $region51: #{tpu_custom_call.1} parent=1 // pred_check_branch
      %89 = sbr.rel (0) target = $region53
    $region52: #{tpu_custom_call.1} parent=1 // pred_region
      _
    $region53: #{tpu_custom_call.1} parent=1 // pred_fallthru
      _
    // Predicated region
    $region54: #{tpu_custom_call.1} parent=1 // pred_check
      _
    $region55: #{tpu_custom_call.1} parent=1 // pred_check_branch
      %91 = sbr.rel (0) target = $region57
    $region56: #{tpu_custom_call.1} parent=1 // pred_region
      %s93 = ssub.s32 18432, 18432
      %94 = vsyncadd [#allocation10], %s93
      %s95 = sshll.u32 [#allocation9], 4
      %s96 = int_to_ptr.vmem [resolvable:$true] %s95
      %101 = dma.hbm_to_vmem [thread:$0]  %s13, 18432, %s96, [#allocation10], 192, 192, 12
    $region57: #{tpu_custom_call.1} parent=1 // pred_fallthru
      _
    // Predicated region
    $region58: #{tpu_custom_call.1} parent=1 // pred_check
      _
    $region59: #{tpu_custom_call.1} parent=1 // pred_check_branch
      %103 = sbr.rel (0) target = $region61
    $region60: #{tpu_custom_call.1} parent=1 // pred_region
      _
    $region61: #{tpu_custom_call.1} parent=1 // pred_fallthru
      _
    // Predicated region
    $region62: #{tpu_custom_call.1} parent=1 // pred_check
      _
    $region63: #{tpu_custom_call.1} parent=1 // pred_check_branch
      %105 = sbr.rel (0) target = $region65
    $region64: #{tpu_custom_call.1} parent=1 // pred_region
      _
    $region65: #{tpu_custom_call.1} parent=1 // pred_fallthru
      _
    // Predicated region
    $region66: #{tpu_custom_call.1} parent=1 // pred_check
      _
    $region67: #{tpu_custom_call.1} parent=1 // pred_check_branch
      %107 = sbr.rel (0) target = $region69
    $region68: #{tpu_custom_call.1} parent=1 // pred_region
      _
    $region69: #{tpu_custom_call.1} parent=1 // pred_fallthru
      _
    // Predicated region
    $region70: #{tpu_custom_call.1} parent=1 // pred_check
      _
    $region71: #{tpu_custom_call.1} parent=1 // pred_check_branch
      %109 = sbr.rel (0) target = $region73
    $region72: #{tpu_custom_call.1} parent=1 // pred_region
      _
    $region73: #{tpu_custom_call.1} parent=1 // pred_fallthru
      _
    // Predicated region
    $region74: #{tpu_custom_call.1} parent=1 // pred_check
      _
    $region75: #{tpu_custom_call.1} parent=1 // pred_check_branch
      %111 = sbr.rel (0) target = $region77
    $region76: #{tpu_custom_call.1} parent=1 // pred_region
      _
    $region77: #{tpu_custom_call.1} parent=1 // pred_fallthru
      _
    // Predicated region
    $region78: #{tpu_custom_call.1} parent=1 // pred_check
      _
    $region79: #{tpu_custom_call.1} parent=1 // pred_check_branch
      %113 = sbr.rel (0) target = $region81
    $region80: #{tpu_custom_call.1} parent=1 // pred_region
      _
    $region81: #{tpu_custom_call.1} parent=1 // pred_fallthru
      _
    // Predicated region
    $region82: #{tpu_custom_call.1} parent=1 // pred_check
      _
    $region83: #{tpu_custom_call.1} parent=1 // pred_check_branch
      %115 = sbr.rel (0) target = $region85
    $region84: #{tpu_custom_call.1} parent=1 // pred_region
      _
    $region85: #{tpu_custom_call.1} parent=1 // pred_fallthru
      _
    // Predicated region
    $region86: #{tpu_custom_call.1} parent=1 // pred_check
      _
    $region87: #{tpu_custom_call.1} parent=1 // pred_check_branch
      %117 = sbr.rel (0) target = $region89
    $region88: #{tpu_custom_call.1} parent=1 // pred_region
      %118 = dma.done [#allocation4], 12288
    $region89: #{tpu_custom_call.1} parent=1 // pred_fallthru
      _
    // Predicated region
    $region90: #{tpu_custom_call.1} parent=1 // pred_check
      _
    $region91: #{tpu_custom_call.1} parent=1 // pred_check_branch
      %120 = sbr.rel (0) target = $region93
    $region92: #{tpu_custom_call.1} parent=1 // pred_region
      %121 = dma.done [#allocation7], 18432
    $region93: #{tpu_custom_call.1} parent=1 // pred_fallthru
      _
    // Predicated region
    $region94: #{tpu_custom_call.1} parent=1 // pred_check
      _
    $region95: #{tpu_custom_call.1} parent=1 // pred_check_branch
      %123 = sbr.rel (0) target = $region97
    $region96: #{tpu_custom_call.1} parent=1 // pred_region
      %124 = dma.done [#allocation7], 18432
    $region97: #{tpu_custom_call.1} parent=1 // pred_fallthru
      _
    // Predicated region
    $region98: #{tpu_custom_call.1} parent=1 // pred_check
      _
    $region99: #{tpu_custom_call.1} parent=1 // pred_check_branch
      %126 = sbr.rel (0) target = $region101
    $region100: #{tpu_custom_call.1} parent=1 // pred_region
      %127 = dma.done [#allocation10], 18432
    $region101: #{tpu_custom_call.1} parent=1 // pred_fallthru
      _
    %v129 = vld [vmem:[%s1] sm:$0xff]
    %v130 = vld [vmem:[%s1 + $0x8] sm:$0xff]
    %v131 = vld [vmem:[%s1 + $0x10] sm:$0xff]
    %v132 = vld [vmem:[%s1 + $0x18] sm:$0xff]
    %v133 = vpack.c.bf16 %v129, %v129
    %v134 = vpack.c.bf16 %v130, %v130
    %v135 = vpack.c.bf16 %v131, %v131
    %v136 = vpack.c.bf16 %v132, %v132
    %v137 = vld [vmem:[#allocation3] sm:$0xff]
    %v138 = vld [vmem:[#allocation3 + $0x8] sm:$0xf]
    %v139 = vld [vmem:[#allocation3 + $0xc] sm:$0xff]
    %v140 = vld [vmem:[#allocation3 + $0x14] sm:$0xf]
    %v141 = vld [vmem:[#allocation3 + $0x18] sm:$0xff]
    %v142 = vld [vmem:[#allocation3 + $0x20] sm:$0xf]
    %v143 = vld [vmem:[#allocation3 + $0x24] sm:$0xff]
    %v144 = vld [vmem:[#allocation3 + $0x2c] sm:$0xf]
    %v145 = vld [vmem:[#allocation3 + $0x30] sm:$0xff]
    %v146 = vld [vmem:[#allocation3 + $0x38] sm:$0xf]
    %v147 = vld [vmem:[#allocation3 + $0x3c] sm:$0xff]
    %v148 = vld [vmem:[#allocation3 + $0x44] sm:$0xf]
    %v149 = vld [vmem:[#allocation3 + $0x48] sm:$0xff]
    %v150 = vld [vmem:[#allocation3 + $0x50] sm:$0xf]
    %v151 = vld [vmem:[#allocation3 + $0x54] sm:$0xff]
    %v152 = vld [vmem:[#allocation3 + $0x5c] sm:$0xf]
    %v153 = vld [vmem:[#allocation3 + $0x60] sm:$0xff]
    %v154 = vld [vmem:[#allocation3 + $0x68] sm:$0xf]
    %v155 = vld [vmem:[#allocation3 + $0x6c] sm:$0xff]
    %v156 = vld [vmem:[#allocation3 + $0x74] sm:$0xf]
    %v157 = vld [vmem:[#allocation3 + $0x78] sm:$0xff]
    %v158 = vld [vmem:[#allocation3 + $0x80] sm:$0xf]
    %v159 = vld [vmem:[#allocation3 + $0x84] sm:$0xff]
    %v160 = vld [vmem:[#allocation3 + $0x8c] sm:$0xf]
    %v161 = vld [vmem:[#allocation3 + $0x90] sm:$0xff]
    %v162 = vld [vmem:[#allocation3 + $0x98] sm:$0xf]
    %v163 = vld [vmem:[#allocation3 + $0x9c] sm:$0xff]
    %v164 = vld [vmem:[#allocation3 + $0xa4] sm:$0xf]
    %v165 = vld [vmem:[#allocation3 + $0xa8] sm:$0xff]
    %v166 = vld [vmem:[#allocation3 + $0xb0] sm:$0xf]
    %v167 = vld [vmem:[#allocation3 + $0xb4] sm:$0xff]
    %v168 = vld [vmem:[#allocation3 + $0xbc] sm:$0xf]
    %v169 = vld [vmem:[#allocation3 + $0xc0] sm:$0xff]
    %v170 = vld [vmem:[#allocation3 + $0xc8] sm:$0xf]
    %v171 = vld [vmem:[#allocation3 + $0xcc] sm:$0xff]
    %v172 = vld [vmem:[#allocation3 + $0xd4] sm:$0xf]
    %v173 = vld [vmem:[#allocation3 + $0xd8] sm:$0xff]
    %v174 = vld [vmem:[#allocation3 + $0xe0] sm:$0xf]
    %v175 = vld [vmem:[#allocation3 + $0xe4] sm:$0xff]
    %v176 = vld [vmem:[#allocation3 + $0xec] sm:$0xf]
    %v177 = vld [vmem:[#allocation3 + $0xf0] sm:$0xff]
    %v178 = vld [vmem:[#allocation3 + $0xf8] sm:$0xf]
    %v179 = vld [vmem:[#allocation3 + $0xfc] sm:$0xff]
    %v180 = vld [vmem:[#allocation3 + $0x104] sm:$0xf]
    %v181 = vld [vmem:[#allocation3 + $0x108] sm:$0xff]
    %v182 = vld [vmem:[#allocation3 + $0x110] sm:$0xf]
    %v183 = vld [vmem:[#allocation3 + $0x114] sm:$0xff]
    %v184 = vld [vmem:[#allocation3 + $0x11c] sm:$0xf]
    %v185 = vld [vmem:[#allocation3 + $0x120] sm:$0xff]
    %v186 = vld [vmem:[#allocation3 + $0x128] sm:$0xf]
    %v187 = vld [vmem:[#allocation3 + $0x12c] sm:$0xff]
    %v188 = vld [vmem:[#allocation3 + $0x134] sm:$0xf]
    %v189 = vld [vmem:[#allocation3 + $0x138] sm:$0xff]
    %v190 = vld [vmem:[#allocation3 + $0x140] sm:$0xf]
    %v191 = vld [vmem:[#allocation3 + $0x144] sm:$0xff]
    %v192 = vld [vmem:[#allocation3 + $0x14c] sm:$0xf]
    %v193 = vld [vmem:[#allocation3 + $0x150] sm:$0xff]
    %v194 = vld [vmem:[#allocation3 + $0x158] sm:$0xf]
    %v195 = vld [vmem:[#allocation3 + $0x15c] sm:$0xff]
    %v196 = vld [vmem:[#allocation3 + $0x164] sm:$0xf]
    %v197 = vld [vmem:[#allocation3 + $0x168] sm:$0xff]
    %v198 = vld [vmem:[#allocation3 + $0x170] sm:$0xf]
    %v199 = vld [vmem:[#allocation3 + $0x174] sm:$0xff]
    %v200 = vld [vmem:[#allocation3 + $0x17c] sm:$0xf]
    %v201 = vld [vmem:[#allocation3 + $0x180] sm:$0xff]
    %v202 = vld [vmem:[#allocation3 + $0x188] sm:$0xf]
    %v203 = vld [vmem:[#allocation3 + $0x18c] sm:$0xff]
    %v204 = vld [vmem:[#allocation3 + $0x194] sm:$0xf]
    %v205 = vld [vmem:[#allocation3 + $0x198] sm:$0xff]
    %v206 = vld [vmem:[#allocation3 + $0x1a0] sm:$0xf]
    %v207 = vld [vmem:[#allocation3 + $0x1a4] sm:$0xff]
    %v208 = vld [vmem:[#allocation3 + $0x1ac] sm:$0xf]
    %v209 = vld [vmem:[#allocation3 + $0x1b0] sm:$0xff]
    %v210 = vld [vmem:[#allocation3 + $0x1b8] sm:$0xf]
    %v211 = vld [vmem:[#allocation3 + $0x1bc] sm:$0xff]
    %v212 = vld [vmem:[#allocation3 + $0x1c4] sm:$0xf]
    %v213 = vld [vmem:[#allocation3 + $0x1c8] sm:$0xff]
    %v214 = vld [vmem:[#allocation3 + $0x1d0] sm:$0xf]
    %v215 = vld [vmem:[#allocation3 + $0x1d4] sm:$0xff]
    %v216 = vld [vmem:[#allocation3 + $0x1dc] sm:$0xf]
    %v217 = vld [vmem:[#allocation3 + $0x1e0] sm:$0xff]
    %v218 = vld [vmem:[#allocation3 + $0x1e8] sm:$0xf]
    %v219 = vld [vmem:[#allocation3 + $0x1ec] sm:$0xff]
    %v220 = vld [vmem:[#allocation3 + $0x1f4] sm:$0xf]
    %v221 = vld [vmem:[#allocation3 + $0x1f8] sm:$0xff]
    %v222 = vld [vmem:[#allocation3 + $0x200] sm:$0xf]
    %v223 = vld [vmem:[#allocation3 + $0x204] sm:$0xff]
    %v224 = vld [vmem:[#allocation3 + $0x20c] sm:$0xf]
    %v225 = vld [vmem:[#allocation3 + $0x210] sm:$0xff]
    %v226 = vld [vmem:[#allocation3 + $0x218] sm:$0xf]
    %v227 = vld [vmem:[#allocation3 + $0x21c] sm:$0xff]
    %v228 = vld [vmem:[#allocation3 + $0x224] sm:$0xf]
    %v229 = vld [vmem:[#allocation3 + $0x228] sm:$0xff]
    %v230 = vld [vmem:[#allocation3 + $0x230] sm:$0xf]
    %v231 = vld [vmem:[#allocation3 + $0x234] sm:$0xff]
    %v232 = vld [vmem:[#allocation3 + $0x23c] sm:$0xf]
    %v233 = vld [vmem:[#allocation3 + $0x240] sm:$0xff]
    %v234 = vld [vmem:[#allocation3 + $0x248] sm:$0xf]
    %v235 = vld [vmem:[#allocation3 + $0x24c] sm:$0xff]
    %v236 = vld [vmem:[#allocation3 + $0x254] sm:$0xf]
    %v237 = vld [vmem:[#allocation3 + $0x258] sm:$0xff]
    %v238 = vld [vmem:[#allocation3 + $0x260] sm:$0xf]
    %v239 = vld [vmem:[#allocation3 + $0x264] sm:$0xff]
    %v240 = vld [vmem:[#allocation3 + $0x26c] sm:$0xf]
    %v241 = vld [vmem:[#allocation3 + $0x270] sm:$0xff]
    %v242 = vld [vmem:[#allocation3 + $0x278] sm:$0xf]
    %v243 = vld [vmem:[#allocation3 + $0x27c] sm:$0xff]
    %v244 = vld [vmem:[#allocation3 + $0x284] sm:$0xf]
    %v245 = vld [vmem:[#allocation3 + $0x288] sm:$0xff]
    %v246 = vld [vmem:[#allocation3 + $0x290] sm:$0xf]
    %v247 = vld [vmem:[#allocation3 + $0x294] sm:$0xff]
    %v248 = vld [vmem:[#allocation3 + $0x29c] sm:$0xf]
    %v249 = vld [vmem:[#allocation3 + $0x2a0] sm:$0xff]
    %v250 = vld [vmem:[#allocation3 + $0x2a8] sm:$0xf]
    %v251 = vld [vmem:[#allocation3 + $0x2ac] sm:$0xff]
    %v252 = vld [vmem:[#allocation3 + $0x2b4] sm:$0xf]
    %v253 = vld [vmem:[#allocation3 + $0x2b8] sm:$0xff]
    %v254 = vld [vmem:[#allocation3 + $0x2c0] sm:$0xf]
    %v255 = vld [vmem:[#allocation3 + $0x2c4] sm:$0xff]
    %v256 = vld [vmem:[#allocation3 + $0x2cc] sm:$0xf]
    %v257 = vld [vmem:[#allocation3 + $0x2d0] sm:$0xff]
    %v258 = vld [vmem:[#allocation3 + $0x2d8] sm:$0xf]
    %v259 = vld [vmem:[#allocation3 + $0x2dc] sm:$0xff]
    %v260 = vld [vmem:[#allocation3 + $0x2e4] sm:$0xf]
    %v261 = vld [vmem:[#allocation3 + $0x2e8] sm:$0xff]
    %v262 = vld [vmem:[#allocation3 + $0x2f0] sm:$0xf]
    %v263 = vld [vmem:[#allocation3 + $0x2f4] sm:$0xff]
    %v264 = vld [vmem:[#allocation3 + $0x2fc] sm:$0xf]
    %v265 = vld [vmem:[%s6] sm:$0x7]
    %v267 = vlaneseq
    %v268 = vshrl.u32 %v267, 7
    %v269 = vsub.s32 0, %v268
    %v270 = vrot.slane %v265, %v269
    %v271 = vlaneseq
    %v272 = vshrl.u32 %v271, 7
    %v273 = vsub.s32 1, %v272
    %v274 = vrot.slane %v265, %v273
    %v275 = vlaneseq
    %v276 = vshrl.u32 %v275, 7
    %v277 = vsub.s32 2, %v276
    %v278 = vrot.slane %v265, %v277
    %v410 = vunpack.c.l.b16 %v137
    %v411 = vunpack.c.h.b16 %v137
    %v412 = vunpack.c.l.b16 %v138
    %v413 = vunpack.c.l.b16 %v139
    %v414 = vunpack.c.h.b16 %v139
    %v415 = vunpack.c.l.b16 %v140
    %v416 = vunpack.c.l.b16 %v141
    %v417 = vunpack.c.h.b16 %v141
    %v418 = vunpack.c.l.b16 %v142
    %v419 = vunpack.c.l.b16 %v143
    %v420 = vunpack.c.h.b16 %v143
    %v421 = vunpack.c.l.b16 %v144
    %v422 = vunpack.c.l.b16 %v145
    %v423 = vunpack.c.h.b16 %v145
    %v424 = vunpack.c.l.b16 %v146
    %v425 = vunpack.c.l.b16 %v147
    %v426 = vunpack.c.h.b16 %v147
    %v427 = vunpack.c.l.b16 %v148
    %v428 = vunpack.c.l.b16 %v149
    %v429 = vunpack.c.h.b16 %v149
    %v430 = vunpack.c.l.b16 %v150
    %v431 = vunpack.c.l.b16 %v151
    %v432 = vunpack.c.h.b16 %v151
    %v433 = vunpack.c.l.b16 %v152
    %v434 = vunpack.c.l.b16 %v153
    %v435 = vunpack.c.h.b16 %v153
    %v436 = vunpack.c.l.b16 %v154
    %v437 = vunpack.c.l.b16 %v155
    %v438 = vunpack.c.h.b16 %v155
    %v439 = vunpack.c.l.b16 %v156
    %v440 = vunpack.c.l.b16 %v157
    %v441 = vunpack.c.h.b16 %v157
    %v442 = vunpack.c.l.b16 %v158
    %v443 = vunpack.c.l.b16 %v159
    %v444 = vunpack.c.h.b16 %v159
    %v445 = vunpack.c.l.b16 %v160
    %v446 = vunpack.c.l.b16 %v161
    %v447 = vunpack.c.h.b16 %v161
    %v448 = vunpack.c.l.b16 %v162
    %v449 = vunpack.c.l.b16 %v163
    %v450 = vunpack.c.h.b16 %v163
    %v451 = vunpack.c.l.b16 %v164
    %v452 = vunpack.c.l.b16 %v165
    %v453 = vunpack.c.h.b16 %v165
    %v454 = vunpack.c.l.b16 %v166
    %v455 = vunpack.c.l.b16 %v167
    %v456 = vunpack.c.h.b16 %v167
    %v457 = vunpack.c.l.b16 %v168
    %v458 = vunpack.c.l.b16 %v169
    %v459 = vunpack.c.h.b16 %v169
    %v460 = vunpack.c.l.b16 %v170
    %v461 = vunpack.c.l.b16 %v171
    %v462 = vunpack.c.h.b16 %v171
    %v463 = vunpack.c.l.b16 %v172
    %v464 = vunpack.c.l.b16 %v173
    %v465 = vunpack.c.h.b16 %v173
    %v466 = vunpack.c.l.b16 %v174
    %v467 = vunpack.c.l.b16 %v175
    %v468 = vunpack.c.h.b16 %v175
    %v469 = vunpack.c.l.b16 %v176
    %v470 = vunpack.c.l.b16 %v177
    %v471 = vunpack.c.h.b16 %v177
    %v472 = vunpack.c.l.b16 %v178
    %v473 = vunpack.c.l.b16 %v179
    %v474 = vunpack.c.h.b16 %v179
    %v475 = vunpack.c.l.b16 %v180
    %v476 = vunpack.c.l.b16 %v181
    %v477 = vunpack.c.h.b16 %v181
    %v478 = vunpack.c.l.b16 %v182
    %v479 = vunpack.c.l.b16 %v183
    %v480 = vunpack.c.h.b16 %v183
    %v481 = vunpack.c.l.b16 %v184
    %v482 = vunpack.c.l.b16 %v185
    %v483 = vunpack.c.h.b16 %v185
    %v484 = vunpack.c.l.b16 %v186
    %v485 = vunpack.c.l.b16 %v187
    %v486 = vunpack.c.h.b16 %v187
    %v487 = vunpack.c.l.b16 %v188
    %v488 = vunpack.c.l.b16 %v189
    %v489 = vunpack.c.h.b16 %v189
    %v490 = vunpack.c.l.b16 %v190
    %v491 = vunpack.c.l.b16 %v191
    %v492 = vunpack.c.h.b16 %v191
    %v493 = vunpack.c.l.b16 %v192
    %v494 = vunpack.c.l.b16 %v193
    %v495 = vunpack.c.h.b16 %v193
    %v496 = vunpack.c.l.b16 %v194
    %v497 = vunpack.c.l.b16 %v195
    %v498 = vunpack.c.h.b16 %v195
    %v499 = vunpack.c.l.b16 %v196
    %v500 = vunpack.c.l.b16 %v197
    %v501 = vunpack.c.h.b16 %v197
    %v502 = vunpack.c.l.b16 %v198
    %v503 = vunpack.c.l.b16 %v199
    %v504 = vunpack.c.h.b16 %v199
    %v505 = vunpack.c.l.b16 %v200
    %v506 = vunpack.c.l.b16 %v201
    %v507 = vunpack.c.h.b16 %v201
    %v508 = vunpack.c.l.b16 %v202
    %v509 = vunpack.c.l.b16 %v203
    %v510 = vunpack.c.h.b16 %v203
    %v511 = vunpack.c.l.b16 %v204
    %v512 = vunpack.c.l.b16 %v205
    %v513 = vunpack.c.h.b16 %v205
    %v514 = vunpack.c.l.b16 %v206
    %v515 = vunpack.c.l.b16 %v207
    %v516 = vunpack.c.h.b16 %v207
    %v517 = vunpack.c.l.b16 %v208
    %v518 = vunpack.c.l.b16 %v209
    %v519 = vunpack.c.h.b16 %v209
    %v520 = vunpack.c.l.b16 %v210
    %v521 = vunpack.c.l.b16 %v211
    %v522 = vunpack.c.h.b16 %v211
    %v523 = vunpack.c.l.b16 %v212
    %v524 = vunpack.c.l.b16 %v213
    %v525 = vunpack.c.h.b16 %v213
    %v526 = vunpack.c.l.b16 %v214
    %v527 = vunpack.c.l.b16 %v215
    %v528 = vunpack.c.h.b16 %v215
    %v529 = vunpack.c.l.b16 %v216
    %v530 = vunpack.c.l.b16 %v217
    %v531 = vunpack.c.h.b16 %v217
    %v532 = vunpack.c.l.b16 %v218
    %v533 = vunpack.c.l.b16 %v219
    %v534 = vunpack.c.h.b16 %v219
    %v535 = vunpack.c.l.b16 %v220
    %v536 = vunpack.c.l.b16 %v221
    %v537 = vunpack.c.h.b16 %v221
    %v538 = vunpack.c.l.b16 %v222
    %v539 = vunpack.c.l.b16 %v223
    %v540 = vunpack.c.h.b16 %v223
    %v541 = vunpack.c.l.b16 %v224
    %v542 = vunpack.c.l.b16 %v225
    %v543 = vunpack.c.h.b16 %v225
    %v544 = vunpack.c.l.b16 %v226
    %v545 = vunpack.c.l.b16 %v227
    %v546 = vunpack.c.h.b16 %v227
    %v547 = vunpack.c.l.b16 %v228
    %v548 = vunpack.c.l.b16 %v229
    %v549 = vunpack.c.h.b16 %v229
    %v550 = vunpack.c.l.b16 %v230
    %v551 = vunpack.c.l.b16 %v231
    %v552 = vunpack.c.h.b16 %v231
    %v553 = vunpack.c.l.b16 %v232
    %v554 = vunpack.c.l.b16 %v233
    %v555 = vunpack.c.h.b16 %v233
    %v556 = vunpack.c.l.b16 %v234
    %v557 = vunpack.c.l.b16 %v235
    %v558 = vunpack.c.h.b16 %v235
    %v559 = vunpack.c.l.b16 %v236
    %v560 = vunpack.c.l.b16 %v237
    %v561 = vunpack.c.h.b16 %v237
    %v562 = vunpack.c.l.b16 %v238
    %v563 = vunpack.c.l.b16 %v239
    %v564 = vunpack.c.h.b16 %v239
    %v565 = vunpack.c.l.b16 %v240
    %v566 = vunpack.c.l.b16 %v241
    %v567 = vunpack.c.h.b16 %v241
    %v568 = vunpack.c.l.b16 %v242
    %v569 = vunpack.c.l.b16 %v243
    %v570 = vunpack.c.h.b16 %v243
    %v571 = vunpack.c.l.b16 %v244
    %v572 = vunpack.c.l.b16 %v245
    %v573 = vunpack.c.h.b16 %v245
    %v574 = vunpack.c.l.b16 %v246
    %v575 = vunpack.c.l.b16 %v247
    %v576 = vunpack.c.h.b16 %v247
    %v577 = vunpack.c.l.b16 %v248
    %v578 = vunpack.c.l.b16 %v249
    %v579 = vunpack.c.h.b16 %v249
    %v580 = vunpack.c.l.b16 %v250
    %v581 = vunpack.c.l.b16 %v251
    %v582 = vunpack.c.h.b16 %v251
    %v583 = vunpack.c.l.b16 %v252
    %v584 = vunpack.c.l.b16 %v253
    %v585 = vunpack.c.h.b16 %v253
    %v586 = vunpack.c.l.b16 %v254
    %v587 = vunpack.c.l.b16 %v255
    %v588 = vunpack.c.h.b16 %v255
    %v589 = vunpack.c.l.b16 %v256
    %v590 = vunpack.c.l.b16 %v257
    %v591 = vunpack.c.h.b16 %v257
    %v592 = vunpack.c.l.b16 %v258
    %v593 = vunpack.c.l.b16 %v259
    %v594 = vunpack.c.h.b16 %v259
    %v595 = vunpack.c.l.b16 %v260
    %v596 = vunpack.c.l.b16 %v261
    %v597 = vunpack.c.h.b16 %v261
    %v598 = vunpack.c.l.b16 %v262
    %v599 = vunpack.c.l.b16 %v263
    %v600 = vunpack.c.h.b16 %v263
    %v601 = vunpack.c.l.b16 %v264
    %v602 = vpack.c.b16 %v413, %v410
    %v603 = vpack.c.b16 %v414, %v411
    %v604 = vpack.c.b16 %v415, %v412
    %v605 = vpack.c.b16 %v419, %v416
    %v606 = vpack.c.b16 %v420, %v417
    %v607 = vpack.c.b16 %v421, %v418
    %v608 = vpack.c.b16 %v425, %v422
    %v609 = vpack.c.b16 %v426, %v423
    %v610 = vpack.c.b16 %v427, %v424
    %v611 = vpack.c.b16 %v431, %v428
    %v612 = vpack.c.b16 %v432, %v429
    %v613 = vpack.c.b16 %v433, %v430
    %v614 = vpack.c.b16 %v437, %v434
    %v615 = vpack.c.b16 %v438, %v435
    %v616 = vpack.c.b16 %v439, %v436
    %v617 = vpack.c.b16 %v443, %v440
    %v618 = vpack.c.b16 %v444, %v441
    %v619 = vpack.c.b16 %v445, %v442
    %v620 = vpack.c.b16 %v449, %v446
    %v621 = vpack.c.b16 %v450, %v447
    %v622 = vpack.c.b16 %v451, %v448
    %v623 = vpack.c.b16 %v455, %v452
    %v624 = vpack.c.b16 %v456, %v453
    %v625 = vpack.c.b16 %v457, %v454
    %v626 = vpack.c.b16 %v461, %v458
    %v627 = vpack.c.b16 %v462, %v459
    %v628 = vpack.c.b16 %v463, %v460
    %v629 = vpack.c.b16 %v467, %v464
    %v630 = vpack.c.b16 %v468, %v465
    %v631 = vpack.c.b16 %v469, %v466
    %v632 = vpack.c.b16 %v473, %v470
    %v633 = vpack.c.b16 %v474, %v471
    %v634 = vpack.c.b16 %v475, %v472
    %v635 = vpack.c.b16 %v479, %v476
    %v636 = vpack.c.b16 %v480, %v477
    %v637 = vpack.c.b16 %v481, %v478
    %v638 = vpack.c.b16 %v485, %v482
    %v639 = vpack.c.b16 %v486, %v483
    %v640 = vpack.c.b16 %v487, %v484
    %v641 = vpack.c.b16 %v491, %v488
    %v642 = vpack.c.b16 %v492, %v489
    %v643 = vpack.c.b16 %v493, %v490
    %v644 = vpack.c.b16 %v497, %v494
    %v645 = vpack.c.b16 %v498, %v495
    %v646 = vpack.c.b16 %v499, %v496
    %v647 = vpack.c.b16 %v503, %v500
    %v648 = vpack.c.b16 %v504, %v501
    %v649 = vpack.c.b16 %v505, %v502
    %v650 = vpack.c.b16 %v509, %v506
    %v651 = vpack.c.b16 %v510, %v507
    %v652 = vpack.c.b16 %v511, %v508
    %v653 = vpack.c.b16 %v515, %v512
    %v654 = vpack.c.b16 %v516, %v513
    %v655 = vpack.c.b16 %v517, %v514
    %v656 = vpack.c.b16 %v521, %v518
    %v657 = vpack.c.b16 %v522, %v519
    %v658 = vpack.c.b16 %v523, %v520
    %v659 = vpack.c.b16 %v527, %v524
    %v660 = vpack.c.b16 %v528, %v525
    %v661 = vpack.c.b16 %v529, %v526
    %v662 = vpack.c.b16 %v533, %v530
    %v663 = vpack.c.b16 %v534, %v531
    %v664 = vpack.c.b16 %v535, %v532
    %v665 = vpack.c.b16 %v539, %v536
    %v666 = vpack.c.b16 %v540, %v537
    %v667 = vpack.c.b16 %v541, %v538
    %v668 = vpack.c.b16 %v545, %v542
    %v669 = vpack.c.b16 %v546, %v543
    %v670 = vpack.c.b16 %v547, %v544
    %v671 = vpack.c.b16 %v551, %v548
    %v672 = vpack.c.b16 %v552, %v549
    %v673 = vpack.c.b16 %v553, %v550
    %v674 = vpack.c.b16 %v557, %v554
    %v675 = vpack.c.b16 %v558, %v555
    %v676 = vpack.c.b16 %v559, %v556
    %v677 = vpack.c.b16 %v563, %v560
    %v678 = vpack.c.b16 %v564, %v561
    %v679 = vpack.c.b16 %v565, %v562
    %v680 = vpack.c.b16 %v569, %v566
    %v681 = vpack.c.b16 %v570, %v567
    %v682 = vpack.c.b16 %v571, %v568
    %v683 = vpack.c.b16 %v575, %v572
    %v684 = vpack.c.b16 %v576, %v573
    %v685 = vpack.c.b16 %v577, %v574
    %v686 = vpack.c.b16 %v581, %v578
    %v687 = vpack.c.b16 %v582, %v579
    %v688 = vpack.c.b16 %v583, %v580
    %v689 = vpack.c.b16 %v587, %v584
    %v690 = vpack.c.b16 %v588, %v585
    %v691 = vpack.c.b16 %v589, %v586
    %v692 = vpack.c.b16 %v593, %v590
    %v693 = vpack.c.b16 %v594, %v591
    %v694 = vpack.c.b16 %v595, %v592
    %v695 = vpack.c.b16 %v599, %v596
    %v696 = vpack.c.b16 %v600, %v597
    %v697 = vpack.c.b16 %v601, %v598
    %794 = vmatprep.subr.bf16.mxu0 %v603
    %795 = vmatpush1.bf16.msra.mxu0 %v602
    %796 = vmatprep.subr.bf16.mxu0 %v606
    %797 = vmatpush1.bf16.msra.mxu0 %v605
    %798 = vmatprep.subr.bf16.mxu0 %v609
    %799 = vmatpush1.bf16.msra.mxu0 %v608
    %800 = vmatprep.subr.bf16.mxu0 %v612
    %801 = vmatpush1.bf16.msra.mxu0 %v611
    %802 = vmatprep.subr.bf16.mxu0 %v615
    %803 = vmatpush1.bf16.msra.mxu0 %v614
    %804 = vmatprep.subr.bf16.mxu0 %v618
    %805 = vmatpush1.bf16.msra.mxu0 %v617
    %806 = vmatprep.subr.bf16.mxu0 %v621
    %807 = vmatpush1.bf16.msra.mxu0 %v620
    %808 = vmatprep.subr.bf16.mxu0 %v624
    %809 = vmatpush1.bf16.msra.mxu0 %v623
    %810 = vmatprep.subr.bf16.mxu0 %v627
    %811 = vmatpush1.bf16.msra.mxu0 %v626
    %812 = vmatprep.subr.bf16.mxu0 %v630
    %813 = vmatpush1.bf16.msra.mxu0 %v629
    %814 = vmatprep.subr.bf16.mxu0 %v633
    %815 = vmatpush1.bf16.msra.mxu0 %v632
    %816 = vmatprep.subr.bf16.mxu0 %v636
    %817 = vmatpush1.bf16.msra.mxu0 %v635
    %818 = vmatprep.subr.bf16.mxu0 %v639
    %819 = vmatpush1.bf16.msra.mxu0 %v638
    %820 = vmatprep.subr.bf16.mxu0 %v642
    %821 = vmatpush1.bf16.msra.mxu0 %v641
    %822 = vmatprep.subr.bf16.mxu0 %v645
    %823 = vmatpush1.bf16.msra.mxu0 %v644
    %824 = vmatprep.subr.bf16.mxu0 %v648
    %825 = vmatpush1.bf16.msra.mxu0 %v647
    %826 = vmatprep.mubr.bf16.mxu0 %v134
    %827 = vmatmul.mubr.bf16.gmra.mrb[0].mxu0 %v133
    %v828 = vpop.f32.mrb[0].mxu0
    %v829 = vadd.f32 %v270, %v828
    %v830 = vpop.f32.mrb[0].mxu0
    %v831 = vadd.f32 %v274, %v830
    %v832 = vpop.f32.mrb[0].mxu0
    %v833 = vpop.f32.mrb[0].mxu0
    %834 = vdwg.mxu0
    %835 = vmatprep.subr.bf16.mxu0 %v651
    %836 = vmatpush1.bf16.msra.mxu0 %v650
    %837 = vmatprep.subr.bf16.mxu0 %v654
    %838 = vmatpush1.bf16.msra.mxu0 %v653
    %839 = vmatprep.subr.bf16.mxu0 %v657
    %840 = vmatpush1.bf16.msra.mxu0 %v656
    %841 = vmatprep.subr.bf16.mxu0 %v660
    %842 = vmatpush1.bf16.msra.mxu0 %v659
    %843 = vmatprep.subr.bf16.mxu0 %v663
    %844 = vmatpush1.bf16.msra.mxu0 %v662
    %845 = vmatprep.subr.bf16.mxu0 %v666
    %846 = vmatpush1.bf16.msra.mxu0 %v665
    %847 = vmatprep.subr.bf16.mxu0 %v669
    %848 = vmatpush1.bf16.msra.mxu0 %v668
    %849 = vmatprep.subr.bf16.mxu0 %v672
    %850 = vmatpush1.bf16.msra.mxu0 %v671
    %851 = vmatprep.subr.bf16.mxu0 %v675
    %852 = vmatpush1.bf16.msra.mxu0 %v674
    %853 = vmatprep.subr.bf16.mxu0 %v678
    %854 = vmatpush1.bf16.msra.mxu0 %v677
    %855 = vmatprep.subr.bf16.mxu0 %v681
    %856 = vmatpush1.bf16.msra.mxu0 %v680
    %857 = vmatprep.subr.bf16.mxu0 %v684
    %858 = vmatpush1.bf16.msra.mxu0 %v683
    %859 = vmatprep.subr.bf16.mxu0 %v687
    %860 = vmatpush1.bf16.msra.mxu0 %v686
    %861 = vmatprep.subr.bf16.mxu0 %v690
    %862 = vmatpush1.bf16.msra.mxu0 %v689
    %863 = vmatprep.subr.bf16.mxu0 %v693
    %864 = vmatpush1.bf16.msra.mxu0 %v692
    %865 = vmatprep.subr.bf16.mxu0 %v696
    %866 = vmatpush1.bf16.msra.mxu0 %v695
    %867 = vmatprep.mubr.bf16.mxu0 %v136
    %868 = vmatmul.mubr.bf16.gmra.mrb[0].mxu0 %v135
    %v869 = vpop.f32.mrb[0].mxu0
    %v870 = vadd.f32 %v829, %v869
    %v871 = vpop.f32.mrb[0].mxu0
    %v872 = vadd.f32 %v831, %v871
    %v873 = vpop.f32.mrb[0].mxu0
    %v874 = vpop.f32.mrb[0].mxu0
    %875 = vdwg.mxu0
    %876 = vmatprep.subr.bf16.mxu0 0
    %877 = vmatpush1.bf16.msra.mxu0 %v604
    %878 = vmatprep.subr.bf16.mxu0 0
    %879 = vmatpush1.bf16.msra.mxu0 %v607
    %880 = vmatprep.subr.bf16.mxu0 0
    %881 = vmatpush1.bf16.msra.mxu0 %v610
    %882 = vmatprep.subr.bf16.mxu0 0
    %883 = vmatpush1.bf16.msra.mxu0 %v613
    %884 = vmatprep.subr.bf16.mxu0 0
    %885 = vmatpush1.bf16.msra.mxu0 %v616
    %886 = vmatprep.subr.bf16.mxu0 0
    %887 = vmatpush1.bf16.msra.mxu0 %v619
    %888 = vmatprep.subr.bf16.mxu0 0
    %889 = vmatpush1.bf16.msra.mxu0 %v622
    %890 = vmatprep.subr.bf16.mxu0 0
    %891 = vmatpush1.bf16.msra.mxu0 %v625
    %892 = vmatprep.subr.bf16.mxu0 0
    %893 = vmatpush1.bf16.msra.mxu0 %v628
    %894 = vmatprep.subr.bf16.mxu0 0
    %895 = vmatpush1.bf16.msra.mxu0 %v631
    %896 = vmatprep.subr.bf16.mxu0 0
    %897 = vmatpush1.bf16.msra.mxu0 %v634
    %898 = vmatprep.subr.bf16.mxu0 0
    %899 = vmatpush1.bf16.msra.mxu0 %v637
    %900 = vmatprep.subr.bf16.mxu0 0
    %901 = vmatpush1.bf16.msra.mxu0 %v640
    %902 = vmatprep.subr.bf16.mxu0 0
    %903 = vmatpush1.bf16.msra.mxu0 %v643
    %904 = vmatprep.subr.bf16.mxu0 0
    %905 = vmatpush1.bf16.msra.mxu0 %v646
    %906 = vmatprep.subr.bf16.mxu0 0
    %907 = vmatpush1.bf16.msra.mxu0 %v649
    %908 = vmatprep.mubr.bf16.mxu0 %v134
    %909 = vmatmul.mubr.bf16.gmra.mrb[0].mxu0 %v133
    %v910 = vpop.f32.mrb[0].mxu0
    %v911 = vadd.f32 %v278, %v910
    %v912 = vpop.f32.mrb[0].mxu0
    %v913 = vpop.f32.mrb[0].mxu0
    %v914 = vpop.f32.mrb[0].mxu0
    %915 = vdwg.mxu0
    %916 = vmatprep.subr.bf16.mxu0 0
    %917 = vmatpush1.bf16.msra.mxu0 %v652
    %918 = vmatprep.subr.bf16.mxu0 0
    %919 = vmatpush1.bf16.msra.mxu0 %v655
    %920 = vmatprep.subr.bf16.mxu0 0
    %921 = vmatpush1.bf16.msra.mxu0 %v658
    %922 = vmatprep.subr.bf16.mxu0 0
    %923 = vmatpush1.bf16.msra.mxu0 %v661
    %924 = vmatprep.subr.bf16.mxu0 0
    %925 = vmatpush1.bf16.msra.mxu0 %v664
    %926 = vmatprep.subr.bf16.mxu0 0
    %927 = vmatpush1.bf16.msra.mxu0 %v667
    %928 = vmatprep.subr.bf16.mxu0 0
    %929 = vmatpush1.bf16.msra.mxu0 %v670
    %930 = vmatprep.subr.bf16.mxu0 0
    %931 = vmatpush1.bf16.msra.mxu0 %v673
    %932 = vmatprep.subr.bf16.mxu0 0
    %933 = vmatpush1.bf16.msra.mxu0 %v676
    %934 = vmatprep.subr.bf16.mxu0 0
    %935 = vmatpush1.bf16.msra.mxu0 %v679
    %936 = vmatprep.subr.bf16.mxu0 0
    %937 = vmatpush1.bf16.msra.mxu0 %v682
    %938 = vmatprep.subr.bf16.mxu0 0
    %939 = vmatpush1.bf16.msra.mxu0 %v685
    %940 = vmatprep.subr.bf16.mxu0 0
    %941 = vmatpush1.bf16.msra.mxu0 %v688
    %942 = vmatprep.subr.bf16.mxu0 0
    %943 = vmatpush1.bf16.msra.mxu0 %v691
    %944 = vmatprep.subr.bf16.mxu0 0
    %945 = vmatpush1.bf16.msra.mxu0 %v694
    %946 = vmatprep.subr.bf16.mxu0 0
    %947 = vmatpush1.bf16.msra.mxu0 %v697
    %948 = vmatprep.mubr.bf16.mxu0 %v136
    %949 = vmatmul.mubr.bf16.gmra.mrb[0].mxu0 %v135
    %v950 = vpop.f32.mrb[0].mxu0
    %v951 = vadd.f32 %v911, %v950
    %v952 = vpop.f32.mrb[0].mxu0
    %v953 = vpop.f32.mrb[0].mxu0
    %v954 = vpop.f32.mrb[0].mxu0
    %955 = vdwg.mxu0
    %v956 = vmul.f32 %v870, %v870
    %v957 = vmul.f32 %v872, %v872
    %v958 = vmul.f32 %v951, %v951
    %v959 = vadd.f32 %v956, %v957
    %v960 = vadd.f32 %v959, %v958
    %961 = vadd.xlane.f32.xlu0 %v960
    %v962 = vpop.xlane.xlu0 %961
    %v963 = vadd.f32 %v962, 1e-12
    %v964 = vrsqrt.pop %v963
    %v965 = vmul.f32 %v870, %v964
    %v966 = vmul.f32 %v872, %v964
    %v967 = vmul.f32 %v951, %v964
    %v968 = vpack.c.bf16 %v965, %v965
    %v969 = vpack.c.bf16 %v966, %v966
    %v970 = vpack.c.bf16 %v967, %v967
    %v971 = vld [vmem:[#allocation6] sm:$0xff]
    %v972 = vld [vmem:[#allocation6 + $0x8] sm:$0xff]
    %v973 = vld [vmem:[#allocation6 + $0x10] sm:$0xff]
    %v974 = vld [vmem:[#allocation6 + $0x18] sm:$0xff]
    %v975 = vld [vmem:[#allocation6 + $0x20] sm:$0xff]
    %v976 = vld [vmem:[#allocation6 + $0x28] sm:$0xff]
    %v977 = vld [vmem:[#allocation6 + $0x30] sm:$0xff]
    %v978 = vld [vmem:[#allocation6 + $0x38] sm:$0xff]
    %v979 = vld [vmem:[#allocation6 + $0x40] sm:$0xff]
    %v980 = vld [vmem:[#allocation6 + $0x48] sm:$0xff]
    %v981 = vld [vmem:[#allocation6 + $0x50] sm:$0xff]
    %v982 = vld [vmem:[#allocation6 + $0x58] sm:$0xff]
    %v983 = vld [vmem:[#allocation6 + $0x60] sm:$0xff]
    %v984 = vld [vmem:[#allocation6 + $0x68] sm:$0xff]
    %v985 = vld [vmem:[#allocation6 + $0x70] sm:$0xff]
    %v986 = vld [vmem:[#allocation6 + $0x78] sm:$0xff]
    %v987 = vld [vmem:[#allocation6 + $0x80] sm:$0xff]
    %v988 = vld [vmem:[#allocation6 + $0x88] sm:$0xff]
    %v989 = vld [vmem:[#allocation6 + $0x90] sm:$0xff]
    %v990 = vld [vmem:[#allocation6 + $0x98] sm:$0xff]
    %v991 = vld [vmem:[#allocation6 + $0xa0] sm:$0xff]
    %v992 = vld [vmem:[#allocation6 + $0xa8] sm:$0xff]
    %v993 = vld [vmem:[#allocation6 + $0xb0] sm:$0xff]
    %v994 = vld [vmem:[#allocation6 + $0xb8] sm:$0xff]
    %v995 = vld [vmem:[#allocation6 + $0xc0] sm:$0xff]
    %v996 = vld [vmem:[#allocation6 + $0xc8] sm:$0xff]
    %v997 = vld [vmem:[#allocation6 + $0xd0] sm:$0xff]
    %v998 = vld [vmem:[#allocation6 + $0xd8] sm:$0xff]
    %v999 = vld [vmem:[#allocation6 + $0xe0] sm:$0xff]
    %v1000 = vld [vmem:[#allocation6 + $0xe8] sm:$0xff]
    %v1001 = vld [vmem:[#allocation6 + $0xf0] sm:$0xff]
    %v1002 = vld [vmem:[#allocation6 + $0xf8] sm:$0xff]
    %v1003 = vld [vmem:[#allocation6 + $0x100] sm:$0xff]
    %v1004 = vld [vmem:[#allocation6 + $0x108] sm:$0xff]
    %v1005 = vld [vmem:[#allocation6 + $0x110] sm:$0xff]
    %v1006 = vld [vmem:[#allocation6 + $0x118] sm:$0xff]
    %v1007 = vld [vmem:[#allocation6 + $0x120] sm:$0xff]
    %v1008 = vld [vmem:[#allocation6 + $0x128] sm:$0xff]
    %v1009 = vld [vmem:[#allocation6 + $0x130] sm:$0xff]
    %v1010 = vld [vmem:[#allocation6 + $0x138] sm:$0xff]
    %v1011 = vld [vmem:[#allocation6 + $0x140] sm:$0xff]
    %v1012 = vld [vmem:[#allocation6 + $0x148] sm:$0xff]
    %v1013 = vld [vmem:[#allocation6 + $0x150] sm:$0xff]
    %v1014 = vld [vmem:[#allocation6 + $0x158] sm:$0xff]
    %v1015 = vld [vmem:[#allocation6 + $0x160] sm:$0xff]
    %v1016 = vld [vmem:[#allocation6 + $0x168] sm:$0xff]
    %v1017 = vld [vmem:[#allocation6 + $0x170] sm:$0xff]
    %v1018 = vld [vmem:[#allocation6 + $0x178] sm:$0xff]
    %v1019 = vld [vmem:[#allocation6 + $0x180] sm:$0xff]
    %v1020 = vld [vmem:[#allocation6 + $0x188] sm:$0xff]
    %v1021 = vld [vmem:[#allocation6 + $0x190] sm:$0xff]
    %v1022 = vld [vmem:[#allocation6 + $0x198] sm:$0xff]
    %v1023 = vld [vmem:[#allocation6 + $0x1a0] sm:$0xff]
    %v1024 = vld [vmem:[#allocation6 + $0x1a8] sm:$0xff]
    %v1025 = vld [vmem:[#allocation6 + $0x1b0] sm:$0xff]
    %v1026 = vld [vmem:[#allocation6 + $0x1b8] sm:$0xff]
    %v1027 = vld [vmem:[#allocation6 + $0x1c0] sm:$0xff]
    %v1028 = vld [vmem:[#allocation6 + $0x1c8] sm:$0xff]
    %v1029 = vld [vmem:[#allocation6 + $0x1d0] sm:$0xff]
    %v1030 = vld [vmem:[#allocation6 + $0x1d8] sm:$0xff]
    %v1031 = vld [vmem:[#allocation6 + $0x1e0] sm:$0xff]
    %v1032 = vld [vmem:[#allocation6 + $0x1e8] sm:$0xff]
    %v1033 = vld [vmem:[#allocation6 + $0x1f0] sm:$0xff]
    %v1034 = vld [vmem:[#allocation6 + $0x1f8] sm:$0xff]
    %v1035 = vld [vmem:[#allocation6 + $0x200] sm:$0xff]
    %v1036 = vld [vmem:[#allocation6 + $0x208] sm:$0xff]
    %v1037 = vld [vmem:[#allocation6 + $0x210] sm:$0xff]
    %v1038 = vld [vmem:[#allocation6 + $0x218] sm:$0xff]
    %v1039 = vld [vmem:[#allocation6 + $0x220] sm:$0xff]
    %v1040 = vld [vmem:[#allocation6 + $0x228] sm:$0xff]
    %v1041 = vld [vmem:[#allocation6 + $0x230] sm:$0xff]
    %v1042 = vld [vmem:[#allocation6 + $0x238] sm:$0xff]
    %v1043 = vld [vmem:[#allocation6 + $0x240] sm:$0xff]
    %v1044 = vld [vmem:[#allocation6 + $0x248] sm:$0xff]
    %v1045 = vld [vmem:[#allocation6 + $0x250] sm:$0xff]
    %v1046 = vld [vmem:[#allocation6 + $0x258] sm:$0xff]
    %v1047 = vld [vmem:[#allocation6 + $0x260] sm:$0xff]
    %v1048 = vld [vmem:[#allocation6 + $0x268] sm:$0xff]
    %v1049 = vld [vmem:[#allocation6 + $0x270] sm:$0xff]
    %v1050 = vld [vmem:[#allocation6 + $0x278] sm:$0xff]
    %v1051 = vld [vmem:[#allocation6 + $0x280] sm:$0xff]
    %v1052 = vld [vmem:[#allocation6 + $0x288] sm:$0xff]
    %v1053 = vld [vmem:[#allocation6 + $0x290] sm:$0xff]
    %v1054 = vld [vmem:[#allocation6 + $0x298] sm:$0xff]
    %v1055 = vld [vmem:[#allocation6 + $0x2a0] sm:$0xff]
    %v1056 = vld [vmem:[#allocation6 + $0x2a8] sm:$0xff]
    %v1057 = vld [vmem:[#allocation6 + $0x2b0] sm:$0xff]
    %v1058 = vld [vmem:[#allocation6 + $0x2b8] sm:$0xff]
    %v1059 = vld [vmem:[#allocation6 + $0x2c0] sm:$0xff]
    %v1060 = vld [vmem:[#allocation6 + $0x2c8] sm:$0xff]
    %v1061 = vld [vmem:[#allocation6 + $0x2d0] sm:$0xff]
    %v1062 = vld [vmem:[#allocation6 + $0x2d8] sm:$0xff]
    %v1063 = vld [vmem:[#allocation6 + $0x2e0] sm:$0xff]
    %v1064 = vld [vmem:[#allocation6 + $0x2e8] sm:$0xff]
    %v1065 = vld [vmem:[#allocation6 + $0x2f0] sm:$0xff]
    %v1066 = vld [vmem:[#allocation6 + $0x2f8] sm:$0xff]
    %v1067 = vld [vmem:[#allocation6 + $0x300] sm:$0xff]
    %v1068 = vld [vmem:[#allocation6 + $0x308] sm:$0xff]
    %v1069 = vld [vmem:[#allocation6 + $0x310] sm:$0xff]
    %v1070 = vld [vmem:[#allocation6 + $0x318] sm:$0xff]
    %v1071 = vld [vmem:[#allocation6 + $0x320] sm:$0xff]
    %v1072 = vld [vmem:[#allocation6 + $0x328] sm:$0xff]
    %v1073 = vld [vmem:[#allocation6 + $0x330] sm:$0xff]
    %v1074 = vld [vmem:[#allocation6 + $0x338] sm:$0xff]
    %v1075 = vld [vmem:[#allocation6 + $0x340] sm:$0xff]
    %v1076 = vld [vmem:[#allocation6 + $0x348] sm:$0xff]
    %v1077 = vld [vmem:[#allocation6 + $0x350] sm:$0xff]
    %v1078 = vld [vmem:[#allocation6 + $0x358] sm:$0xff]
    %v1079 = vld [vmem:[#allocation6 + $0x360] sm:$0xff]
    %v1080 = vld [vmem:[#allocation6 + $0x368] sm:$0xff]
    %v1081 = vld [vmem:[#allocation6 + $0x370] sm:$0xff]
    %v1082 = vld [vmem:[#allocation6 + $0x378] sm:$0xff]
    %v1083 = vld [vmem:[#allocation6 + $0x380] sm:$0xff]
    %v1084 = vld [vmem:[#allocation6 + $0x388] sm:$0xff]
    %v1085 = vld [vmem:[#allocation6 + $0x390] sm:$0xff]
    %v1086 = vld [vmem:[#allocation6 + $0x398] sm:$0xff]
    %v1087 = vld [vmem:[#allocation6 + $0x3a0] sm:$0xff]
    %v1088 = vld [vmem:[#allocation6 + $0x3a8] sm:$0xff]
    %v1089 = vld [vmem:[#allocation6 + $0x3b0] sm:$0xff]
    %v1090 = vld [vmem:[#allocation6 + $0x3b8] sm:$0xff]
    %v1091 = vld [vmem:[#allocation6 + $0x3c0] sm:$0xff]
    %v1092 = vld [vmem:[#allocation6 + $0x3c8] sm:$0xff]
    %v1093 = vld [vmem:[#allocation6 + $0x3d0] sm:$0xff]
    %v1094 = vld [vmem:[#allocation6 + $0x3d8] sm:$0xff]
    %v1095 = vld [vmem:[#allocation6 + $0x3e0] sm:$0xff]
    %v1096 = vld [vmem:[#allocation6 + $0x3e8] sm:$0xff]
    %v1097 = vld [vmem:[#allocation6 + $0x3f0] sm:$0xff]
    %v1098 = vld [vmem:[#allocation6 + $0x3f8] sm:$0xff]
    %v1099 = vld [vmem:[#allocation6 + $0x400] sm:$0xff]
    %v1100 = vld [vmem:[#allocation6 + $0x408] sm:$0xff]
    %v1101 = vld [vmem:[#allocation6 + $0x410] sm:$0xff]
    %v1102 = vld [vmem:[#allocation6 + $0x418] sm:$0xff]
    %v1103 = vld [vmem:[#allocation6 + $0x420] sm:$0xff]
    %v1104 = vld [vmem:[#allocation6 + $0x428] sm:$0xff]
    %v1105 = vld [vmem:[#allocation6 + $0x430] sm:$0xff]
    %v1106 = vld [vmem:[#allocation6 + $0x438] sm:$0xff]
    %v1107 = vld [vmem:[#allocation6 + $0x440] sm:$0xff]
    %v1108 = vld [vmem:[#allocation6 + $0x448] sm:$0xff]
    %v1109 = vld [vmem:[#allocation6 + $0x450] sm:$0xff]
    %v1110 = vld [vmem:[#allocation6 + $0x458] sm:$0xff]
    %v1111 = vld [vmem:[#allocation6 + $0x460] sm:$0xff]
    %v1112 = vld [vmem:[#allocation6 + $0x468] sm:$0xff]
    %v1113 = vld [vmem:[#allocation6 + $0x470] sm:$0xff]
    %v1114 = vld [vmem:[#allocation6 + $0x478] sm:$0xff]
    %v1115 = vld [vmem:[%s8] sm:$0x3f]
    %v1117 = vlaneseq
    %v1118 = vshrl.u32 %v1117, 7
    %v1119 = vsub.s32 0, %v1118
    %v1120 = vrot.slane %v1115, %v1119
    %v1121 = vlaneseq
    %v1122 = vshrl.u32 %v1121, 7
    %v1123 = vsub.s32 1, %v1122
    %v1124 = vrot.slane %v1115, %v1123
    %v1125 = vlaneseq
    %v1126 = vshrl.u32 %v1125, 7
    %v1127 = vsub.s32 2, %v1126
    %v1128 = vrot.slane %v1115, %v1127
    %v1129 = vlaneseq
    %v1130 = vshrl.u32 %v1129, 7
    %v1131 = vsub.s32 3, %v1130
    %v1132 = vrot.slane %v1115, %v1131
    %v1133 = vlaneseq
    %v1134 = vshrl.u32 %v1133, 7
    %v1135 = vsub.s32 4, %v1134
    %v1136 = vrot.slane %v1115, %v1135
    %v1137 = vlaneseq
    %v1138 = vshrl.u32 %v1137, 7
    %v1139 = vsub.s32 5, %v1138
    %v1140 = vrot.slane %v1115, %v1139
    %v1291 = vunpack.c.l.b16 %v971
    %v1292 = vunpack.c.h.b16 %v971
    %v1293 = vunpack.c.l.b16 %v972
    %v1294 = vunpack.c.h.b16 %v972
    %v1295 = vunpack.c.l.b16 %v973
    %v1296 = vunpack.c.h.b16 %v973
    %v1297 = vunpack.c.l.b16 %v974
    %v1298 = vunpack.c.h.b16 %v974
    %v1299 = vunpack.c.l.b16 %v975
    %v1300 = vunpack.c.h.b16 %v975
    %v1301 = vunpack.c.l.b16 %v976
    %v1302 = vunpack.c.h.b16 %v976
    %v1303 = vunpack.c.l.b16 %v977
    %v1304 = vunpack.c.h.b16 %v977
    %v1305 = vunpack.c.l.b16 %v978
    %v1306 = vunpack.c.h.b16 %v978
    %v1307 = vunpack.c.l.b16 %v979
    %v1308 = vunpack.c.h.b16 %v979
    %v1309 = vunpack.c.l.b16 %v980
    %v1310 = vunpack.c.h.b16 %v980
    %v1311 = vunpack.c.l.b16 %v981
    %v1312 = vunpack.c.h.b16 %v981
    %v1313 = vunpack.c.l.b16 %v982
    %v1314 = vunpack.c.h.b16 %v982
    %v1315 = vunpack.c.l.b16 %v983
    %v1316 = vunpack.c.h.b16 %v983
    %v1317 = vunpack.c.l.b16 %v984
    %v1318 = vunpack.c.h.b16 %v984
    %v1319 = vunpack.c.l.b16 %v985
    %v1320 = vunpack.c.h.b16 %v985
    %v1321 = vunpack.c.l.b16 %v986
    %v1322 = vunpack.c.h.b16 %v986
    %v1323 = vunpack.c.l.b16 %v987
    %v1324 = vunpack.c.h.b16 %v987
    %v1325 = vunpack.c.l.b16 %v988
    %v1326 = vunpack.c.h.b16 %v988
    %v1327 = vunpack.c.l.b16 %v989
    %v1328 = vunpack.c.h.b16 %v989
    %v1329 = vunpack.c.l.b16 %v990
    %v1330 = vunpack.c.h.b16 %v990
    %v1331 = vunpack.c.l.b16 %v991
    %v1332 = vunpack.c.h.b16 %v991
    %v1333 = vunpack.c.l.b16 %v992
    %v1334 = vunpack.c.h.b16 %v992
    %v1335 = vunpack.c.l.b16 %v993
    %v1336 = vunpack.c.h.b16 %v993
    %v1337 = vunpack.c.l.b16 %v994
    %v1338 = vunpack.c.h.b16 %v994
    %v1339 = vunpack.c.l.b16 %v995
    %v1340 = vunpack.c.h.b16 %v995
    %v1341 = vunpack.c.l.b16 %v996
    %v1342 = vunpack.c.h.b16 %v996
    %v1343 = vunpack.c.l.b16 %v997
    %v1344 = vunpack.c.h.b16 %v997
    %v1345 = vunpack.c.l.b16 %v998
    %v1346 = vunpack.c.h.b16 %v998
    %v1347 = vunpack.c.l.b16 %v999
    %v1348 = vunpack.c.h.b16 %v999
    %v1349 = vunpack.c.l.b16 %v1000
    %v1350 = vunpack.c.h.b16 %v1000
    %v1351 = vunpack.c.l.b16 %v1001
    %v1352 = vunpack.c.h.b16 %v1001
    %v1353 = vunpack.c.l.b16 %v1002
    %v1354 = vunpack.c.h.b16 %v1002
    %v1355 = vunpack.c.l.b16 %v1003
    %v1356 = vunpack.c.h.b16 %v1003
    %v1357 = vunpack.c.l.b16 %v1004
    %v1358 = vunpack.c.h.b16 %v1004
    %v1359 = vunpack.c.l.b16 %v1005
    %v1360 = vunpack.c.h.b16 %v1005
    %v1361 = vunpack.c.l.b16 %v1006
    %v1362 = vunpack.c.h.b16 %v1006
    %v1363 = vunpack.c.l.b16 %v1007
    %v1364 = vunpack.c.h.b16 %v1007
    %v1365 = vunpack.c.l.b16 %v1008
    %v1366 = vunpack.c.h.b16 %v1008
    %v1367 = vunpack.c.l.b16 %v1009
    %v1368 = vunpack.c.h.b16 %v1009
    %v1369 = vunpack.c.l.b16 %v1010
    %v1370 = vunpack.c.h.b16 %v1010
    %v1371 = vunpack.c.l.b16 %v1011
    %v1372 = vunpack.c.h.b16 %v1011
    %v1373 = vunpack.c.l.b16 %v1012
    %v1374 = vunpack.c.h.b16 %v1012
    %v1375 = vunpack.c.l.b16 %v1013
    %v1376 = vunpack.c.h.b16 %v1013
    %v1377 = vunpack.c.l.b16 %v1014
    %v1378 = vunpack.c.h.b16 %v1014
    %v1379 = vunpack.c.l.b16 %v1015
    %v1380 = vunpack.c.h.b16 %v1015
    %v1381 = vunpack.c.l.b16 %v1016
    %v1382 = vunpack.c.h.b16 %v1016
    %v1383 = vunpack.c.l.b16 %v1017
    %v1384 = vunpack.c.h.b16 %v1017
    %v1385 = vunpack.c.l.b16 %v1018
    %v1386 = vunpack.c.h.b16 %v1018
    %v1387 = vunpack.c.l.b16 %v1019
    %v1388 = vunpack.c.h.b16 %v1019
    %v1389 = vunpack.c.l.b16 %v1020
    %v1390 = vunpack.c.h.b16 %v1020
    %v1391 = vunpack.c.l.b16 %v1021
    %v1392 = vunpack.c.h.b16 %v1021
    %v1393 = vunpack.c.l.b16 %v1022
    %v1394 = vunpack.c.h.b16 %v1022
    %v1395 = vunpack.c.l.b16 %v1023
    %v1396 = vunpack.c.h.b16 %v1023
    %v1397 = vunpack.c.l.b16 %v1024
    %v1398 = vunpack.c.h.b16 %v1024
    %v1399 = vunpack.c.l.b16 %v1025
    %v1400 = vunpack.c.h.b16 %v1025
    %v1401 = vunpack.c.l.b16 %v1026
    %v1402 = vunpack.c.h.b16 %v1026
    %v1403 = vunpack.c.l.b16 %v1027
    %v1404 = vunpack.c.h.b16 %v1027
    %v1405 = vunpack.c.l.b16 %v1028
    %v1406 = vunpack.c.h.b16 %v1028
    %v1407 = vunpack.c.l.b16 %v1029
    %v1408 = vunpack.c.h.b16 %v1029
    %v1409 = vunpack.c.l.b16 %v1030
    %v1410 = vunpack.c.h.b16 %v1030
    %v1411 = vunpack.c.l.b16 %v1031
    %v1412 = vunpack.c.h.b16 %v1031
    %v1413 = vunpack.c.l.b16 %v1032
    %v1414 = vunpack.c.h.b16 %v1032
    %v1415 = vunpack.c.l.b16 %v1033
    %v1416 = vunpack.c.h.b16 %v1033
    %v1417 = vunpack.c.l.b16 %v1034
    %v1418 = vunpack.c.h.b16 %v1034
    %v1419 = vunpack.c.l.b16 %v1035
    %v1420 = vunpack.c.h.b16 %v1035
    %v1421 = vunpack.c.l.b16 %v1036
    %v1422 = vunpack.c.h.b16 %v1036
    %v1423 = vunpack.c.l.b16 %v1037
    %v1424 = vunpack.c.h.b16 %v1037
    %v1425 = vunpack.c.l.b16 %v1038
    %v1426 = vunpack.c.h.b16 %v1038
    %v1427 = vunpack.c.l.b16 %v1039
    %v1428 = vunpack.c.h.b16 %v1039
    %v1429 = vunpack.c.l.b16 %v1040
    %v1430 = vunpack.c.h.b16 %v1040
    %v1431 = vunpack.c.l.b16 %v1041
    %v1432 = vunpack.c.h.b16 %v1041
    %v1433 = vunpack.c.l.b16 %v1042
    %v1434 = vunpack.c.h.b16 %v1042
    %v1435 = vunpack.c.l.b16 %v1043
    %v1436 = vunpack.c.h.b16 %v1043
    %v1437 = vunpack.c.l.b16 %v1044
    %v1438 = vunpack.c.h.b16 %v1044
    %v1439 = vunpack.c.l.b16 %v1045
    %v1440 = vunpack.c.h.b16 %v1045
    %v1441 = vunpack.c.l.b16 %v1046
    %v1442 = vunpack.c.h.b16 %v1046
    %v1443 = vunpack.c.l.b16 %v1047
    %v1444 = vunpack.c.h.b16 %v1047
    %v1445 = vunpack.c.l.b16 %v1048
    %v1446 = vunpack.c.h.b16 %v1048
    %v1447 = vunpack.c.l.b16 %v1049
    %v1448 = vunpack.c.h.b16 %v1049
    %v1449 = vunpack.c.l.b16 %v1050
    %v1450 = vunpack.c.h.b16 %v1050
    %v1451 = vunpack.c.l.b16 %v1051
    %v1452 = vunpack.c.h.b16 %v1051
    %v1453 = vunpack.c.l.b16 %v1052
    %v1454 = vunpack.c.h.b16 %v1052
    %v1455 = vunpack.c.l.b16 %v1053
    %v1456 = vunpack.c.h.b16 %v1053
    %v1457 = vunpack.c.l.b16 %v1054
    %v1458 = vunpack.c.h.b16 %v1054
    %v1459 = vunpack.c.l.b16 %v1055
    %v1460 = vunpack.c.h.b16 %v1055
    %v1461 = vunpack.c.l.b16 %v1056
    %v1462 = vunpack.c.h.b16 %v1056
    %v1463 = vunpack.c.l.b16 %v1057
    %v1464 = vunpack.c.h.b16 %v1057
    %v1465 = vunpack.c.l.b16 %v1058
    %v1466 = vunpack.c.h.b16 %v1058
    %v1467 = vunpack.c.l.b16 %v1059
    %v1468 = vunpack.c.h.b16 %v1059
    %v1469 = vunpack.c.l.b16 %v1060
    %v1470 = vunpack.c.h.b16 %v1060
    %v1471 = vunpack.c.l.b16 %v1061
    %v1472 = vunpack.c.h.b16 %v1061
    %v1473 = vunpack.c.l.b16 %v1062
    %v1474 = vunpack.c.h.b16 %v1062
    %v1475 = vunpack.c.l.b16 %v1063
    %v1476 = vunpack.c.h.b16 %v1063
    %v1477 = vunpack.c.l.b16 %v1064
    %v1478 = vunpack.c.h.b16 %v1064
    %v1479 = vunpack.c.l.b16 %v1065
    %v1480 = vunpack.c.h.b16 %v1065
    %v1481 = vunpack.c.l.b16 %v1066
    %v1482 = vunpack.c.h.b16 %v1066
    %v1483 = vunpack.c.l.b16 %v1067
    %v1484 = vunpack.c.h.b16 %v1067
    %v1485 = vunpack.c.l.b16 %v1068
    %v1486 = vunpack.c.h.b16 %v1068
    %v1487 = vunpack.c.l.b16 %v1069
    %v1488 = vunpack.c.h.b16 %v1069
    %v1489 = vunpack.c.l.b16 %v1070
    %v1490 = vunpack.c.h.b16 %v1070
    %v1491 = vunpack.c.l.b16 %v1071
    %v1492 = vunpack.c.h.b16 %v1071
    %v1493 = vunpack.c.l.b16 %v1072
    %v1494 = vunpack.c.h.b16 %v1072
    %v1495 = vunpack.c.l.b16 %v1073
    %v1496 = vunpack.c.h.b16 %v1073
    %v1497 = vunpack.c.l.b16 %v1074
    %v1498 = vunpack.c.h.b16 %v1074
    %v1499 = vunpack.c.l.b16 %v1075
    %v1500 = vunpack.c.h.b16 %v1075
    %v1501 = vunpack.c.l.b16 %v1076
    %v1502 = vunpack.c.h.b16 %v1076
    %v1503 = vunpack.c.l.b16 %v1077
    %v1504 = vunpack.c.h.b16 %v1077
    %v1505 = vunpack.c.l.b16 %v1078
    %v1506 = vunpack.c.h.b16 %v1078
    %v1507 = vunpack.c.l.b16 %v1079
    %v1508 = vunpack.c.h.b16 %v1079
    %v1509 = vunpack.c.l.b16 %v1080
    %v1510 = vunpack.c.h.b16 %v1080
    %v1511 = vunpack.c.l.b16 %v1081
    %v1512 = vunpack.c.h.b16 %v1081
    %v1513 = vunpack.c.l.b16 %v1082
    %v1514 = vunpack.c.h.b16 %v1082
    %v1515 = vunpack.c.l.b16 %v1083
    %v1516 = vunpack.c.h.b16 %v1083
    %v1517 = vunpack.c.l.b16 %v1084
    %v1518 = vunpack.c.h.b16 %v1084
    %v1519 = vunpack.c.l.b16 %v1085
    %v1520 = vunpack.c.h.b16 %v1085
    %v1521 = vunpack.c.l.b16 %v1086
    %v1522 = vunpack.c.h.b16 %v1086
    %v1523 = vunpack.c.l.b16 %v1087
    %v1524 = vunpack.c.h.b16 %v1087
    %v1525 = vunpack.c.l.b16 %v1088
    %v1526 = vunpack.c.h.b16 %v1088
    %v1527 = vunpack.c.l.b16 %v1089
    %v1528 = vunpack.c.h.b16 %v1089
    %v1529 = vunpack.c.l.b16 %v1090
    %v1530 = vunpack.c.h.b16 %v1090
    %v1531 = vunpack.c.l.b16 %v1091
    %v1532 = vunpack.c.h.b16 %v1091
    %v1533 = vunpack.c.l.b16 %v1092
    %v1534 = vunpack.c.h.b16 %v1092
    %v1535 = vunpack.c.l.b16 %v1093
    %v1536 = vunpack.c.h.b16 %v1093
    %v1537 = vunpack.c.l.b16 %v1094
    %v1538 = vunpack.c.h.b16 %v1094
    %v1539 = vunpack.c.l.b16 %v1095
    %v1540 = vunpack.c.h.b16 %v1095
    %v1541 = vunpack.c.l.b16 %v1096
    %v1542 = vunpack.c.h.b16 %v1096
    %v1543 = vunpack.c.l.b16 %v1097
    %v1544 = vunpack.c.h.b16 %v1097
    %v1545 = vunpack.c.l.b16 %v1098
    %v1546 = vunpack.c.h.b16 %v1098
    %v1547 = vunpack.c.l.b16 %v1099
    %v1548 = vunpack.c.h.b16 %v1099
    %v1549 = vunpack.c.l.b16 %v1100
    %v1550 = vunpack.c.h.b16 %v1100
    %v1551 = vunpack.c.l.b16 %v1101
    %v1552 = vunpack.c.h.b16 %v1101
    %v1553 = vunpack.c.l.b16 %v1102
    %v1554 = vunpack.c.h.b16 %v1102
    %v1555 = vunpack.c.l.b16 %v1103
    %v1556 = vunpack.c.h.b16 %v1103
    %v1557 = vunpack.c.l.b16 %v1104
    %v1558 = vunpack.c.h.b16 %v1104
    %v1559 = vunpack.c.l.b16 %v1105
    %v1560 = vunpack.c.h.b16 %v1105
    %v1561 = vunpack.c.l.b16 %v1106
    %v1562 = vunpack.c.h.b16 %v1106
    %v1563 = vunpack.c.l.b16 %v1107
    %v1564 = vunpack.c.h.b16 %v1107
    %v1565 = vunpack.c.l.b16 %v1108
    %v1566 = vunpack.c.h.b16 %v1108
    %v1567 = vunpack.c.l.b16 %v1109
    %v1568 = vunpack.c.h.b16 %v1109
    %v1569 = vunpack.c.l.b16 %v1110
    %v1570 = vunpack.c.h.b16 %v1110
    %v1571 = vunpack.c.l.b16 %v1111
    %v1572 = vunpack.c.h.b16 %v1111
    %v1573 = vunpack.c.l.b16 %v1112
    %v1574 = vunpack.c.h.b16 %v1112
    %v1575 = vunpack.c.l.b16 %v1113
    %v1576 = vunpack.c.h.b16 %v1113
    %v1577 = vunpack.c.l.b16 %v1114
    %v1578 = vunpack.c.h.b16 %v1114
    %v1579 = vpack.c.b16 %v1297, %v1291
    %v1580 = vpack.c.b16 %v1298, %v1292
    %v1581 = vpack.c.b16 %v1299, %v1293
    %v1582 = vpack.c.b16 %v1300, %v1294
    %v1583 = vpack.c.b16 %v1301, %v1295
    %v1584 = vpack.c.b16 %v1302, %v1296
    %v1585 = vpack.c.b16 %v1309, %v1303
    %v1586 = vpack.c.b16 %v1310, %v1304
    %v1587 = vpack.c.b16 %v1311, %v1305
    %v1588 = vpack.c.b16 %v1312, %v1306
    %v1589 = vpack.c.b16 %v1313, %v1307
    %v1590 = vpack.c.b16 %v1314, %v1308
    %v1591 = vpack.c.b16 %v1321, %v1315
    %v1592 = vpack.c.b16 %v1322, %v1316
    %v1593 = vpack.c.b16 %v1323, %v1317
    %v1594 = vpack.c.b16 %v1324, %v1318
    %v1595 = vpack.c.b16 %v1325, %v1319
    %v1596 = vpack.c.b16 %v1326, %v1320
    %v1597 = vpack.c.b16 %v1333, %v1327
    %v1598 = vpack.c.b16 %v1334, %v1328
    %v1599 = vpack.c.b16 %v1335, %v1329
    %v1600 = vpack.c.b16 %v1336, %v1330
    %v1601 = vpack.c.b16 %v1337, %v1331
    %v1602 = vpack.c.b16 %v1338, %v1332
    %v1603 = vpack.c.b16 %v1345, %v1339
    %v1604 = vpack.c.b16 %v1346, %v1340
    %v1605 = vpack.c.b16 %v1347, %v1341
    %v1606 = vpack.c.b16 %v1348, %v1342
    %v1607 = vpack.c.b16 %v1349, %v1343
    %v1608 = vpack.c.b16 %v1350, %v1344
    %v1609 = vpack.c.b16 %v1357, %v1351
    %v1610 = vpack.c.b16 %v1358, %v1352
    %v1611 = vpack.c.b16 %v1359, %v1353
    %v1612 = vpack.c.b16 %v1360, %v1354
    %v1613 = vpack.c.b16 %v1361, %v1355
    %v1614 = vpack.c.b16 %v1362, %v1356
    %v1615 = vpack.c.b16 %v1369, %v1363
    %v1616 = vpack.c.b16 %v1370, %v1364
    %v1617 = vpack.c.b16 %v1371, %v1365
    %v1618 = vpack.c.b16 %v1372, %v1366
    %v1619 = vpack.c.b16 %v1373, %v1367
    %v1620 = vpack.c.b16 %v1374, %v1368
    %v1621 = vpack.c.b16 %v1381, %v1375
    %v1622 = vpack.c.b16 %v1382, %v1376
    %v1623 = vpack.c.b16 %v1383, %v1377
    %v1624 = vpack.c.b16 %v1384, %v1378
    %v1625 = vpack.c.b16 %v1385, %v1379
    %v1626 = vpack.c.b16 %v1386, %v1380
    %v1627 = vpack.c.b16 %v1393, %v1387
    %v1628 = vpack.c.b16 %v1394, %v1388
    %v1629 = vpack.c.b16 %v1395, %v1389
    %v1630 = vpack.c.b16 %v1396, %v1390
    %v1631 = vpack.c.b16 %v1397, %v1391
    %v1632 = vpack.c.b16 %v1398, %v1392
    %v1633 = vpack.c.b16 %v1405, %v1399
    %v1634 = vpack.c.b16 %v1406, %v1400
    %v1635 = vpack.c.b16 %v1407, %v1401
    %v1636 = vpack.c.b16 %v1408, %v1402
    %v1637 = vpack.c.b16 %v1409, %v1403
    %v1638 = vpack.c.b16 %v1410, %v1404
    %v1639 = vpack.c.b16 %v1417, %v1411
    %v1640 = vpack.c.b16 %v1418, %v1412
    %v1641 = vpack.c.b16 %v1419, %v1413
    %v1642 = vpack.c.b16 %v1420, %v1414
    %v1643 = vpack.c.b16 %v1421, %v1415
    %v1644 = vpack.c.b16 %v1422, %v1416
    %v1645 = vpack.c.b16 %v1429, %v1423
    %v1646 = vpack.c.b16 %v1430, %v1424
    %v1647 = vpack.c.b16 %v1431, %v1425
    %v1648 = vpack.c.b16 %v1432, %v1426
    %v1649 = vpack.c.b16 %v1433, %v1427
    %v1650 = vpack.c.b16 %v1434, %v1428
    %v1651 = vpack.c.b16 %v1441, %v1435
    %v1652 = vpack.c.b16 %v1442, %v1436
    %v1653 = vpack.c.b16 %v1443, %v1437
    %v1654 = vpack.c.b16 %v1444, %v1438
    %v1655 = vpack.c.b16 %v1445, %v1439
    %v1656 = vpack.c.b16 %v1446, %v1440
    %v1657 = vpack.c.b16 %v1453, %v1447
    %v1658 = vpack.c.b16 %v1454, %v1448
    %v1659 = vpack.c.b16 %v1455, %v1449
    %v1660 = vpack.c.b16 %v1456, %v1450
    %v1661 = vpack.c.b16 %v1457, %v1451
    %v1662 = vpack.c.b16 %v1458, %v1452
    %v1663 = vpack.c.b16 %v1465, %v1459
    %v1664 = vpack.c.b16 %v1466, %v1460
    %v1665 = vpack.c.b16 %v1467, %v1461
    %v1666 = vpack.c.b16 %v1468, %v1462
    %v1667 = vpack.c.b16 %v1469, %v1463
    %v1668 = vpack.c.b16 %v1470, %v1464
    %v1669 = vpack.c.b16 %v1477, %v1471
    %v1670 = vpack.c.b16 %v1478, %v1472
    %v1671 = vpack.c.b16 %v1479, %v1473
    %v1672 = vpack.c.b16 %v1480, %v1474
    %v1673 = vpack.c.b16 %v1481, %v1475
    %v1674 = vpack.c.b16 %v1482, %v1476
    %v1675 = vpack.c.b16 %v1489, %v1483
    %v1676 = vpack.c.b16 %v1490, %v1484
    %v1677 = vpack.c.b16 %v1491, %v1485
    %v1678 = vpack.c.b16 %v1492, %v1486
    %v1679 = vpack.c.b16 %v1493, %v1487
    %v1680 = vpack.c.b16 %v1494, %v1488
    %v1681 = vpack.c.b16 %v1501, %v1495
    %v1682 = vpack.c.b16 %v1502, %v1496
    %v1683 = vpack.c.b16 %v1503, %v1497
    %v1684 = vpack.c.b16 %v1504, %v1498
    %v1685 = vpack.c.b16 %v1505, %v1499
    %v1686 = vpack.c.b16 %v1506, %v1500
    %v1687 = vpack.c.b16 %v1513, %v1507
    %v1688 = vpack.c.b16 %v1514, %v1508
    %v1689 = vpack.c.b16 %v1515, %v1509
    %v1690 = vpack.c.b16 %v1516, %v1510
    %v1691 = vpack.c.b16 %v1517, %v1511
    %v1692 = vpack.c.b16 %v1518, %v1512
    %v1693 = vpack.c.b16 %v1525, %v1519
    %v1694 = vpack.c.b16 %v1526, %v1520
    %v1695 = vpack.c.b16 %v1527, %v1521
    %v1696 = vpack.c.b16 %v1528, %v1522
    %v1697 = vpack.c.b16 %v1529, %v1523
    %v1698 = vpack.c.b16 %v1530, %v1524
    %v1699 = vpack.c.b16 %v1537, %v1531
    %v1700 = vpack.c.b16 %v1538, %v1532
    %v1701 = vpack.c.b16 %v1539, %v1533
    %v1702 = vpack.c.b16 %v1540, %v1534
    %v1703 = vpack.c.b16 %v1541, %v1535
    %v1704 = vpack.c.b16 %v1542, %v1536
    %v1705 = vpack.c.b16 %v1549, %v1543
    %v1706 = vpack.c.b16 %v1550, %v1544
    %v1707 = vpack.c.b16 %v1551, %v1545
    %v1708 = vpack.c.b16 %v1552, %v1546
    %v1709 = vpack.c.b16 %v1553, %v1547
    %v1710 = vpack.c.b16 %v1554, %v1548
    %v1711 = vpack.c.b16 %v1561, %v1555
    %v1712 = vpack.c.b16 %v1562, %v1556
    %v1713 = vpack.c.b16 %v1563, %v1557
    %v1714 = vpack.c.b16 %v1564, %v1558
    %v1715 = vpack.c.b16 %v1565, %v1559
    %v1716 = vpack.c.b16 %v1566, %v1560
    %v1717 = vpack.c.b16 %v1573, %v1567
    %v1718 = vpack.c.b16 %v1574, %v1568
    %v1719 = vpack.c.b16 %v1575, %v1569
    %v1720 = vpack.c.b16 %v1576, %v1570
    %v1721 = vpack.c.b16 %v1577, %v1571
    %v1722 = vpack.c.b16 %v1578, %v1572
    %1867 = vmatprep.subr.bf16.mxu0 %v1580
    %1868 = vmatpush1.bf16.msra.mxu0 %v1579
    %1869 = vmatprep.subr.bf16.mxu0 %v1586
    %1870 = vmatpush1.bf16.msra.mxu0 %v1585
    %1871 = vmatprep.subr.bf16.mxu0 %v1592
    %1872 = vmatpush1.bf16.msra.mxu0 %v1591
    %1873 = vmatprep.subr.bf16.mxu0 %v1598
    %1874 = vmatpush1.bf16.msra.mxu0 %v1597
    %1875 = vmatprep.subr.bf16.mxu0 %v1604
    %1876 = vmatpush1.bf16.msra.mxu0 %v1603
    %1877 = vmatprep.subr.bf16.mxu0 %v1610
    %1878 = vmatpush1.bf16.msra.mxu0 %v1609
    %1879 = vmatprep.subr.bf16.mxu0 %v1616
    %1880 = vmatpush1.bf16.msra.mxu0 %v1615
    %1881 = vmatprep.subr.bf16.mxu0 %v1622
    %1882 = vmatpush1.bf16.msra.mxu0 %v1621
    %1883 = vmatprep.subr.bf16.mxu0 %v1628
    %1884 = vmatpush1.bf16.msra.mxu0 %v1627
    %1885 = vmatprep.subr.bf16.mxu0 %v1634
    %1886 = vmatpush1.bf16.msra.mxu0 %v1633
    %1887 = vmatprep.subr.bf16.mxu0 %v1640
    %1888 = vmatpush1.bf16.msra.mxu0 %v1639
    %1889 = vmatprep.subr.bf16.mxu0 %v1646
    %1890 = vmatpush1.bf16.msra.mxu0 %v1645
    %1891 = vmatprep.subr.bf16.mxu0 %v1652
    %1892 = vmatpush1.bf16.msra.mxu0 %v1651
    %1893 = vmatprep.subr.bf16.mxu0 %v1658
    %1894 = vmatpush1.bf16.msra.mxu0 %v1657
    %1895 = vmatprep.subr.bf16.mxu0 %v1664
    %1896 = vmatpush1.bf16.msra.mxu0 %v1663
    %1897 = vmatprep.subr.bf16.mxu0 %v1670
    %1898 = vmatpush1.bf16.msra.mxu0 %v1669
    %1899 = vmatprep.mubr.bf16.mxu0 %v969
    %1900 = vmatmul.mubr.bf16.gmra.mrb[0].mxu0 %v968
    %v1901 = vpop.f32.mrb[0].mxu0
    %v1902 = vadd.f32 %v1120, %v1901
    %v1903 = vpop.f32.mrb[0].mxu0
    %v1904 = vadd.f32 %v1124, %v1903
    %v1905 = vpop.f32.mrb[0].mxu0
    %v1906 = vpop.f32.mrb[0].mxu0
    %1907 = vdwg.mxu0
    %1908 = vmatprep.subr.bf16.mxu0 %v1676
    %1909 = vmatpush1.bf16.msra.mxu0 %v1675
    %1910 = vmatprep.subr.bf16.mxu0 %v1682
    %1911 = vmatpush1.bf16.msra.mxu0 %v1681
    %1912 = vmatprep.subr.bf16.mxu0 %v1688
    %1913 = vmatpush1.bf16.msra.mxu0 %v1687
    %1914 = vmatprep.subr.bf16.mxu0 %v1694
    %1915 = vmatpush1.bf16.msra.mxu0 %v1693
    %1916 = vmatprep.subr.bf16.mxu0 %v1700
    %1917 = vmatpush1.bf16.msra.mxu0 %v1699
    %1918 = vmatprep.subr.bf16.mxu0 %v1706
    %1919 = vmatpush1.bf16.msra.mxu0 %v1705
    %1920 = vmatprep.subr.bf16.mxu0 %v1712
    %1921 = vmatpush1.bf16.msra.mxu0 %v1711
    %1922 = vmatprep.subr.bf16.mxu0 %v1718
    %1923 = vmatpush1.bf16.msra.mxu0 %v1717
    %1924 = vmatprep.subr.bf16.mxu0 0
    %1925 = vmatpush1.bf16.msra.mxu0 0
    %1926 = vmatprep.subr.bf16.mxu0 0
    %1927 = vmatpush1.bf16.msra.mxu0 0
    %1928 = vmatprep.subr.bf16.mxu0 0
    %1929 = vmatpush1.bf16.msra.mxu0 0
    %1930 = vmatprep.subr.bf16.mxu0 0
    %1931 = vmatpush1.bf16.msra.mxu0 0
    %1932 = vmatprep.subr.bf16.mxu0 0
    %1933 = vmatpush1.bf16.msra.mxu0 0
    %1934 = vmatprep.subr.bf16.mxu0 0
    %1935 = vmatpush1.bf16.msra.mxu0 0
    %1936 = vmatprep.subr.bf16.mxu0 0
    %1937 = vmatpush1.bf16.msra.mxu0 0
    %1938 = vmatprep.subr.bf16.mxu0 0
    %1939 = vmatpush1.bf16.msra.mxu0 0
    %1940 = vmatprep.mubr.bf16.mxu0 0
    %1941 = vmatmul.mubr.bf16.gmra.mrb[0].mxu0 %v970
    %v1942 = vpop.f32.mrb[0].mxu0
    %v1943 = vadd.f32 %v1902, %v1942
    %v1944 = vpop.f32.mrb[0].mxu0
    %v1945 = vadd.f32 %v1904, %v1944
    %v1946 = vpop.f32.mrb[0].mxu0
    %v1947 = vpop.f32.mrb[0].mxu0
    %1948 = vdwg.mxu0
    %1949 = vmatprep.subr.bf16.mxu0 %v1582
    %1950 = vmatpush1.bf16.msra.mxu0 %v1581
    %1951 = vmatprep.subr.bf16.mxu0 %v1588
    %1952 = vmatpush1.bf16.msra.mxu0 %v1587
    %1953 = vmatprep.subr.bf16.mxu0 %v1594
    %1954 = vmatpush1.bf16.msra.mxu0 %v1593
    %1955 = vmatprep.subr.bf16.mxu0 %v1600
    %1956 = vmatpush1.bf16.msra.mxu0 %v1599
    %1957 = vmatprep.subr.bf16.mxu0 %v1606
    %1958 = vmatpush1.bf16.msra.mxu0 %v1605
    %1959 = vmatprep.subr.bf16.mxu0 %v1612
    %1960 = vmatpush1.bf16.msra.mxu0 %v1611
    %1961 = vmatprep.subr.bf16.mxu0 %v1618
    %1962 = vmatpush1.bf16.msra.mxu0 %v1617
    %1963 = vmatprep.subr.bf16.mxu0 %v1624
    %1964 = vmatpush1.bf16.msra.mxu0 %v1623
    %1965 = vmatprep.subr.bf16.mxu0 %v1630
    %1966 = vmatpush1.bf16.msra.mxu0 %v1629
    %1967 = vmatprep.subr.bf16.mxu0 %v1636
    %1968 = vmatpush1.bf16.msra.mxu0 %v1635
    %1969 = vmatprep.subr.bf16.mxu0 %v1642
    %1970 = vmatpush1.bf16.msra.mxu0 %v1641
    %1971 = vmatprep.subr.bf16.mxu0 %v1648
    %1972 = vmatpush1.bf16.msra.mxu0 %v1647
    %1973 = vmatprep.subr.bf16.mxu0 %v1654
    %1974 = vmatpush1.bf16.msra.mxu0 %v1653
    %1975 = vmatprep.subr.bf16.mxu0 %v1660
    %1976 = vmatpush1.bf16.msra.mxu0 %v1659
    %1977 = vmatprep.subr.bf16.mxu0 %v1666
    %1978 = vmatpush1.bf16.msra.mxu0 %v1665
    %1979 = vmatprep.subr.bf16.mxu0 %v1672
    %1980 = vmatpush1.bf16.msra.mxu0 %v1671
    %1981 = vmatprep.mubr.bf16.mxu0 %v969
    %1982 = vmatmul.mubr.bf16.gmra.mrb[0].mxu0 %v968
    %v1983 = vpop.f32.mrb[0].mxu0
    %v1984 = vadd.f32 %v1128, %v1983
    %v1985 = vpop.f32.mrb[0].mxu0
    %v1986 = vadd.f32 %v1132, %v1985
    %v1987 = vpop.f32.mrb[0].mxu0
    %v1988 = vpop.f32.mrb[0].mxu0
    %1989 = vdwg.mxu0
    %1990 = vmatprep.subr.bf16.mxu0 %v1678
    %1991 = vmatpush1.bf16.msra.mxu0 %v1677
    %1992 = vmatprep.subr.bf16.mxu0 %v1684
    %1993 = vmatpush1.bf16.msra.mxu0 %v1683
    %1994 = vmatprep.subr.bf16.mxu0 %v1690
    %1995 = vmatpush1.bf16.msra.mxu0 %v1689
    %1996 = vmatprep.subr.bf16.mxu0 %v1696
    %1997 = vmatpush1.bf16.msra.mxu0 %v1695
    %1998 = vmatprep.subr.bf16.mxu0 %v1702
    %1999 = vmatpush1.bf16.msra.mxu0 %v1701
    %2000 = vmatprep.subr.bf16.mxu0 %v1708
    %2001 = vmatpush1.bf16.msra.mxu0 %v1707
    %2002 = vmatprep.subr.bf16.mxu0 %v1714
    %2003 = vmatpush1.bf16.msra.mxu0 %v1713
    %2004 = vmatprep.subr.bf16.mxu0 %v1720
    %2005 = vmatpush1.bf16.msra.mxu0 %v1719
    %2006 = vmatprep.subr.bf16.mxu0 0
    %2007 = vmatpush1.bf16.msra.mxu0 0
    %2008 = vmatprep.subr.bf16.mxu0 0
    %2009 = vmatpush1.bf16.msra.mxu0 0
    %2010 = vmatprep.subr.bf16.mxu0 0
    %2011 = vmatpush1.bf16.msra.mxu0 0
    %2012 = vmatprep.subr.bf16.mxu0 0
    %2013 = vmatpush1.bf16.msra.mxu0 0
    %2014 = vmatprep.subr.bf16.mxu0 0
    %2015 = vmatpush1.bf16.msra.mxu0 0
    %2016 = vmatprep.subr.bf16.mxu0 0
    %2017 = vmatpush1.bf16.msra.mxu0 0
    %2018 = vmatprep.subr.bf16.mxu0 0
    %2019 = vmatpush1.bf16.msra.mxu0 0
    %2020 = vmatprep.subr.bf16.mxu0 0
    %2021 = vmatpush1.bf16.msra.mxu0 0
    %2022 = vmatprep.mubr.bf16.mxu0 0
    %2023 = vmatmul.mubr.bf16.gmra.mrb[0].mxu0 %v970
    %v2024 = vpop.f32.mrb[0].mxu0
    %v2025 = vadd.f32 %v1984, %v2024
    %v2026 = vpop.f32.mrb[0].mxu0
    %v2027 = vadd.f32 %v1986, %v2026
    %v2028 = vpop.f32.mrb[0].mxu0
    %v2029 = vpop.f32.mrb[0].mxu0
    %2030 = vdwg.mxu0
    %2031 = vmatprep.subr.bf16.mxu0 %v1584
    %2032 = vmatpush1.bf16.msra.mxu0 %v1583
    %2033 = vmatprep.subr.bf16.mxu0 %v1590
    %2034 = vmatpush1.bf16.msra.mxu0 %v1589
    %2035 = vmatprep.subr.bf16.mxu0 %v1596
    %2036 = vmatpush1.bf16.msra.mxu0 %v1595
    %2037 = vmatprep.subr.bf16.mxu0 %v1602
    %2038 = vmatpush1.bf16.msra.mxu0 %v1601
    %2039 = vmatprep.subr.bf16.mxu0 %v1608
    %2040 = vmatpush1.bf16.msra.mxu0 %v1607
    %2041 = vmatprep.subr.bf16.mxu0 %v1614
    %2042 = vmatpush1.bf16.msra.mxu0 %v1613
    %2043 = vmatprep.subr.bf16.mxu0 %v1620
    %2044 = vmatpush1.bf16.msra.mxu0 %v1619
    %2045 = vmatprep.subr.bf16.mxu0 %v1626
    %2046 = vmatpush1.bf16.msra.mxu0 %v1625
    %2047 = vmatprep.subr.bf16.mxu0 %v1632
    %2048 = vmatpush1.bf16.msra.mxu0 %v1631
    %2049 = vmatprep.subr.bf16.mxu0 %v1638
    %2050 = vmatpush1.bf16.msra.mxu0 %v1637
    %2051 = vmatprep.subr.bf16.mxu0 %v1644
    %2052 = vmatpush1.bf16.msra.mxu0 %v1643
    %2053 = vmatprep.subr.bf16.mxu0 %v1650
    %2054 = vmatpush1.bf16.msra.mxu0 %v1649
    %2055 = vmatprep.subr.bf16.mxu0 %v1656
    %2056 = vmatpush1.bf16.msra.mxu0 %v1655
    %2057 = vmatprep.subr.bf16.mxu0 %v1662
    %2058 = vmatpush1.bf16.msra.mxu0 %v1661
    %2059 = vmatprep.subr.bf16.mxu0 %v1668
    %2060 = vmatpush1.bf16.msra.mxu0 %v1667
    %2061 = vmatprep.subr.bf16.mxu0 %v1674
    %2062 = vmatpush1.bf16.msra.mxu0 %v1673
    %2063 = vmatprep.mubr.bf16.mxu0 %v969
    %2064 = vmatmul.mubr.bf16.gmra.mrb[0].mxu0 %v968
    %v2065 = vpop.f32.mrb[0].mxu0
    %v2066 = vadd.f32 %v1136, %v2065
    %v2067 = vpop.f32.mrb[0].mxu0
    %v2068 = vadd.f32 %v1140, %v2067
    %v2069 = vpop.f32.mrb[0].mxu0
    %v2070 = vpop.f32.mrb[0].mxu0
    %2071 = vdwg.mxu0
    %2072 = vmatprep.subr.bf16.mxu0 %v1680
    %2073 = vmatpush1.bf16.msra.mxu0 %v1679
    %2074 = vmatprep.subr.bf16.mxu0 %v1686
    %2075 = vmatpush1.bf16.msra.mxu0 %v1685
    %2076 = vmatprep.subr.bf16.mxu0 %v1692
    %2077 = vmatpush1.bf16.msra.mxu0 %v1691
    %2078 = vmatprep.subr.bf16.mxu0 %v1698
    %2079 = vmatpush1.bf16.msra.mxu0 %v1697
    %2080 = vmatprep.subr.bf16.mxu0 %v1704
    %2081 = vmatpush1.bf16.msra.mxu0 %v1703
    %2082 = vmatprep.subr.bf16.mxu0 %v1710
    %2083 = vmatpush1.bf16.msra.mxu0 %v1709
    %2084 = vmatprep.subr.bf16.mxu0 %v1716
    %2085 = vmatpush1.bf16.msra.mxu0 %v1715
    %2086 = vmatprep.subr.bf16.mxu0 %v1722
    %2087 = vmatpush1.bf16.msra.mxu0 %v1721
    %2088 = vmatprep.subr.bf16.mxu0 0
    %2089 = vmatpush1.bf16.msra.mxu0 0
    %2090 = vmatprep.subr.bf16.mxu0 0
    %2091 = vmatpush1.bf16.msra.mxu0 0
    %2092 = vmatprep.subr.bf16.mxu0 0
    %2093 = vmatpush1.bf16.msra.mxu0 0
    %2094 = vmatprep.subr.bf16.mxu0 0
    %2095 = vmatpush1.bf16.msra.mxu0 0
    %2096 = vmatprep.subr.bf16.mxu0 0
    %2097 = vmatpush1.bf16.msra.mxu0 0
    %2098 = vmatprep.subr.bf16.mxu0 0
    %2099 = vmatpush1.bf16.msra.mxu0 0
    %2100 = vmatprep.subr.bf16.mxu0 0
    %2101 = vmatpush1.bf16.msra.mxu0 0
    %2102 = vmatprep.subr.bf16.mxu0 0
    %2103 = vmatpush1.bf16.msra.mxu0 0
    %2104 = vmatprep.mubr.bf16.mxu0 0
    %2105 = vmatmul.mubr.bf16.gmra.mrb[0].mxu0 %v970
    %v2106 = vpop.f32.mrb[0].mxu0
    %v2107 = vadd.f32 %v2066, %v2106
    %v2108 = vpop.f32.mrb[0].mxu0
    %v2109 = vadd.f32 %v2068, %v2108
    %v2110 = vpop.f32.mrb[0].mxu0
    %v2111 = vpop.f32.mrb[0].mxu0
    %2112 = vdwg.mxu0
    %v2113 = vld [vmem:[%s0] sm:$0xff]
    %v2114 = vld [vmem:[%s0 + $0x8] sm:$0xff]
    %v2115 = vld [vmem:[%s0 + $0x10] sm:$0xff]
    %v2116 = vadd.f32 %v2113, %v1943
    %v2117 = vadd.f32 %v2114, %v1945
    %v2118 = vadd.f32 %v2115, %v2025
    %v2119 = vld [vmem:[%s9] sm:$0x7]
    %v2120 = vld [vmem:[%s10] sm:$0x7]
    %v2121 = vadd.f32 %v2116, %v2117
    %v2122 = vadd.f32 %v2121, %v2118
    %2123 = vadd.xlane.f32.xlu0 %v2122
    %v2124 = vpop.xlane.xlu0 %2123
    %v2125 = vrcp.pop 384.0
    %v2126 = vmul.f32 %v2124, %v2125
    %v2127 = vsub.f32 %v2116, %v2126
    %v2128 = vsub.f32 %v2117, %v2126
    %v2129 = vsub.f32 %v2118, %v2126
    %v2130 = vmul.f32 %v2127, %v2127
    %v2131 = vmul.f32 %v2128, %v2128
    %v2132 = vmul.f32 %v2129, %v2129
    %v2133 = vadd.f32 %v2130, %v2131
    %v2134 = vadd.f32 %v2133, %v2132
    %2135 = vadd.xlane.f32.xlu0 %v2134
    %v2136 = vpop.xlane.xlu0 %2135
    %v2137 = vmul.f32 %v2136, %v2125
    %v2138 = vadd.f32 %v2137, 1e-05
    %v2139 = vrsqrt.pop %v2138
    %v2140 = vmul.f32 %v2127, %v2139
    %v2141 = vmul.f32 %v2128, %v2139
    %v2142 = vmul.f32 %v2129, %v2139
    %v2144 = vlaneseq
    %v2145 = vshrl.u32 %v2144, 7
    %v2146 = vsub.s32 0, %v2145
    %v2147 = vrot.slane %v2119, %v2146
    %v2148 = vlaneseq
    %v2149 = vshrl.u32 %v2148, 7
    %v2150 = vsub.s32 1, %v2149
    %v2151 = vrot.slane %v2119, %v2150
    %v2152 = vlaneseq
    %v2153 = vshrl.u32 %v2152, 7
    %v2154 = vsub.s32 2, %v2153
    %v2155 = vrot.slane %v2119, %v2154
    %v2159 = vmul.f32 %v2140, %v2147
    %v2160 = vmul.f32 %v2141, %v2151
    %v2161 = vmul.f32 %v2142, %v2155
    %v2163 = vlaneseq
    %v2164 = vshrl.u32 %v2163, 7
    %v2165 = vsub.s32 0, %v2164
    %v2166 = vrot.slane %v2120, %v2165
    %v2167 = vlaneseq
    %v2168 = vshrl.u32 %v2167, 7
    %v2169 = vsub.s32 1, %v2168
    %v2170 = vrot.slane %v2120, %v2169
    %v2171 = vlaneseq
    %v2172 = vshrl.u32 %v2171, 7
    %v2173 = vsub.s32 2, %v2172
    %v2174 = vrot.slane %v2120, %v2173
    %v2178 = vadd.f32 %v2159, %v2166
    %v2179 = vadd.f32 %v2160, %v2170
    %v2180 = vadd.f32 %v2161, %v2174
    %v2181 = vpack.c.bf16 %v2178, %v2178
    %v2182 = vpack.c.bf16 %v2179, %v2179
    %v2183 = vpack.c.bf16 %v2180, %v2180
    %v2184 = vld [vmem:[#allocation8] sm:$0xff]
    %v2185 = vld [vmem:[#allocation8 + $0x8] sm:$0xf]
    %v2186 = vld [vmem:[#allocation8 + $0xc] sm:$0xff]
    %v2187 = vld [vmem:[#allocation8 + $0x14] sm:$0xf]
    %v2188 = vld [vmem:[#allocation8 + $0x18] sm:$0xff]
    %v2189 = vld [vmem:[#allocation8 + $0x20] sm:$0xf]
    %v2190 = vld [vmem:[#allocation8 + $0x24] sm:$0xff]
    %v2191 = vld [vmem:[#allocation8 + $0x2c] sm:$0xf]
    %v2192 = vld [vmem:[#allocation8 + $0x30] sm:$0xff]
    %v2193 = vld [vmem:[#allocation8 + $0x38] sm:$0xf]
    %v2194 = vld [vmem:[#allocation8 + $0x3c] sm:$0xff]
    %v2195 = vld [vmem:[#allocation8 + $0x44] sm:$0xf]
    %v2196 = vld [vmem:[#allocation8 + $0x48] sm:$0xff]
    %v2197 = vld [vmem:[#allocation8 + $0x50] sm:$0xf]
    %v2198 = vld [vmem:[#allocation8 + $0x54] sm:$0xff]
    %v2199 = vld [vmem:[#allocation8 + $0x5c] sm:$0xf]
    %v2200 = vld [vmem:[#allocation8 + $0x60] sm:$0xff]
    %v2201 = vld [vmem:[#allocation8 + $0x68] sm:$0xf]
    %v2202 = vld [vmem:[#allocation8 + $0x6c] sm:$0xff]
    %v2203 = vld [vmem:[#allocation8 + $0x74] sm:$0xf]
    %v2204 = vld [vmem:[#allocation8 + $0x78] sm:$0xff]
    %v2205 = vld [vmem:[#allocation8 + $0x80] sm:$0xf]
    %v2206 = vld [vmem:[#allocation8 + $0x84] sm:$0xff]
    %v2207 = vld [vmem:[#allocation8 + $0x8c] sm:$0xf]
    %v2208 = vld [vmem:[#allocation8 + $0x90] sm:$0xff]
    %v2209 = vld [vmem:[#allocation8 + $0x98] sm:$0xf]
    %v2210 = vld [vmem:[#allocation8 + $0x9c] sm:$0xff]
    %v2211 = vld [vmem:[#allocation8 + $0xa4] sm:$0xf]
    %v2212 = vld [vmem:[#allocation8 + $0xa8] sm:$0xff]
    %v2213 = vld [vmem:[#allocation8 + $0xb0] sm:$0xf]
    %v2214 = vld [vmem:[#allocation8 + $0xb4] sm:$0xff]
    %v2215 = vld [vmem:[#allocation8 + $0xbc] sm:$0xf]
    %v2216 = vld [vmem:[#allocation8 + $0xc0] sm:$0xff]
    %v2217 = vld [vmem:[#allocation8 + $0xc8] sm:$0xf]
    %v2218 = vld [vmem:[#allocation8 + $0xcc] sm:$0xff]
    %v2219 = vld [vmem:[#allocation8 + $0xd4] sm:$0xf]
    %v2220 = vld [vmem:[#allocation8 + $0xd8] sm:$0xff]
    %v2221 = vld [vmem:[#allocation8 + $0xe0] sm:$0xf]
    %v2222 = vld [vmem:[#allocation8 + $0xe4] sm:$0xff]
    %v2223 = vld [vmem:[#allocation8 + $0xec] sm:$0xf]
    %v2224 = vld [vmem:[#allocation8 + $0xf0] sm:$0xff]
    %v2225 = vld [vmem:[#allocation8 + $0xf8] sm:$0xf]
    %v2226 = vld [vmem:[#allocation8 + $0xfc] sm:$0xff]
    %v2227 = vld [vmem:[#allocation8 + $0x104] sm:$0xf]
    %v2228 = vld [vmem:[#allocation8 + $0x108] sm:$0xff]
    %v2229 = vld [vmem:[#allocation8 + $0x110] sm:$0xf]
    %v2230 = vld [vmem:[#allocation8 + $0x114] sm:$0xff]
    %v2231 = vld [vmem:[#allocation8 + $0x11c] sm:$0xf]
    %v2232 = vld [vmem:[#allocation8 + $0x120] sm:$0xff]
    %v2233 = vld [vmem:[#allocation8 + $0x128] sm:$0xf]
    %v2234 = vld [vmem:[#allocation8 + $0x12c] sm:$0xff]
    %v2235 = vld [vmem:[#allocation8 + $0x134] sm:$0xf]
    %v2236 = vld [vmem:[#allocation8 + $0x138] sm:$0xff]
    %v2237 = vld [vmem:[#allocation8 + $0x140] sm:$0xf]
    %v2238 = vld [vmem:[#allocation8 + $0x144] sm:$0xff]
    %v2239 = vld [vmem:[#allocation8 + $0x14c] sm:$0xf]
    %v2240 = vld [vmem:[#allocation8 + $0x150] sm:$0xff]
    %v2241 = vld [vmem:[#allocation8 + $0x158] sm:$0xf]
    %v2242 = vld [vmem:[#allocation8 + $0x15c] sm:$0xff]
    %v2243 = vld [vmem:[#allocation8 + $0x164] sm:$0xf]
    %v2244 = vld [vmem:[#allocation8 + $0x168] sm:$0xff]
    %v2245 = vld [vmem:[#allocation8 + $0x170] sm:$0xf]
    %v2246 = vld [vmem:[#allocation8 + $0x174] sm:$0xff]
    %v2247 = vld [vmem:[#allocation8 + $0x17c] sm:$0xf]
    %v2248 = vld [vmem:[#allocation8 + $0x180] sm:$0xff]
    %v2249 = vld [vmem:[#allocation8 + $0x188] sm:$0xf]
    %v2250 = vld [vmem:[#allocation8 + $0x18c] sm:$0xff]
    %v2251 = vld [vmem:[#allocation8 + $0x194] sm:$0xf]
    %v2252 = vld [vmem:[#allocation8 + $0x198] sm:$0xff]
    %v2253 = vld [vmem:[#allocation8 + $0x1a0] sm:$0xf]
    %v2254 = vld [vmem:[#allocation8 + $0x1a4] sm:$0xff]
    %v2255 = vld [vmem:[#allocation8 + $0x1ac] sm:$0xf]
    %v2256 = vld [vmem:[#allocation8 + $0x1b0] sm:$0xff]
    %v2257 = vld [vmem:[#allocation8 + $0x1b8] sm:$0xf]
    %v2258 = vld [vmem:[#allocation8 + $0x1bc] sm:$0xff]
    %v2259 = vld [vmem:[#allocation8 + $0x1c4] sm:$0xf]
    %v2260 = vld [vmem:[#allocation8 + $0x1c8] sm:$0xff]
    %v2261 = vld [vmem:[#allocation8 + $0x1d0] sm:$0xf]
    %v2262 = vld [vmem:[#allocation8 + $0x1d4] sm:$0xff]
    %v2263 = vld [vmem:[#allocation8 + $0x1dc] sm:$0xf]
    %v2264 = vld [vmem:[#allocation8 + $0x1e0] sm:$0xff]
    %v2265 = vld [vmem:[#allocation8 + $0x1e8] sm:$0xf]
    %v2266 = vld [vmem:[#allocation8 + $0x1ec] sm:$0xff]
    %v2267 = vld [vmem:[#allocation8 + $0x1f4] sm:$0xf]
    %v2268 = vld [vmem:[#allocation8 + $0x1f8] sm:$0xff]
    %v2269 = vld [vmem:[#allocation8 + $0x200] sm:$0xf]
    %v2270 = vld [vmem:[#allocation8 + $0x204] sm:$0xff]
    %v2271 = vld [vmem:[#allocation8 + $0x20c] sm:$0xf]
    %v2272 = vld [vmem:[#allocation8 + $0x210] sm:$0xff]
    %v2273 = vld [vmem:[#allocation8 + $0x218] sm:$0xf]
    %v2274 = vld [vmem:[#allocation8 + $0x21c] sm:$0xff]
    %v2275 = vld [vmem:[#allocation8 + $0x224] sm:$0xf]
    %v2276 = vld [vmem:[#allocation8 + $0x228] sm:$0xff]
    %v2277 = vld [vmem:[#allocation8 + $0x230] sm:$0xf]
    %v2278 = vld [vmem:[#allocation8 + $0x234] sm:$0xff]
    %v2279 = vld [vmem:[#allocation8 + $0x23c] sm:$0xf]
    %v2280 = vld [vmem:[%s12] sm:$0x7]
    %v2282 = vlaneseq
    %v2283 = vshrl.u32 %v2282, 7
    %v2284 = vsub.s32 0, %v2283
    %v2285 = vrot.slane %v2280, %v2284
    %v2286 = vlaneseq
    %v2287 = vshrl.u32 %v2286, 7
    %v2288 = vsub.s32 1, %v2287
    %v2289 = vrot.slane %v2280, %v2288
    %v2290 = vlaneseq
    %v2291 = vshrl.u32 %v2290, 7
    %v2292 = vsub.s32 2, %v2291
    %v2293 = vrot.slane %v2280, %v2292
    %v2393 = vunpack.c.l.b16 %v2184
    %v2394 = vunpack.c.h.b16 %v2184
    %v2395 = vunpack.c.l.b16 %v2185
    %v2396 = vunpack.c.l.b16 %v2186
    %v2397 = vunpack.c.h.b16 %v2186
    %v2398 = vunpack.c.l.b16 %v2187
    %v2399 = vunpack.c.l.b16 %v2188
    %v2400 = vunpack.c.h.b16 %v2188
    %v2401 = vunpack.c.l.b16 %v2189
    %v2402 = vunpack.c.l.b16 %v2190
    %v2403 = vunpack.c.h.b16 %v2190
    %v2404 = vunpack.c.l.b16 %v2191
    %v2405 = vunpack.c.l.b16 %v2192
    %v2406 = vunpack.c.h.b16 %v2192
    %v2407 = vunpack.c.l.b16 %v2193
    %v2408 = vunpack.c.l.b16 %v2194
    %v2409 = vunpack.c.h.b16 %v2194
    %v2410 = vunpack.c.l.b16 %v2195
    %v2411 = vunpack.c.l.b16 %v2196
    %v2412 = vunpack.c.h.b16 %v2196
    %v2413 = vunpack.c.l.b16 %v2197
    %v2414 = vunpack.c.l.b16 %v2198
    %v2415 = vunpack.c.h.b16 %v2198
    %v2416 = vunpack.c.l.b16 %v2199
    %v2417 = vunpack.c.l.b16 %v2200
    %v2418 = vunpack.c.h.b16 %v2200
    %v2419 = vunpack.c.l.b16 %v2201
    %v2420 = vunpack.c.l.b16 %v2202
    %v2421 = vunpack.c.h.b16 %v2202
    %v2422 = vunpack.c.l.b16 %v2203
    %v2423 = vunpack.c.l.b16 %v2204
    %v2424 = vunpack.c.h.b16 %v2204
    %v2425 = vunpack.c.l.b16 %v2205
    %v2426 = vunpack.c.l.b16 %v2206
    %v2427 = vunpack.c.h.b16 %v2206
    %v2428 = vunpack.c.l.b16 %v2207
    %v2429 = vunpack.c.l.b16 %v2208
    %v2430 = vunpack.c.h.b16 %v2208
    %v2431 = vunpack.c.l.b16 %v2209
    %v2432 = vunpack.c.l.b16 %v2210
    %v2433 = vunpack.c.h.b16 %v2210
    %v2434 = vunpack.c.l.b16 %v2211
    %v2435 = vunpack.c.l.b16 %v2212
    %v2436 = vunpack.c.h.b16 %v2212
    %v2437 = vunpack.c.l.b16 %v2213
    %v2438 = vunpack.c.l.b16 %v2214
    %v2439 = vunpack.c.h.b16 %v2214
    %v2440 = vunpack.c.l.b16 %v2215
    %v2441 = vunpack.c.l.b16 %v2216
    %v2442 = vunpack.c.h.b16 %v2216
    %v2443 = vunpack.c.l.b16 %v2217
    %v2444 = vunpack.c.l.b16 %v2218
    %v2445 = vunpack.c.h.b16 %v2218
    %v2446 = vunpack.c.l.b16 %v2219
    %v2447 = vunpack.c.l.b16 %v2220
    %v2448 = vunpack.c.h.b16 %v2220
    %v2449 = vunpack.c.l.b16 %v2221
    %v2450 = vunpack.c.l.b16 %v2222
    %v2451 = vunpack.c.h.b16 %v2222
    %v2452 = vunpack.c.l.b16 %v2223
    %v2453 = vunpack.c.l.b16 %v2224
    %v2454 = vunpack.c.h.b16 %v2224
    %v2455 = vunpack.c.l.b16 %v2225
    %v2456 = vunpack.c.l.b16 %v2226
    %v2457 = vunpack.c.h.b16 %v2226
    %v2458 = vunpack.c.l.b16 %v2227
    %v2459 = vunpack.c.l.b16 %v2228
    %v2460 = vunpack.c.h.b16 %v2228
    %v2461 = vunpack.c.l.b16 %v2229
    %v2462 = vunpack.c.l.b16 %v2230
    %v2463 = vunpack.c.h.b16 %v2230
    %v2464 = vunpack.c.l.b16 %v2231
    %v2465 = vunpack.c.l.b16 %v2232
    %v2466 = vunpack.c.h.b16 %v2232
    %v2467 = vunpack.c.l.b16 %v2233
    %v2468 = vunpack.c.l.b16 %v2234
    %v2469 = vunpack.c.h.b16 %v2234
    %v2470 = vunpack.c.l.b16 %v2235
    %v2471 = vunpack.c.l.b16 %v2236
    %v2472 = vunpack.c.h.b16 %v2236
    %v2473 = vunpack.c.l.b16 %v2237
    %v2474 = vunpack.c.l.b16 %v2238
    %v2475 = vunpack.c.h.b16 %v2238
    %v2476 = vunpack.c.l.b16 %v2239
    %v2477 = vunpack.c.l.b16 %v2240
    %v2478 = vunpack.c.h.b16 %v2240
    %v2479 = vunpack.c.l.b16 %v2241
    %v2480 = vunpack.c.l.b16 %v2242
    %v2481 = vunpack.c.h.b16 %v2242
    %v2482 = vunpack.c.l.b16 %v2243
    %v2483 = vunpack.c.l.b16 %v2244
    %v2484 = vunpack.c.h.b16 %v2244
    %v2485 = vunpack.c.l.b16 %v2245
    %v2486 = vunpack.c.l.b16 %v2246
    %v2487 = vunpack.c.h.b16 %v2246
    %v2488 = vunpack.c.l.b16 %v2247
    %v2489 = vunpack.c.l.b16 %v2248
    %v2490 = vunpack.c.h.b16 %v2248
    %v2491 = vunpack.c.l.b16 %v2249
    %v2492 = vunpack.c.l.b16 %v2250
    %v2493 = vunpack.c.h.b16 %v2250
    %v2494 = vunpack.c.l.b16 %v2251
    %v2495 = vunpack.c.l.b16 %v2252
    %v2496 = vunpack.c.h.b16 %v2252
    %v2497 = vunpack.c.l.b16 %v2253
    %v2498 = vunpack.c.l.b16 %v2254
    %v2499 = vunpack.c.h.b16 %v2254
    %v2500 = vunpack.c.l.b16 %v2255
    %v2501 = vunpack.c.l.b16 %v2256
    %v2502 = vunpack.c.h.b16 %v2256
    %v2503 = vunpack.c.l.b16 %v2257
    %v2504 = vunpack.c.l.b16 %v2258
    %v2505 = vunpack.c.h.b16 %v2258
    %v2506 = vunpack.c.l.b16 %v2259
    %v2507 = vunpack.c.l.b16 %v2260
    %v2508 = vunpack.c.h.b16 %v2260
    %v2509 = vunpack.c.l.b16 %v2261
    %v2510 = vunpack.c.l.b16 %v2262
    %v2511 = vunpack.c.h.b16 %v2262
    %v2512 = vunpack.c.l.b16 %v2263
    %v2513 = vunpack.c.l.b16 %v2264
    %v2514 = vunpack.c.h.b16 %v2264
    %v2515 = vunpack.c.l.b16 %v2265
    %v2516 = vunpack.c.l.b16 %v2266
    %v2517 = vunpack.c.h.b16 %v2266
    %v2518 = vunpack.c.l.b16 %v2267
    %v2519 = vunpack.c.l.b16 %v2268
    %v2520 = vunpack.c.h.b16 %v2268
    %v2521 = vunpack.c.l.b16 %v2269
    %v2522 = vunpack.c.l.b16 %v2270
    %v2523 = vunpack.c.h.b16 %v2270
    %v2524 = vunpack.c.l.b16 %v2271
    %v2525 = vunpack.c.l.b16 %v2272
    %v2526 = vunpack.c.h.b16 %v2272
    %v2527 = vunpack.c.l.b16 %v2273
    %v2528 = vunpack.c.l.b16 %v2274
    %v2529 = vunpack.c.h.b16 %v2274
    %v2530 = vunpack.c.l.b16 %v2275
    %v2531 = vunpack.c.l.b16 %v2276
    %v2532 = vunpack.c.h.b16 %v2276
    %v2533 = vunpack.c.l.b16 %v2277
    %v2534 = vunpack.c.l.b16 %v2278
    %v2535 = vunpack.c.h.b16 %v2278
    %v2536 = vunpack.c.l.b16 %v2279
    %v2537 = vpack.c.b16 %v2396, %v2393
    %v2538 = vpack.c.b16 %v2397, %v2394
    %v2539 = vpack.c.b16 %v2398, %v2395
    %v2540 = vpack.c.b16 %v2402, %v2399
    %v2541 = vpack.c.b16 %v2403, %v2400
    %v2542 = vpack.c.b16 %v2404, %v2401
    %v2543 = vpack.c.b16 %v2408, %v2405
    %v2544 = vpack.c.b16 %v2409, %v2406
    %v2545 = vpack.c.b16 %v2410, %v2407
    %v2546 = vpack.c.b16 %v2414, %v2411
    %v2547 = vpack.c.b16 %v2415, %v2412
    %v2548 = vpack.c.b16 %v2416, %v2413
    %v2549 = vpack.c.b16 %v2420, %v2417
    %v2550 = vpack.c.b16 %v2421, %v2418
    %v2551 = vpack.c.b16 %v2422, %v2419
    %v2552 = vpack.c.b16 %v2426, %v2423
    %v2553 = vpack.c.b16 %v2427, %v2424
    %v2554 = vpack.c.b16 %v2428, %v2425
    %v2555 = vpack.c.b16 %v2432, %v2429
    %v2556 = vpack.c.b16 %v2433, %v2430
    %v2557 = vpack.c.b16 %v2434, %v2431
    %v2558 = vpack.c.b16 %v2438, %v2435
    %v2559 = vpack.c.b16 %v2439, %v2436
    %v2560 = vpack.c.b16 %v2440, %v2437
    %v2561 = vpack.c.b16 %v2444, %v2441
    %v2562 = vpack.c.b16 %v2445, %v2442
    %v2563 = vpack.c.b16 %v2446, %v2443
    %v2564 = vpack.c.b16 %v2450, %v2447
    %v2565 = vpack.c.b16 %v2451, %v2448
    %v2566 = vpack.c.b16 %v2452, %v2449
    %v2567 = vpack.c.b16 %v2456, %v2453
    %v2568 = vpack.c.b16 %v2457, %v2454
    %v2569 = vpack.c.b16 %v2458, %v2455
    %v2570 = vpack.c.b16 %v2462, %v2459
    %v2571 = vpack.c.b16 %v2463, %v2460
    %v2572 = vpack.c.b16 %v2464, %v2461
    %v2573 = vpack.c.b16 %v2468, %v2465
    %v2574 = vpack.c.b16 %v2469, %v2466
    %v2575 = vpack.c.b16 %v2470, %v2467
    %v2576 = vpack.c.b16 %v2474, %v2471
    %v2577 = vpack.c.b16 %v2475, %v2472
    %v2578 = vpack.c.b16 %v2476, %v2473
    %v2579 = vpack.c.b16 %v2480, %v2477
    %v2580 = vpack.c.b16 %v2481, %v2478
    %v2581 = vpack.c.b16 %v2482, %v2479
    %v2582 = vpack.c.b16 %v2486, %v2483
    %v2583 = vpack.c.b16 %v2487, %v2484
    %v2584 = vpack.c.b16 %v2488, %v2485
    %v2585 = vpack.c.b16 %v2492, %v2489
    %v2586 = vpack.c.b16 %v2493, %v2490
    %v2587 = vpack.c.b16 %v2494, %v2491
    %v2588 = vpack.c.b16 %v2498, %v2495
    %v2589 = vpack.c.b16 %v2499, %v2496
    %v2590 = vpack.c.b16 %v2500, %v2497
    %v2591 = vpack.c.b16 %v2504, %v2501
    %v2592 = vpack.c.b16 %v2505, %v2502
    %v2593 = vpack.c.b16 %v2506, %v2503
    %v2594 = vpack.c.b16 %v2510, %v2507
    %v2595 = vpack.c.b16 %v2511, %v2508
    %v2596 = vpack.c.b16 %v2512, %v2509
    %v2597 = vpack.c.b16 %v2516, %v2513
    %v2598 = vpack.c.b16 %v2517, %v2514
    %v2599 = vpack.c.b16 %v2518, %v2515
    %v2600 = vpack.c.b16 %v2522, %v2519
    %v2601 = vpack.c.b16 %v2523, %v2520
    %v2602 = vpack.c.b16 %v2524, %v2521
    %v2603 = vpack.c.b16 %v2528, %v2525
    %v2604 = vpack.c.b16 %v2529, %v2526
    %v2605 = vpack.c.b16 %v2530, %v2527
    %v2606 = vpack.c.b16 %v2534, %v2531
    %v2607 = vpack.c.b16 %v2535, %v2532
    %v2608 = vpack.c.b16 %v2536, %v2533
    %2681 = vmatprep.subr.bf16.mxu0 %v2538
    %2682 = vmatpush1.bf16.msra.mxu0 %v2537
    %2683 = vmatprep.subr.bf16.mxu0 %v2541
    %2684 = vmatpush1.bf16.msra.mxu0 %v2540
    %2685 = vmatprep.subr.bf16.mxu0 %v2544
    %2686 = vmatpush1.bf16.msra.mxu0 %v2543
    %2687 = vmatprep.subr.bf16.mxu0 %v2547
    %2688 = vmatpush1.bf16.msra.mxu0 %v2546
    %2689 = vmatprep.subr.bf16.mxu0 %v2550
    %2690 = vmatpush1.bf16.msra.mxu0 %v2549
    %2691 = vmatprep.subr.bf16.mxu0 %v2553
    %2692 = vmatpush1.bf16.msra.mxu0 %v2552
    %2693 = vmatprep.subr.bf16.mxu0 %v2556
    %2694 = vmatpush1.bf16.msra.mxu0 %v2555
    %2695 = vmatprep.subr.bf16.mxu0 %v2559
    %2696 = vmatpush1.bf16.msra.mxu0 %v2558
    %2697 = vmatprep.subr.bf16.mxu0 %v2562
    %2698 = vmatpush1.bf16.msra.mxu0 %v2561
    %2699 = vmatprep.subr.bf16.mxu0 %v2565
    %2700 = vmatpush1.bf16.msra.mxu0 %v2564
    %2701 = vmatprep.subr.bf16.mxu0 %v2568
    %2702 = vmatpush1.bf16.msra.mxu0 %v2567
    %2703 = vmatprep.subr.bf16.mxu0 %v2571
    %2704 = vmatpush1.bf16.msra.mxu0 %v2570
    %2705 = vmatprep.subr.bf16.mxu0 %v2574
    %2706 = vmatpush1.bf16.msra.mxu0 %v2573
    %2707 = vmatprep.subr.bf16.mxu0 %v2577
    %2708 = vmatpush1.bf16.msra.mxu0 %v2576
    %2709 = vmatprep.subr.bf16.mxu0 %v2580
    %2710 = vmatpush1.bf16.msra.mxu0 %v2579
    %2711 = vmatprep.subr.bf16.mxu0 %v2583
    %2712 = vmatpush1.bf16.msra.mxu0 %v2582
    %2713 = vmatprep.mubr.bf16.mxu0 %v2182
    %2714 = vmatmul.mubr.bf16.gmra.mrb[0].mxu0 %v2181
    %v2715 = vpop.f32.mrb[0].mxu0
    %v2716 = vadd.f32 %v2285, %v2715
    %v2717 = vpop.f32.mrb[0].mxu0
    %v2718 = vadd.f32 %v2289, %v2717
    %v2719 = vpop.f32.mrb[0].mxu0
    %v2720 = vpop.f32.mrb[0].mxu0
    %2721 = vdwg.mxu0
    %2722 = vmatprep.subr.bf16.mxu0 %v2586
    %2723 = vmatpush1.bf16.msra.mxu0 %v2585
    %2724 = vmatprep.subr.bf16.mxu0 %v2589
    %2725 = vmatpush1.bf16.msra.mxu0 %v2588
    %2726 = vmatprep.subr.bf16.mxu0 %v2592
    %2727 = vmatpush1.bf16.msra.mxu0 %v2591
    %2728 = vmatprep.subr.bf16.mxu0 %v2595
    %2729 = vmatpush1.bf16.msra.mxu0 %v2594
    %2730 = vmatprep.subr.bf16.mxu0 %v2598
    %2731 = vmatpush1.bf16.msra.mxu0 %v2597
    %2732 = vmatprep.subr.bf16.mxu0 %v2601
    %2733 = vmatpush1.bf16.msra.mxu0 %v2600
    %2734 = vmatprep.subr.bf16.mxu0 %v2604
    %2735 = vmatpush1.bf16.msra.mxu0 %v2603
    %2736 = vmatprep.subr.bf16.mxu0 %v2607
    %2737 = vmatpush1.bf16.msra.mxu0 %v2606
    %2738 = vmatprep.subr.bf16.mxu0 0
    %2739 = vmatpush1.bf16.msra.mxu0 0
    %2740 = vmatprep.subr.bf16.mxu0 0
    %2741 = vmatpush1.bf16.msra.mxu0 0
    %2742 = vmatprep.subr.bf16.mxu0 0
    %2743 = vmatpush1.bf16.msra.mxu0 0
    %2744 = vmatprep.subr.bf16.mxu0 0
    %2745 = vmatpush1.bf16.msra.mxu0 0
    %2746 = vmatprep.subr.bf16.mxu0 0
    %2747 = vmatpush1.bf16.msra.mxu0 0
    %2748 = vmatprep.subr.bf16.mxu0 0
    %2749 = vmatpush1.bf16.msra.mxu0 0
    %2750 = vmatprep.subr.bf16.mxu0 0
    %2751 = vmatpush1.bf16.msra.mxu0 0
    %2752 = vmatprep.subr.bf16.mxu0 0
    %2753 = vmatpush1.bf16.msra.mxu0 0
    %2754 = vmatprep.mubr.bf16.mxu0 0
    %2755 = vmatmul.mubr.bf16.gmra.mrb[0].mxu0 %v2183
    %v2756 = vpop.f32.mrb[0].mxu0
    %v2757 = vadd.f32 %v2716, %v2756
    %v2758 = vpop.f32.mrb[0].mxu0
    %v2759 = vadd.f32 %v2718, %v2758
    %v2760 = vpop.f32.mrb[0].mxu0
    %v2761 = vpop.f32.mrb[0].mxu0
    %2762 = vdwg.mxu0
    %2763 = vmatprep.subr.bf16.mxu0 0
    %2764 = vmatpush1.bf16.msra.mxu0 %v2539
    %2765 = vmatprep.subr.bf16.mxu0 0
    %2766 = vmatpush1.bf16.msra.mxu0 %v2542
    %2767 = vmatprep.subr.bf16.mxu0 0
    %2768 = vmatpush1.bf16.msra.mxu0 %v2545
    %2769 = vmatprep.subr.bf16.mxu0 0
    %2770 = vmatpush1.bf16.msra.mxu0 %v2548
    %2771 = vmatprep.subr.bf16.mxu0 0
    %2772 = vmatpush1.bf16.msra.mxu0 %v2551
    %2773 = vmatprep.subr.bf16.mxu0 0
    %2774 = vmatpush1.bf16.msra.mxu0 %v2554
    %2775 = vmatprep.subr.bf16.mxu0 0
    %2776 = vmatpush1.bf16.msra.mxu0 %v2557
    %2777 = vmatprep.subr.bf16.mxu0 0
    %2778 = vmatpush1.bf16.msra.mxu0 %v2560
    %2779 = vmatprep.subr.bf16.mxu0 0
    %2780 = vmatpush1.bf16.msra.mxu0 %v2563
    %2781 = vmatprep.subr.bf16.mxu0 0
    %2782 = vmatpush1.bf16.msra.mxu0 %v2566
    %2783 = vmatprep.subr.bf16.mxu0 0
    %2784 = vmatpush1.bf16.msra.mxu0 %v2569
    %2785 = vmatprep.subr.bf16.mxu0 0
    %2786 = vmatpush1.bf16.msra.mxu0 %v2572
    %2787 = vmatprep.subr.bf16.mxu0 0
    %2788 = vmatpush1.bf16.msra.mxu0 %v2575
    %2789 = vmatprep.subr.bf16.mxu0 0
    %2790 = vmatpush1.bf16.msra.mxu0 %v2578
    %2791 = vmatprep.subr.bf16.mxu0 0
    %2792 = vmatpush1.bf16.msra.mxu0 %v2581
    %2793 = vmatprep.subr.bf16.mxu0 0
    %2794 = vmatpush1.bf16.msra.mxu0 %v2584
    %2795 = vmatprep.mubr.bf16.mxu0 %v2182
    %2796 = vmatmul.mubr.bf16.gmra.mrb[0].mxu0 %v2181
    %v2797 = vpop.f32.mrb[0].mxu0
    %v2798 = vadd.f32 %v2293, %v2797
    %v2799 = vpop.f32.mrb[0].mxu0
    %v2800 = vpop.f32.mrb[0].mxu0
    %v2801 = vpop.f32.mrb[0].mxu0
    %2802 = vdwg.mxu0
    %2803 = vmatprep.subr.bf16.mxu0 0
    %2804 = vmatpush1.bf16.msra.mxu0 %v2587
    %2805 = vmatprep.subr.bf16.mxu0 0
    %2806 = vmatpush1.bf16.msra.mxu0 %v2590
    %2807 = vmatprep.subr.bf16.mxu0 0
    %2808 = vmatpush1.bf16.msra.mxu0 %v2593
    %2809 = vmatprep.subr.bf16.mxu0 0
    %2810 = vmatpush1.bf16.msra.mxu0 %v2596
    %2811 = vmatprep.subr.bf16.mxu0 0
    %2812 = vmatpush1.bf16.msra.mxu0 %v2599
    %2813 = vmatprep.subr.bf16.mxu0 0
    %2814 = vmatpush1.bf16.msra.mxu0 %v2602
    %2815 = vmatprep.subr.bf16.mxu0 0
    %2816 = vmatpush1.bf16.msra.mxu0 %v2605
    %2817 = vmatprep.subr.bf16.mxu0 0
    %2818 = vmatpush1.bf16.msra.mxu0 %v2608
    %2819 = vmatprep.subr.bf16.mxu0 0
    %2820 = vmatpush1.bf16.msra.mxu0 0
    %2821 = vmatprep.subr.bf16.mxu0 0
    %2822 = vmatpush1.bf16.msra.mxu0 0
    %2823 = vmatprep.subr.bf16.mxu0 0
    %2824 = vmatpush1.bf16.msra.mxu0 0
    %2825 = vmatprep.subr.bf16.mxu0 0
    %2826 = vmatpush1.bf16.msra.mxu0 0
    %2827 = vmatprep.subr.bf16.mxu0 0
    %2828 = vmatpush1.bf16.msra.mxu0 0
    %2829 = vmatprep.subr.bf16.mxu0 0
    %2830 = vmatpush1.bf16.msra.mxu0 0
    %2831 = vmatprep.subr.bf16.mxu0 0
    %2832 = vmatpush1.bf16.msra.mxu0 0
    %2833 = vmatprep.subr.bf16.mxu0 0
    %2834 = vmatpush1.bf16.msra.mxu0 0
    %2835 = vmatprep.mubr.bf16.mxu0 0
    %2836 = vmatmul.mubr.bf16.gmra.mrb[0].mxu0 %v2183
    %v2837 = vpop.f32.mrb[0].mxu0
    %v2838 = vadd.f32 %v2798, %v2837
    %v2839 = vpop.f32.mrb[0].mxu0
    %v2840 = vpop.f32.mrb[0].mxu0
    %v2841 = vpop.f32.mrb[0].mxu0
    %2842 = vdwg.mxu0
    %v2843 = vmax.f32 %v2757, 0.0
    %v2844 = vmax.f32 %v2759, 0.0
    %v2845 = vmax.f32 %v2838, 0.0
    %v2846 = vpack.c.bf16 %v2843, %v2843
    %v2847 = vpack.c.bf16 %v2844, %v2844
    %v2848 = vpack.c.bf16 %v2845, %v2845
    %v2849 = vld [vmem:[#allocation9] sm:$0xff]
    %v2850 = vld [vmem:[#allocation9 + $0x8] sm:$0xf]
    %v2851 = vld [vmem:[#allocation9 + $0xc] sm:$0xff]
    %v2852 = vld [vmem:[#allocation9 + $0x14] sm:$0xf]
    %v2853 = vld [vmem:[#allocation9 + $0x18] sm:$0xff]
    %v2854 = vld [vmem:[#allocation9 + $0x20] sm:$0xf]
    %v2855 = vld [vmem:[#allocation9 + $0x24] sm:$0xff]
    %v2856 = vld [vmem:[#allocation9 + $0x2c] sm:$0xf]
    %v2857 = vld [vmem:[#allocation9 + $0x30] sm:$0xff]
    %v2858 = vld [vmem:[#allocation9 + $0x38] sm:$0xf]
    %v2859 = vld [vmem:[#allocation9 + $0x3c] sm:$0xff]
    %v2860 = vld [vmem:[#allocation9 + $0x44] sm:$0xf]
    %v2861 = vld [vmem:[#allocation9 + $0x48] sm:$0xff]
    %v2862 = vld [vmem:[#allocation9 + $0x50] sm:$0xf]
    %v2863 = vld [vmem:[#allocation9 + $0x54] sm:$0xff]
    %v2864 = vld [vmem:[#allocation9 + $0x5c] sm:$0xf]
    %v2865 = vld [vmem:[#allocation9 + $0x60] sm:$0xff]
    %v2866 = vld [vmem:[#allocation9 + $0x68] sm:$0xf]
    %v2867 = vld [vmem:[#allocation9 + $0x6c] sm:$0xff]
    %v2868 = vld [vmem:[#allocation9 + $0x74] sm:$0xf]
    %v2869 = vld [vmem:[#allocation9 + $0x78] sm:$0xff]
    %v2870 = vld [vmem:[#allocation9 + $0x80] sm:$0xf]
    %v2871 = vld [vmem:[#allocation9 + $0x84] sm:$0xff]
    %v2872 = vld [vmem:[#allocation9 + $0x8c] sm:$0xf]
    %v2873 = vld [vmem:[#allocation9 + $0x90] sm:$0xff]
    %v2874 = vld [vmem:[#allocation9 + $0x98] sm:$0xf]
    %v2875 = vld [vmem:[#allocation9 + $0x9c] sm:$0xff]
    %v2876 = vld [vmem:[#allocation9 + $0xa4] sm:$0xf]
    %v2877 = vld [vmem:[#allocation9 + $0xa8] sm:$0xff]
    %v2878 = vld [vmem:[#allocation9 + $0xb0] sm:$0xf]
    %v2879 = vld [vmem:[#allocation9 + $0xb4] sm:$0xff]
    %v2880 = vld [vmem:[#allocation9 + $0xbc] sm:$0xf]
    %v2881 = vld [vmem:[#allocation9 + $0xc0] sm:$0xff]
    %v2882 = vld [vmem:[#allocation9 + $0xc8] sm:$0xf]
    %v2883 = vld [vmem:[#allocation9 + $0xcc] sm:$0xff]
    %v2884 = vld [vmem:[#allocation9 + $0xd4] sm:$0xf]
    %v2885 = vld [vmem:[#allocation9 + $0xd8] sm:$0xff]
    %v2886 = vld [vmem:[#allocation9 + $0xe0] sm:$0xf]
    %v2887 = vld [vmem:[#allocation9 + $0xe4] sm:$0xff]
    %v2888 = vld [vmem:[#allocation9 + $0xec] sm:$0xf]
    %v2889 = vld [vmem:[#allocation9 + $0xf0] sm:$0xff]
    %v2890 = vld [vmem:[#allocation9 + $0xf8] sm:$0xf]
    %v2891 = vld [vmem:[#allocation9 + $0xfc] sm:$0xff]
    %v2892 = vld [vmem:[#allocation9 + $0x104] sm:$0xf]
    %v2893 = vld [vmem:[#allocation9 + $0x108] sm:$0xff]
    %v2894 = vld [vmem:[#allocation9 + $0x110] sm:$0xf]
    %v2895 = vld [vmem:[#allocation9 + $0x114] sm:$0xff]
    %v2896 = vld [vmem:[#allocation9 + $0x11c] sm:$0xf]
    %v2897 = vld [vmem:[#allocation9 + $0x120] sm:$0xff]
    %v2898 = vld [vmem:[#allocation9 + $0x128] sm:$0xf]
    %v2899 = vld [vmem:[#allocation9 + $0x12c] sm:$0xff]
    %v2900 = vld [vmem:[#allocation9 + $0x134] sm:$0xf]
    %v2901 = vld [vmem:[#allocation9 + $0x138] sm:$0xff]
    %v2902 = vld [vmem:[#allocation9 + $0x140] sm:$0xf]
    %v2903 = vld [vmem:[#allocation9 + $0x144] sm:$0xff]
    %v2904 = vld [vmem:[#allocation9 + $0x14c] sm:$0xf]
    %v2905 = vld [vmem:[#allocation9 + $0x150] sm:$0xff]
    %v2906 = vld [vmem:[#allocation9 + $0x158] sm:$0xf]
    %v2907 = vld [vmem:[#allocation9 + $0x15c] sm:$0xff]
    %v2908 = vld [vmem:[#allocation9 + $0x164] sm:$0xf]
    %v2909 = vld [vmem:[#allocation9 + $0x168] sm:$0xff]
    %v2910 = vld [vmem:[#allocation9 + $0x170] sm:$0xf]
    %v2911 = vld [vmem:[#allocation9 + $0x174] sm:$0xff]
    %v2912 = vld [vmem:[#allocation9 + $0x17c] sm:$0xf]
    %v2913 = vld [vmem:[#allocation9 + $0x180] sm:$0xff]
    %v2914 = vld [vmem:[#allocation9 + $0x188] sm:$0xf]
    %v2915 = vld [vmem:[#allocation9 + $0x18c] sm:$0xff]
    %v2916 = vld [vmem:[#allocation9 + $0x194] sm:$0xf]
    %v2917 = vld [vmem:[#allocation9 + $0x198] sm:$0xff]
    %v2918 = vld [vmem:[#allocation9 + $0x1a0] sm:$0xf]
    %v2919 = vld [vmem:[#allocation9 + $0x1a4] sm:$0xff]
    %v2920 = vld [vmem:[#allocation9 + $0x1ac] sm:$0xf]
    %v2921 = vld [vmem:[#allocation9 + $0x1b0] sm:$0xff]
    %v2922 = vld [vmem:[#allocation9 + $0x1b8] sm:$0xf]
    %v2923 = vld [vmem:[#allocation9 + $0x1bc] sm:$0xff]
    %v2924 = vld [vmem:[#allocation9 + $0x1c4] sm:$0xf]
    %v2925 = vld [vmem:[#allocation9 + $0x1c8] sm:$0xff]
    %v2926 = vld [vmem:[#allocation9 + $0x1d0] sm:$0xf]
    %v2927 = vld [vmem:[#allocation9 + $0x1d4] sm:$0xff]
    %v2928 = vld [vmem:[#allocation9 + $0x1dc] sm:$0xf]
    %v2929 = vld [vmem:[#allocation9 + $0x1e0] sm:$0xff]
    %v2930 = vld [vmem:[#allocation9 + $0x1e8] sm:$0xf]
    %v2931 = vld [vmem:[#allocation9 + $0x1ec] sm:$0xff]
    %v2932 = vld [vmem:[#allocation9 + $0x1f4] sm:$0xf]
    %v2933 = vld [vmem:[#allocation9 + $0x1f8] sm:$0xff]
    %v2934 = vld [vmem:[#allocation9 + $0x200] sm:$0xf]
    %v2935 = vld [vmem:[#allocation9 + $0x204] sm:$0xff]
    %v2936 = vld [vmem:[#allocation9 + $0x20c] sm:$0xf]
    %v2937 = vld [vmem:[#allocation9 + $0x210] sm:$0xff]
    %v2938 = vld [vmem:[#allocation9 + $0x218] sm:$0xf]
    %v2939 = vld [vmem:[#allocation9 + $0x21c] sm:$0xff]
    %v2940 = vld [vmem:[#allocation9 + $0x224] sm:$0xf]
    %v2941 = vld [vmem:[#allocation9 + $0x228] sm:$0xff]
    %v2942 = vld [vmem:[#allocation9 + $0x230] sm:$0xf]
    %v2943 = vld [vmem:[#allocation9 + $0x234] sm:$0xff]
    %v2944 = vld [vmem:[#allocation9 + $0x23c] sm:$0xf]
    %v2945 = vld [vmem:[%s14] sm:$0x7]
    %v2947 = vlaneseq
    %v2948 = vshrl.u32 %v2947, 7
    %v2949 = vsub.s32 0, %v2948
    %v2950 = vrot.slane %v2945, %v2949
    %v2951 = vlaneseq
    %v2952 = vshrl.u32 %v2951, 7
    %v2953 = vsub.s32 1, %v2952
    %v2954 = vrot.slane %v2945, %v2953
    %v2955 = vlaneseq
    %v2956 = vshrl.u32 %v2955, 7
    %v2957 = vsub.s32 2, %v2956
    %v2958 = vrot.slane %v2945, %v2957
    %v3058 = vunpack.c.l.b16 %v2849
    %v3059 = vunpack.c.h.b16 %v2849
    %v3060 = vunpack.c.l.b16 %v2850
    %v3061 = vunpack.c.l.b16 %v2851
    %v3062 = vunpack.c.h.b16 %v2851
    %v3063 = vunpack.c.l.b16 %v2852
    %v3064 = vunpack.c.l.b16 %v2853
    %v3065 = vunpack.c.h.b16 %v2853
    %v3066 = vunpack.c.l.b16 %v2854
    %v3067 = vunpack.c.l.b16 %v2855
    %v3068 = vunpack.c.h.b16 %v2855
    %v3069 = vunpack.c.l.b16 %v2856
    %v3070 = vunpack.c.l.b16 %v2857
    %v3071 = vunpack.c.h.b16 %v2857
    %v3072 = vunpack.c.l.b16 %v2858
    %v3073 = vunpack.c.l.b16 %v2859
    %v3074 = vunpack.c.h.b16 %v2859
    %v3075 = vunpack.c.l.b16 %v2860
    %v3076 = vunpack.c.l.b16 %v2861
    %v3077 = vunpack.c.h.b16 %v2861
    %v3078 = vunpack.c.l.b16 %v2862
    %v3079 = vunpack.c.l.b16 %v2863
    %v3080 = vunpack.c.h.b16 %v2863
    %v3081 = vunpack.c.l.b16 %v2864
    %v3082 = vunpack.c.l.b16 %v2865
    %v3083 = vunpack.c.h.b16 %v2865
    %v3084 = vunpack.c.l.b16 %v2866
    %v3085 = vunpack.c.l.b16 %v2867
    %v3086 = vunpack.c.h.b16 %v2867
    %v3087 = vunpack.c.l.b16 %v2868
    %v3088 = vunpack.c.l.b16 %v2869
    %v3089 = vunpack.c.h.b16 %v2869
    %v3090 = vunpack.c.l.b16 %v2870
    %v3091 = vunpack.c.l.b16 %v2871
    %v3092 = vunpack.c.h.b16 %v2871
    %v3093 = vunpack.c.l.b16 %v2872
    %v3094 = vunpack.c.l.b16 %v2873
    %v3095 = vunpack.c.h.b16 %v2873
    %v3096 = vunpack.c.l.b16 %v2874
    %v3097 = vunpack.c.l.b16 %v2875
    %v3098 = vunpack.c.h.b16 %v2875
    %v3099 = vunpack.c.l.b16 %v2876
    %v3100 = vunpack.c.l.b16 %v2877
    %v3101 = vunpack.c.h.b16 %v2877
    %v3102 = vunpack.c.l.b16 %v2878
    %v3103 = vunpack.c.l.b16 %v2879
    %v3104 = vunpack.c.h.b16 %v2879
    %v3105 = vunpack.c.l.b16 %v2880
    %v3106 = vunpack.c.l.b16 %v2881
    %v3107 = vunpack.c.h.b16 %v2881
    %v3108 = vunpack.c.l.b16 %v2882
    %v3109 = vunpack.c.l.b16 %v2883
    %v3110 = vunpack.c.h.b16 %v2883
    %v3111 = vunpack.c.l.b16 %v2884
    %v3112 = vunpack.c.l.b16 %v2885
    %v3113 = vunpack.c.h.b16 %v2885
    %v3114 = vunpack.c.l.b16 %v2886
    %v3115 = vunpack.c.l.b16 %v2887
    %v3116 = vunpack.c.h.b16 %v2887
    %v3117 = vunpack.c.l.b16 %v2888
    %v3118 = vunpack.c.l.b16 %v2889
    %v3119 = vunpack.c.h.b16 %v2889
    %v3120 = vunpack.c.l.b16 %v2890
    %v3121 = vunpack.c.l.b16 %v2891
    %v3122 = vunpack.c.h.b16 %v2891
    %v3123 = vunpack.c.l.b16 %v2892
    %v3124 = vunpack.c.l.b16 %v2893
    %v3125 = vunpack.c.h.b16 %v2893
    %v3126 = vunpack.c.l.b16 %v2894
    %v3127 = vunpack.c.l.b16 %v2895
    %v3128 = vunpack.c.h.b16 %v2895
    %v3129 = vunpack.c.l.b16 %v2896
    %v3130 = vunpack.c.l.b16 %v2897
    %v3131 = vunpack.c.h.b16 %v2897
    %v3132 = vunpack.c.l.b16 %v2898
    %v3133 = vunpack.c.l.b16 %v2899
    %v3134 = vunpack.c.h.b16 %v2899
    %v3135 = vunpack.c.l.b16 %v2900
    %v3136 = vunpack.c.l.b16 %v2901
    %v3137 = vunpack.c.h.b16 %v2901
    %v3138 = vunpack.c.l.b16 %v2902
    %v3139 = vunpack.c.l.b16 %v2903
    %v3140 = vunpack.c.h.b16 %v2903
    %v3141 = vunpack.c.l.b16 %v2904
    %v3142 = vunpack.c.l.b16 %v2905
    %v3143 = vunpack.c.h.b16 %v2905
    %v3144 = vunpack.c.l.b16 %v2906
    %v3145 = vunpack.c.l.b16 %v2907
    %v3146 = vunpack.c.h.b16 %v2907
    %v3147 = vunpack.c.l.b16 %v2908
    %v3148 = vunpack.c.l.b16 %v2909
    %v3149 = vunpack.c.h.b16 %v2909
    %v3150 = vunpack.c.l.b16 %v2910
    %v3151 = vunpack.c.l.b16 %v2911
    %v3152 = vunpack.c.h.b16 %v2911
    %v3153 = vunpack.c.l.b16 %v2912
    %v3154 = vunpack.c.l.b16 %v2913
    %v3155 = vunpack.c.h.b16 %v2913
    %v3156 = vunpack.c.l.b16 %v2914
    %v3157 = vunpack.c.l.b16 %v2915
    %v3158 = vunpack.c.h.b16 %v2915
    %v3159 = vunpack.c.l.b16 %v2916
    %v3160 = vunpack.c.l.b16 %v2917
    %v3161 = vunpack.c.h.b16 %v2917
    %v3162 = vunpack.c.l.b16 %v2918
    %v3163 = vunpack.c.l.b16 %v2919
    %v3164 = vunpack.c.h.b16 %v2919
    %v3165 = vunpack.c.l.b16 %v2920
    %v3166 = vunpack.c.l.b16 %v2921
    %v3167 = vunpack.c.h.b16 %v2921
    %v3168 = vunpack.c.l.b16 %v2922
    %v3169 = vunpack.c.l.b16 %v2923
    %v3170 = vunpack.c.h.b16 %v2923
    %v3171 = vunpack.c.l.b16 %v2924
    %v3172 = vunpack.c.l.b16 %v2925
    %v3173 = vunpack.c.h.b16 %v2925
    %v3174 = vunpack.c.l.b16 %v2926
    %v3175 = vunpack.c.l.b16 %v2927
    %v3176 = vunpack.c.h.b16 %v2927
    %v3177 = vunpack.c.l.b16 %v2928
    %v3178 = vunpack.c.l.b16 %v2929
    %v3179 = vunpack.c.h.b16 %v2929
    %v3180 = vunpack.c.l.b16 %v2930
    %v3181 = vunpack.c.l.b16 %v2931
    %v3182 = vunpack.c.h.b16 %v2931
    %v3183 = vunpack.c.l.b16 %v2932
    %v3184 = vunpack.c.l.b16 %v2933
    %v3185 = vunpack.c.h.b16 %v2933
    %v3186 = vunpack.c.l.b16 %v2934
    %v3187 = vunpack.c.l.b16 %v2935
    %v3188 = vunpack.c.h.b16 %v2935
    %v3189 = vunpack.c.l.b16 %v2936
    %v3190 = vunpack.c.l.b16 %v2937
    %v3191 = vunpack.c.h.b16 %v2937
    %v3192 = vunpack.c.l.b16 %v2938
    %v3193 = vunpack.c.l.b16 %v2939
    %v3194 = vunpack.c.h.b16 %v2939
    %v3195 = vunpack.c.l.b16 %v2940
    %v3196 = vunpack.c.l.b16 %v2941
    %v3197 = vunpack.c.h.b16 %v2941
    %v3198 = vunpack.c.l.b16 %v2942
    %v3199 = vunpack.c.l.b16 %v2943
    %v3200 = vunpack.c.h.b16 %v2943
    %v3201 = vunpack.c.l.b16 %v2944
    %v3202 = vpack.c.b16 %v3061, %v3058
    %v3203 = vpack.c.b16 %v3062, %v3059
    %v3204 = vpack.c.b16 %v3063, %v3060
    %v3205 = vpack.c.b16 %v3067, %v3064
    %v3206 = vpack.c.b16 %v3068, %v3065
    %v3207 = vpack.c.b16 %v3069, %v3066
    %v3208 = vpack.c.b16 %v3073, %v3070
    %v3209 = vpack.c.b16 %v3074, %v3071
    %v3210 = vpack.c.b16 %v3075, %v3072
    %v3211 = vpack.c.b16 %v3079, %v3076
    %v3212 = vpack.c.b16 %v3080, %v3077
    %v3213 = vpack.c.b16 %v3081, %v3078
    %v3214 = vpack.c.b16 %v3085, %v3082
    %v3215 = vpack.c.b16 %v3086, %v3083
    %v3216 = vpack.c.b16 %v3087, %v3084
    %v3217 = vpack.c.b16 %v3091, %v3088
    %v3218 = vpack.c.b16 %v3092, %v3089
    %v3219 = vpack.c.b16 %v3093, %v3090
    %v3220 = vpack.c.b16 %v3097, %v3094
    %v3221 = vpack.c.b16 %v3098, %v3095
    %v3222 = vpack.c.b16 %v3099, %v3096
    %v3223 = vpack.c.b16 %v3103, %v3100
    %v3224 = vpack.c.b16 %v3104, %v3101
    %v3225 = vpack.c.b16 %v3105, %v3102
    %v3226 = vpack.c.b16 %v3109, %v3106
    %v3227 = vpack.c.b16 %v3110, %v3107
    %v3228 = vpack.c.b16 %v3111, %v3108
    %v3229 = vpack.c.b16 %v3115, %v3112
    %v3230 = vpack.c.b16 %v3116, %v3113
    %v3231 = vpack.c.b16 %v3117, %v3114
    %v3232 = vpack.c.b16 %v3121, %v3118
    %v3233 = vpack.c.b16 %v3122, %v3119
    %v3234 = vpack.c.b16 %v3123, %v3120
    %v3235 = vpack.c.b16 %v3127, %v3124
    %v3236 = vpack.c.b16 %v3128, %v3125
    %v3237 = vpack.c.b16 %v3129, %v3126
    %v3238 = vpack.c.b16 %v3133, %v3130
    %v3239 = vpack.c.b16 %v3134, %v3131
    %v3240 = vpack.c.b16 %v3135, %v3132
    %v3241 = vpack.c.b16 %v3139, %v3136
    %v3242 = vpack.c.b16 %v3140, %v3137
    %v3243 = vpack.c.b16 %v3141, %v3138
    %v3244 = vpack.c.b16 %v3145, %v3142
    %v3245 = vpack.c.b16 %v3146, %v3143
    %v3246 = vpack.c.b16 %v3147, %v3144
    %v3247 = vpack.c.b16 %v3151, %v3148
    %v3248 = vpack.c.b16 %v3152, %v3149
    %v3249 = vpack.c.b16 %v3153, %v3150
    %v3250 = vpack.c.b16 %v3157, %v3154
    %v3251 = vpack.c.b16 %v3158, %v3155
    %v3252 = vpack.c.b16 %v3159, %v3156
    %v3253 = vpack.c.b16 %v3163, %v3160
    %v3254 = vpack.c.b16 %v3164, %v3161
    %v3255 = vpack.c.b16 %v3165, %v3162
    %v3256 = vpack.c.b16 %v3169, %v3166
    %v3257 = vpack.c.b16 %v3170, %v3167
    %v3258 = vpack.c.b16 %v3171, %v3168
    %v3259 = vpack.c.b16 %v3175, %v3172
    %v3260 = vpack.c.b16 %v3176, %v3173
    %v3261 = vpack.c.b16 %v3177, %v3174
    %v3262 = vpack.c.b16 %v3181, %v3178
    %v3263 = vpack.c.b16 %v3182, %v3179
    %v3264 = vpack.c.b16 %v3183, %v3180
    %v3265 = vpack.c.b16 %v3187, %v3184
    %v3266 = vpack.c.b16 %v3188, %v3185
    %v3267 = vpack.c.b16 %v3189, %v3186
    %v3268 = vpack.c.b16 %v3193, %v3190
    %v3269 = vpack.c.b16 %v3194, %v3191
    %v3270 = vpack.c.b16 %v3195, %v3192
    %v3271 = vpack.c.b16 %v3199, %v3196
    %v3272 = vpack.c.b16 %v3200, %v3197
    %v3273 = vpack.c.b16 %v3201, %v3198
    %3346 = vmatprep.subr.bf16.mxu0 %v3203
    %3347 = vmatpush1.bf16.msra.mxu0 %v3202
    %3348 = vmatprep.subr.bf16.mxu0 %v3206
    %3349 = vmatpush1.bf16.msra.mxu0 %v3205
    %3350 = vmatprep.subr.bf16.mxu0 %v3209
    %3351 = vmatpush1.bf16.msra.mxu0 %v3208
    %3352 = vmatprep.subr.bf16.mxu0 %v3212
    %3353 = vmatpush1.bf16.msra.mxu0 %v3211
    %3354 = vmatprep.subr.bf16.mxu0 %v3215
    %3355 = vmatpush1.bf16.msra.mxu0 %v3214
    %3356 = vmatprep.subr.bf16.mxu0 %v3218
    %3357 = vmatpush1.bf16.msra.mxu0 %v3217
    %3358 = vmatprep.subr.bf16.mxu0 %v3221
    %3359 = vmatpush1.bf16.msra.mxu0 %v3220
    %3360 = vmatprep.subr.bf16.mxu0 %v3224
    %3361 = vmatpush1.bf16.msra.mxu0 %v3223
    %3362 = vmatprep.subr.bf16.mxu0 %v3227
    %3363 = vmatpush1.bf16.msra.mxu0 %v3226
    %3364 = vmatprep.subr.bf16.mxu0 %v3230
    %3365 = vmatpush1.bf16.msra.mxu0 %v3229
    %3366 = vmatprep.subr.bf16.mxu0 %v3233
    %3367 = vmatpush1.bf16.msra.mxu0 %v3232
    %3368 = vmatprep.subr.bf16.mxu0 %v3236
    %3369 = vmatpush1.bf16.msra.mxu0 %v3235
    %3370 = vmatprep.subr.bf16.mxu0 %v3239
    %3371 = vmatpush1.bf16.msra.mxu0 %v3238
    %3372 = vmatprep.subr.bf16.mxu0 %v3242
    %3373 = vmatpush1.bf16.msra.mxu0 %v3241
    %3374 = vmatprep.subr.bf16.mxu0 %v3245
    %3375 = vmatpush1.bf16.msra.mxu0 %v3244
    %3376 = vmatprep.subr.bf16.mxu0 %v3248
    %3377 = vmatpush1.bf16.msra.mxu0 %v3247
    %3378 = vmatprep.mubr.bf16.mxu0 %v2847
    %3379 = vmatmul.mubr.bf16.gmra.mrb[0].mxu0 %v2846
    %v3380 = vpop.f32.mrb[0].mxu0
    %v3381 = vadd.f32 %v2950, %v3380
    %v3382 = vpop.f32.mrb[0].mxu0
    %v3383 = vadd.f32 %v2954, %v3382
    %v3384 = vpop.f32.mrb[0].mxu0
    %v3385 = vpop.f32.mrb[0].mxu0
    %3386 = vdwg.mxu0
    %3387 = vmatprep.subr.bf16.mxu0 %v3251
    %3388 = vmatpush1.bf16.msra.mxu0 %v3250
    %3389 = vmatprep.subr.bf16.mxu0 %v3254
    %3390 = vmatpush1.bf16.msra.mxu0 %v3253
    %3391 = vmatprep.subr.bf16.mxu0 %v3257
    %3392 = vmatpush1.bf16.msra.mxu0 %v3256
    %3393 = vmatprep.subr.bf16.mxu0 %v3260
    %3394 = vmatpush1.bf16.msra.mxu0 %v3259
    %3395 = vmatprep.subr.bf16.mxu0 %v3263
    %3396 = vmatpush1.bf16.msra.mxu0 %v3262
    %3397 = vmatprep.subr.bf16.mxu0 %v3266
    %3398 = vmatpush1.bf16.msra.mxu0 %v3265
    %3399 = vmatprep.subr.bf16.mxu0 %v3269
    %3400 = vmatpush1.bf16.msra.mxu0 %v3268
    %3401 = vmatprep.subr.bf16.mxu0 %v3272
    %3402 = vmatpush1.bf16.msra.mxu0 %v3271
    %3403 = vmatprep.subr.bf16.mxu0 0
    %3404 = vmatpush1.bf16.msra.mxu0 0
    %3405 = vmatprep.subr.bf16.mxu0 0
    %3406 = vmatpush1.bf16.msra.mxu0 0
    %3407 = vmatprep.subr.bf16.mxu0 0
    %3408 = vmatpush1.bf16.msra.mxu0 0
    %3409 = vmatprep.subr.bf16.mxu0 0
    %3410 = vmatpush1.bf16.msra.mxu0 0
    %3411 = vmatprep.subr.bf16.mxu0 0
    %3412 = vmatpush1.bf16.msra.mxu0 0
    %3413 = vmatprep.subr.bf16.mxu0 0
    %3414 = vmatpush1.bf16.msra.mxu0 0
    %3415 = vmatprep.subr.bf16.mxu0 0
    %3416 = vmatpush1.bf16.msra.mxu0 0
    %3417 = vmatprep.subr.bf16.mxu0 0
    %3418 = vmatpush1.bf16.msra.mxu0 0
    %3419 = vmatprep.mubr.bf16.mxu0 0
    %3420 = vmatmul.mubr.bf16.gmra.mrb[0].mxu0 %v2848
    %v3421 = vpop.f32.mrb[0].mxu0
    %v3422 = vadd.f32 %v3381, %v3421
    %v3423 = vpop.f32.mrb[0].mxu0
    %v3424 = vadd.f32 %v3383, %v3423
    %v3425 = vpop.f32.mrb[0].mxu0
    %v3426 = vpop.f32.mrb[0].mxu0
    %3427 = vdwg.mxu0
    %3428 = vmatprep.subr.bf16.mxu0 0
    %3429 = vmatpush1.bf16.msra.mxu0 %v3204
    %3430 = vmatprep.subr.bf16.mxu0 0
    %3431 = vmatpush1.bf16.msra.mxu0 %v3207
    %3432 = vmatprep.subr.bf16.mxu0 0
    %3433 = vmatpush1.bf16.msra.mxu0 %v3210
    %3434 = vmatprep.subr.bf16.mxu0 0
    %3435 = vmatpush1.bf16.msra.mxu0 %v3213
    %3436 = vmatprep.subr.bf16.mxu0 0
    %3437 = vmatpush1.bf16.msra.mxu0 %v3216
    %3438 = vmatprep.subr.bf16.mxu0 0
    %3439 = vmatpush1.bf16.msra.mxu0 %v3219
    %3440 = vmatprep.subr.bf16.mxu0 0
    %3441 = vmatpush1.bf16.msra.mxu0 %v3222
    %3442 = vmatprep.subr.bf16.mxu0 0
    %3443 = vmatpush1.bf16.msra.mxu0 %v3225
    %3444 = vmatprep.subr.bf16.mxu0 0
    %3445 = vmatpush1.bf16.msra.mxu0 %v3228
    %3446 = vmatprep.subr.bf16.mxu0 0
    %3447 = vmatpush1.bf16.msra.mxu0 %v3231
    %3448 = vmatprep.subr.bf16.mxu0 0
    %3449 = vmatpush1.bf16.msra.mxu0 %v3234
    %3450 = vmatprep.subr.bf16.mxu0 0
    %3451 = vmatpush1.bf16.msra.mxu0 %v3237
    %3452 = vmatprep.subr.bf16.mxu0 0
    %3453 = vmatpush1.bf16.msra.mxu0 %v3240
    %3454 = vmatprep.subr.bf16.mxu0 0
    %3455 = vmatpush1.bf16.msra.mxu0 %v3243
    %3456 = vmatprep.subr.bf16.mxu0 0
    %3457 = vmatpush1.bf16.msra.mxu0 %v3246
    %3458 = vmatprep.subr.bf16.mxu0 0
    %3459 = vmatpush1.bf16.msra.mxu0 %v3249
    %3460 = vmatprep.mubr.bf16.mxu0 %v2847
    %3461 = vmatmul.mubr.bf16.gmra.mrb[0].mxu0 %v2846
    %v3462 = vpop.f32.mrb[0].mxu0
    %v3463 = vadd.f32 %v2958, %v3462
    %v3464 = vpop.f32.mrb[0].mxu0
    %v3465 = vpop.f32.mrb[0].mxu0
    %v3466 = vpop.f32.mrb[0].mxu0
    %3467 = vdwg.mxu0
    %3468 = vmatprep.subr.bf16.mxu0 0
    %3469 = vmatpush1.bf16.msra.mxu0 %v3252
    %3470 = vmatprep.subr.bf16.mxu0 0
    %3471 = vmatpush1.bf16.msra.mxu0 %v3255
    %3472 = vmatprep.subr.bf16.mxu0 0
    %3473 = vmatpush1.bf16.msra.mxu0 %v3258
    %3474 = vmatprep.subr.bf16.mxu0 0
    %3475 = vmatpush1.bf16.msra.mxu0 %v3261
    %3476 = vmatprep.subr.bf16.mxu0 0
    %3477 = vmatpush1.bf16.msra.mxu0 %v3264
    %3478 = vmatprep.subr.bf16.mxu0 0
    %3479 = vmatpush1.bf16.msra.mxu0 %v3267
    %3480 = vmatprep.subr.bf16.mxu0 0
    %3481 = vmatpush1.bf16.msra.mxu0 %v3270
    %3482 = vmatprep.subr.bf16.mxu0 0
    %3483 = vmatpush1.bf16.msra.mxu0 %v3273
    %3484 = vmatprep.subr.bf16.mxu0 0
    %3485 = vmatpush1.bf16.msra.mxu0 0
    %3486 = vmatprep.subr.bf16.mxu0 0
    %3487 = vmatpush1.bf16.msra.mxu0 0
    %3488 = vmatprep.subr.bf16.mxu0 0
    %3489 = vmatpush1.bf16.msra.mxu0 0
    %3490 = vmatprep.subr.bf16.mxu0 0
    %3491 = vmatpush1.bf16.msra.mxu0 0
    %3492 = vmatprep.subr.bf16.mxu0 0
    %3493 = vmatpush1.bf16.msra.mxu0 0
    %3494 = vmatprep.subr.bf16.mxu0 0
    %3495 = vmatpush1.bf16.msra.mxu0 0
    %3496 = vmatprep.subr.bf16.mxu0 0
    %3497 = vmatpush1.bf16.msra.mxu0 0
    %3498 = vmatprep.subr.bf16.mxu0 0
    %3499 = vmatpush1.bf16.msra.mxu0 0
    %3500 = vmatprep.mubr.bf16.mxu0 0
    %3501 = vmatmul.mubr.bf16.gmra.mrb[0].mxu0 %v2848
    %v3502 = vpop.f32.mrb[0].mxu0
    %v3503 = vadd.f32 %v3463, %v3502
    %v3504 = vpop.f32.mrb[0].mxu0
    %v3505 = vpop.f32.mrb[0].mxu0
    %v3506 = vpop.f32.mrb[0].mxu0
    %3507 = vdwg.mxu0
    %v3508 = vadd.f32 %v2178, %v3422
    %v3509 = vadd.f32 %v2179, %v3424
    %v3510 = vadd.f32 %v2180, %v3503
    %v3511 = vld [vmem:[%s15] sm:$0x7]
    %v3512 = vld [vmem:[%s16] sm:$0x7]
    %v3513 = vadd.f32 %v3508, %v3509
    %v3514 = vadd.f32 %v3513, %v3510
    %3515 = vadd.xlane.f32.xlu0 %v3514
    %v3516 = vpop.xlane.xlu0 %3515
    %v3517 = vmul.f32 %v3516, %v2125
    %v3518 = vsub.f32 %v3508, %v3517
    %v3519 = vsub.f32 %v3509, %v3517
    %v3520 = vsub.f32 %v3510, %v3517
    %v3521 = vmul.f32 %v3518, %v3518
    %v3522 = vmul.f32 %v3519, %v3519
    %v3523 = vmul.f32 %v3520, %v3520
    %v3524 = vadd.f32 %v3521, %v3522
    %v3525 = vadd.f32 %v3524, %v3523
    %3526 = vadd.xlane.f32.xlu0 %v3525
    %v3527 = vpop.xlane.xlu0 %3526
    %v3528 = vmul.f32 %v3527, %v2125
    %v3529 = vadd.f32 %v3528, 1e-05
    %v3530 = vrsqrt.pop %v3529
    %v3531 = vmul.f32 %v3518, %v3530
    %v3532 = vmul.f32 %v3519, %v3530
    %v3533 = vmul.f32 %v3520, %v3530
    %v3535 = vlaneseq
    %v3536 = vshrl.u32 %v3535, 7
    %v3537 = vsub.s32 0, %v3536
    %v3538 = vrot.slane %v3511, %v3537
    %v3539 = vlaneseq
    %v3540 = vshrl.u32 %v3539, 7
    %v3541 = vsub.s32 1, %v3540
    %v3542 = vrot.slane %v3511, %v3541
    %v3543 = vlaneseq
    %v3544 = vshrl.u32 %v3543, 7
    %v3545 = vsub.s32 2, %v3544
    %v3546 = vrot.slane %v3511, %v3545
    %v3550 = vmul.f32 %v3531, %v3538
    %v3551 = vmul.f32 %v3532, %v3542
    %v3552 = vmul.f32 %v3533, %v3546
    %v3554 = vlaneseq
    %v3555 = vshrl.u32 %v3554, 7
    %v3556 = vsub.s32 0, %v3555
    %v3557 = vrot.slane %v3512, %v3556
    %v3558 = vlaneseq
    %v3559 = vshrl.u32 %v3558, 7
    %v3560 = vsub.s32 1, %v3559
    %v3561 = vrot.slane %v3512, %v3560
    %v3562 = vlaneseq
    %v3563 = vshrl.u32 %v3562, 7
    %v3564 = vsub.s32 2, %v3563
    %v3565 = vrot.slane %v3512, %v3564
    %v3569 = vadd.f32 %v3550, %v3557
    %v3570 = vadd.f32 %v3551, %v3561
    %v3571 = vadd.f32 %v3552, %v3565
    %v3572 = vadd.f32 %v3569, %v2027
    %v3573 = vadd.f32 %v3570, %v2107
    %v3574 = vadd.f32 %v3571, %v2109
    %s3575 = scalar_lea.vmem %s9, 3
    %v3576 = vld [vmem:[%s3575] sm:$0x7]
    %s3577 = scalar_lea.vmem %s10, 3
    %v3578 = vld [vmem:[%s3577] sm:$0x7]
    %v3579 = vadd.f32 %v3572, %v3573
    %v3580 = vadd.f32 %v3579, %v3574
    %3581 = vadd.xlane.f32.xlu0 %v3580
    %v3582 = vpop.xlane.xlu0 %3581
    %v3583 = vmul.f32 %v3582, %v2125
    %v3584 = vsub.f32 %v3572, %v3583
    %v3585 = vsub.f32 %v3573, %v3583
    %v3586 = vsub.f32 %v3574, %v3583
    %v3587 = vmul.f32 %v3584, %v3584
    %v3588 = vmul.f32 %v3585, %v3585
    %v3589 = vmul.f32 %v3586, %v3586
    %v3590 = vadd.f32 %v3587, %v3588
    %v3591 = vadd.f32 %v3590, %v3589
    %3592 = vadd.xlane.f32.xlu0 %v3591
    %v3593 = vpop.xlane.xlu0 %3592
    %v3594 = vmul.f32 %v3593, %v2125
    %v3595 = vadd.f32 %v3594, 1e-05
    %v3596 = vrsqrt.pop %v3595
    %v3597 = vmul.f32 %v3584, %v3596
    %v3598 = vmul.f32 %v3585, %v3596
    %v3599 = vmul.f32 %v3586, %v3596
    %v3601 = vlaneseq
    %v3602 = vshrl.u32 %v3601, 7
    %v3603 = vsub.s32 0, %v3602
    %v3604 = vrot.slane %v3576, %v3603
    %v3605 = vlaneseq
    %v3606 = vshrl.u32 %v3605, 7
    %v3607 = vsub.s32 1, %v3606
    %v3608 = vrot.slane %v3576, %v3607
    %v3609 = vlaneseq
    %v3610 = vshrl.u32 %v3609, 7
    %v3611 = vsub.s32 2, %v3610
    %v3612 = vrot.slane %v3576, %v3611
    %v3616 = vmul.f32 %v3597, %v3604
    %v3617 = vmul.f32 %v3598, %v3608
    %v3618 = vmul.f32 %v3599, %v3612
    %v3620 = vlaneseq
    %v3621 = vshrl.u32 %v3620, 7
    %v3622 = vsub.s32 0, %v3621
    %v3623 = vrot.slane %v3578, %v3622
    %v3624 = vlaneseq
    %v3625 = vshrl.u32 %v3624, 7
    %v3626 = vsub.s32 1, %v3625
    %v3627 = vrot.slane %v3578, %v3626
    %v3628 = vlaneseq
    %v3629 = vshrl.u32 %v3628, 7
    %v3630 = vsub.s32 2, %v3629
    %v3631 = vrot.slane %v3578, %v3630
    %v3635 = vadd.f32 %v3616, %v3623
    %v3636 = vadd.f32 %v3617, %v3627
    %v3637 = vadd.f32 %v3618, %v3631
    %v3638 = vpack.c.bf16 %v3635, %v3635
    %v3639 = vpack.c.bf16 %v3636, %v3636
    %v3640 = vpack.c.bf16 %v3637, %v3637
    %s3641 = scalar_lea.vmem [#allocation8], 576
    %v3642 = vld [vmem:[%s3641] sm:$0xff]
    %v3643 = vld [vmem:[%s3641 + $0x8] sm:$0xf]
    %v3644 = vld [vmem:[%s3641 + $0xc] sm:$0xff]
    %v3645 = vld [vmem:[%s3641 + $0x14] sm:$0xf]
    %v3646 = vld [vmem:[%s3641 + $0x18] sm:$0xff]
    %v3647 = vld [vmem:[%s3641 + $0x20] sm:$0xf]
    %v3648 = vld [vmem:[%s3641 + $0x24] sm:$0xff]
    %v3649 = vld [vmem:[%s3641 + $0x2c] sm:$0xf]
    %v3650 = vld [vmem:[%s3641 + $0x30] sm:$0xff]
    %v3651 = vld [vmem:[%s3641 + $0x38] sm:$0xf]
    %v3652 = vld [vmem:[%s3641 + $0x3c] sm:$0xff]
    %v3653 = vld [vmem:[%s3641 + $0x44] sm:$0xf]
    %v3654 = vld [vmem:[%s3641 + $0x48] sm:$0xff]
    %v3655 = vld [vmem:[%s3641 + $0x50] sm:$0xf]
    %v3656 = vld [vmem:[%s3641 + $0x54] sm:$0xff]
    %v3657 = vld [vmem:[%s3641 + $0x5c] sm:$0xf]
    %v3658 = vld [vmem:[%s3641 + $0x60] sm:$0xff]
    %v3659 = vld [vmem:[%s3641 + $0x68] sm:$0xf]
    %v3660 = vld [vmem:[%s3641 + $0x6c] sm:$0xff]
    %v3661 = vld [vmem:[%s3641 + $0x74] sm:$0xf]
    %v3662 = vld [vmem:[%s3641 + $0x78] sm:$0xff]
    %v3663 = vld [vmem:[%s3641 + $0x80] sm:$0xf]
    %v3664 = vld [vmem:[%s3641 + $0x84] sm:$0xff]
    %v3665 = vld [vmem:[%s3641 + $0x8c] sm:$0xf]
    %v3666 = vld [vmem:[%s3641 + $0x90] sm:$0xff]
    %v3667 = vld [vmem:[%s3641 + $0x98] sm:$0xf]
    %v3668 = vld [vmem:[%s3641 + $0x9c] sm:$0xff]
    %v3669 = vld [vmem:[%s3641 + $0xa4] sm:$0xf]
    %v3670 = vld [vmem:[%s3641 + $0xa8] sm:$0xff]
    %v3671 = vld [vmem:[%s3641 + $0xb0] sm:$0xf]
    %v3672 = vld [vmem:[%s3641 + $0xb4] sm:$0xff]
    %v3673 = vld [vmem:[%s3641 + $0xbc] sm:$0xf]
    %v3674 = vld [vmem:[%s3641 + $0xc0] sm:$0xff]
    %v3675 = vld [vmem:[%s3641 + $0xc8] sm:$0xf]
    %v3676 = vld [vmem:[%s3641 + $0xcc] sm:$0xff]
    %v3677 = vld [vmem:[%s3641 + $0xd4] sm:$0xf]
    %v3678 = vld [vmem:[%s3641 + $0xd8] sm:$0xff]
    %v3679 = vld [vmem:[%s3641 + $0xe0] sm:$0xf]
    %v3680 = vld [vmem:[%s3641 + $0xe4] sm:$0xff]
    %v3681 = vld [vmem:[%s3641 + $0xec] sm:$0xf]
    %v3682 = vld [vmem:[%s3641 + $0xf0] sm:$0xff]
    %v3683 = vld [vmem:[%s3641 + $0xf8] sm:$0xf]
    %v3684 = vld [vmem:[%s3641 + $0xfc] sm:$0xff]
    %v3685 = vld [vmem:[%s3641 + $0x104] sm:$0xf]
    %v3686 = vld [vmem:[%s3641 + $0x108] sm:$0xff]
    %v3687 = vld [vmem:[%s3641 + $0x110] sm:$0xf]
    %v3688 = vld [vmem:[%s3641 + $0x114] sm:$0xff]
    %v3689 = vld [vmem:[%s3641 + $0x11c] sm:$0xf]
    %v3690 = vld [vmem:[%s3641 + $0x120] sm:$0xff]
    %v3691 = vld [vmem:[%s3641 + $0x128] sm:$0xf]
    %v3692 = vld [vmem:[%s3641 + $0x12c] sm:$0xff]
    %v3693 = vld [vmem:[%s3641 + $0x134] sm:$0xf]
    %v3694 = vld [vmem:[%s3641 + $0x138] sm:$0xff]
    %v3695 = vld [vmem:[%s3641 + $0x140] sm:$0xf]
    %v3696 = vld [vmem:[%s3641 + $0x144] sm:$0xff]
    %v3697 = vld [vmem:[%s3641 + $0x14c] sm:$0xf]
    %v3698 = vld [vmem:[%s3641 + $0x150] sm:$0xff]
    %v3699 = vld [vmem:[%s3641 + $0x158] sm:$0xf]
    %v3700 = vld [vmem:[%s3641 + $0x15c] sm:$0xff]
    %v3701 = vld [vmem:[%s3641 + $0x164] sm:$0xf]
    %v3702 = vld [vmem:[%s3641 + $0x168] sm:$0xff]
    %v3703 = vld [vmem:[%s3641 + $0x170] sm:$0xf]
    %v3704 = vld [vmem:[%s3641 + $0x174] sm:$0xff]
    %v3705 = vld [vmem:[%s3641 + $0x17c] sm:$0xf]
    %v3706 = vld [vmem:[%s3641 + $0x180] sm:$0xff]
    %v3707 = vld [vmem:[%s3641 + $0x188] sm:$0xf]
    %v3708 = vld [vmem:[%s3641 + $0x18c] sm:$0xff]
    %v3709 = vld [vmem:[%s3641 + $0x194] sm:$0xf]
    %v3710 = vld [vmem:[%s3641 + $0x198] sm:$0xff]
    %v3711 = vld [vmem:[%s3641 + $0x1a0] sm:$0xf]
    %v3712 = vld [vmem:[%s3641 + $0x1a4] sm:$0xff]
    %v3713 = vld [vmem:[%s3641 + $0x1ac] sm:$0xf]
    %v3714 = vld [vmem:[%s3641 + $0x1b0] sm:$0xff]
    %v3715 = vld [vmem:[%s3641 + $0x1b8] sm:$0xf]
    %v3716 = vld [vmem:[%s3641 + $0x1bc] sm:$0xff]
    %v3717 = vld [vmem:[%s3641 + $0x1c4] sm:$0xf]
    %v3718 = vld [vmem:[%s3641 + $0x1c8] sm:$0xff]
    %v3719 = vld [vmem:[%s3641 + $0x1d0] sm:$0xf]
    %v3720 = vld [vmem:[%s3641 + $0x1d4] sm:$0xff]
    %v3721 = vld [vmem:[%s3641 + $0x1dc] sm:$0xf]
    %v3722 = vld [vmem:[%s3641 + $0x1e0] sm:$0xff]
    %v3723 = vld [vmem:[%s3641 + $0x1e8] sm:$0xf]
    %v3724 = vld [vmem:[%s3641 + $0x1ec] sm:$0xff]
    %v3725 = vld [vmem:[%s3641 + $0x1f4] sm:$0xf]
    %v3726 = vld [vmem:[%s3641 + $0x1f8] sm:$0xff]
    %v3727 = vld [vmem:[%s3641 + $0x200] sm:$0xf]
    %v3728 = vld [vmem:[%s3641 + $0x204] sm:$0xff]
    %v3729 = vld [vmem:[%s3641 + $0x20c] sm:$0xf]
    %v3730 = vld [vmem:[%s3641 + $0x210] sm:$0xff]
    %v3731 = vld [vmem:[%s3641 + $0x218] sm:$0xf]
    %v3732 = vld [vmem:[%s3641 + $0x21c] sm:$0xff]
    %v3733 = vld [vmem:[%s3641 + $0x224] sm:$0xf]
    %v3734 = vld [vmem:[%s3641 + $0x228] sm:$0xff]
    %v3735 = vld [vmem:[%s3641 + $0x230] sm:$0xf]
    %v3736 = vld [vmem:[%s3641 + $0x234] sm:$0xff]
    %v3737 = vld [vmem:[%s3641 + $0x23c] sm:$0xf]
    %s3738 = scalar_lea.vmem %s12, 3
    %v3739 = vld [vmem:[%s3738] sm:$0x7]
    %v3741 = vlaneseq
    %v3742 = vshrl.u32 %v3741, 7
    %v3743 = vsub.s32 0, %v3742
    %v3744 = vrot.slane %v3739, %v3743
    %v3745 = vlaneseq
    %v3746 = vshrl.u32 %v3745, 7
    %v3747 = vsub.s32 1, %v3746
    %v3748 = vrot.slane %v3739, %v3747
    %v3749 = vlaneseq
    %v3750 = vshrl.u32 %v3749, 7
    %v3751 = vsub.s32 2, %v3750
    %v3752 = vrot.slane %v3739, %v3751
    %v3852 = vunpack.c.l.b16 %v3642
    %v3853 = vunpack.c.h.b16 %v3642
    %v3854 = vunpack.c.l.b16 %v3643
    %v3855 = vunpack.c.l.b16 %v3644
    %v3856 = vunpack.c.h.b16 %v3644
    %v3857 = vunpack.c.l.b16 %v3645
    %v3858 = vunpack.c.l.b16 %v3646
    %v3859 = vunpack.c.h.b16 %v3646
    %v3860 = vunpack.c.l.b16 %v3647
    %v3861 = vunpack.c.l.b16 %v3648
    %v3862 = vunpack.c.h.b16 %v3648
    %v3863 = vunpack.c.l.b16 %v3649
    %v3864 = vunpack.c.l.b16 %v3650
    %v3865 = vunpack.c.h.b16 %v3650
    %v3866 = vunpack.c.l.b16 %v3651
    %v3867 = vunpack.c.l.b16 %v3652
    %v3868 = vunpack.c.h.b16 %v3652
    %v3869 = vunpack.c.l.b16 %v3653
    %v3870 = vunpack.c.l.b16 %v3654
    %v3871 = vunpack.c.h.b16 %v3654
    %v3872 = vunpack.c.l.b16 %v3655
    %v3873 = vunpack.c.l.b16 %v3656
    %v3874 = vunpack.c.h.b16 %v3656
    %v3875 = vunpack.c.l.b16 %v3657
    %v3876 = vunpack.c.l.b16 %v3658
    %v3877 = vunpack.c.h.b16 %v3658
    %v3878 = vunpack.c.l.b16 %v3659
    %v3879 = vunpack.c.l.b16 %v3660
    %v3880 = vunpack.c.h.b16 %v3660
    %v3881 = vunpack.c.l.b16 %v3661
    %v3882 = vunpack.c.l.b16 %v3662
    %v3883 = vunpack.c.h.b16 %v3662
    %v3884 = vunpack.c.l.b16 %v3663
    %v3885 = vunpack.c.l.b16 %v3664
    %v3886 = vunpack.c.h.b16 %v3664
    %v3887 = vunpack.c.l.b16 %v3665
    %v3888 = vunpack.c.l.b16 %v3666
    %v3889 = vunpack.c.h.b16 %v3666
    %v3890 = vunpack.c.l.b16 %v3667
    %v3891 = vunpack.c.l.b16 %v3668
    %v3892 = vunpack.c.h.b16 %v3668
    %v3893 = vunpack.c.l.b16 %v3669
    %v3894 = vunpack.c.l.b16 %v3670
    %v3895 = vunpack.c.h.b16 %v3670
    %v3896 = vunpack.c.l.b16 %v3671
    %v3897 = vunpack.c.l.b16 %v3672
    %v3898 = vunpack.c.h.b16 %v3672
    %v3899 = vunpack.c.l.b16 %v3673
    %v3900 = vunpack.c.l.b16 %v3674
    %v3901 = vunpack.c.h.b16 %v3674
    %v3902 = vunpack.c.l.b16 %v3675
    %v3903 = vunpack.c.l.b16 %v3676
    %v3904 = vunpack.c.h.b16 %v3676
    %v3905 = vunpack.c.l.b16 %v3677
    %v3906 = vunpack.c.l.b16 %v3678
    %v3907 = vunpack.c.h.b16 %v3678
    %v3908 = vunpack.c.l.b16 %v3679
    %v3909 = vunpack.c.l.b16 %v3680
    %v3910 = vunpack.c.h.b16 %v3680
    %v3911 = vunpack.c.l.b16 %v3681
    %v3912 = vunpack.c.l.b16 %v3682
    %v3913 = vunpack.c.h.b16 %v3682
    %v3914 = vunpack.c.l.b16 %v3683
    %v3915 = vunpack.c.l.b16 %v3684
    %v3916 = vunpack.c.h.b16 %v3684
    %v3917 = vunpack.c.l.b16 %v3685
    %v3918 = vunpack.c.l.b16 %v3686
    %v3919 = vunpack.c.h.b16 %v3686
    %v3920 = vunpack.c.l.b16 %v3687
    %v3921 = vunpack.c.l.b16 %v3688
    %v3922 = vunpack.c.h.b16 %v3688
    %v3923 = vunpack.c.l.b16 %v3689
    %v3924 = vunpack.c.l.b16 %v3690
    %v3925 = vunpack.c.h.b16 %v3690
    %v3926 = vunpack.c.l.b16 %v3691
    %v3927 = vunpack.c.l.b16 %v3692
    %v3928 = vunpack.c.h.b16 %v3692
    %v3929 = vunpack.c.l.b16 %v3693
    %v3930 = vunpack.c.l.b16 %v3694
    %v3931 = vunpack.c.h.b16 %v3694
    %v3932 = vunpack.c.l.b16 %v3695
    %v3933 = vunpack.c.l.b16 %v3696
    %v3934 = vunpack.c.h.b16 %v3696
    %v3935 = vunpack.c.l.b16 %v3697
    %v3936 = vunpack.c.l.b16 %v3698
    %v3937 = vunpack.c.h.b16 %v3698
    %v3938 = vunpack.c.l.b16 %v3699
    %v3939 = vunpack.c.l.b16 %v3700
    %v3940 = vunpack.c.h.b16 %v3700
    %v3941 = vunpack.c.l.b16 %v3701
    %v3942 = vunpack.c.l.b16 %v3702
    %v3943 = vunpack.c.h.b16 %v3702
    %v3944 = vunpack.c.l.b16 %v3703
    %v3945 = vunpack.c.l.b16 %v3704
    %v3946 = vunpack.c.h.b16 %v3704
    %v3947 = vunpack.c.l.b16 %v3705
    %v3948 = vunpack.c.l.b16 %v3706
    %v3949 = vunpack.c.h.b16 %v3706
    %v3950 = vunpack.c.l.b16 %v3707
    %v3951 = vunpack.c.l.b16 %v3708
    %v3952 = vunpack.c.h.b16 %v3708
    %v3953 = vunpack.c.l.b16 %v3709
    %v3954 = vunpack.c.l.b16 %v3710
    %v3955 = vunpack.c.h.b16 %v3710
    %v3956 = vunpack.c.l.b16 %v3711
    %v3957 = vunpack.c.l.b16 %v3712
    %v3958 = vunpack.c.h.b16 %v3712
    %v3959 = vunpack.c.l.b16 %v3713
    %v3960 = vunpack.c.l.b16 %v3714
    %v3961 = vunpack.c.h.b16 %v3714
    %v3962 = vunpack.c.l.b16 %v3715
    %v3963 = vunpack.c.l.b16 %v3716
    %v3964 = vunpack.c.h.b16 %v3716
    %v3965 = vunpack.c.l.b16 %v3717
    %v3966 = vunpack.c.l.b16 %v3718
    %v3967 = vunpack.c.h.b16 %v3718
    %v3968 = vunpack.c.l.b16 %v3719
    %v3969 = vunpack.c.l.b16 %v3720
    %v3970 = vunpack.c.h.b16 %v3720
    %v3971 = vunpack.c.l.b16 %v3721
    %v3972 = vunpack.c.l.b16 %v3722
    %v3973 = vunpack.c.h.b16 %v3722
    %v3974 = vunpack.c.l.b16 %v3723
    %v3975 = vunpack.c.l.b16 %v3724
    %v3976 = vunpack.c.h.b16 %v3724
    %v3977 = vunpack.c.l.b16 %v3725
    %v3978 = vunpack.c.l.b16 %v3726
    %v3979 = vunpack.c.h.b16 %v3726
    %v3980 = vunpack.c.l.b16 %v3727
    %v3981 = vunpack.c.l.b16 %v3728
    %v3982 = vunpack.c.h.b16 %v3728
    %v3983 = vunpack.c.l.b16 %v3729
    %v3984 = vunpack.c.l.b16 %v3730
    %v3985 = vunpack.c.h.b16 %v3730
    %v3986 = vunpack.c.l.b16 %v3731
    %v3987 = vunpack.c.l.b16 %v3732
    %v3988 = vunpack.c.h.b16 %v3732
    %v3989 = vunpack.c.l.b16 %v3733
    %v3990 = vunpack.c.l.b16 %v3734
    %v3991 = vunpack.c.h.b16 %v3734
    %v3992 = vunpack.c.l.b16 %v3735
    %v3993 = vunpack.c.l.b16 %v3736
    %v3994 = vunpack.c.h.b16 %v3736
    %v3995 = vunpack.c.l.b16 %v3737
    %v3996 = vpack.c.b16 %v3855, %v3852
    %v3997 = vpack.c.b16 %v3856, %v3853
    %v3998 = vpack.c.b16 %v3857, %v3854
    %v3999 = vpack.c.b16 %v3861, %v3858
    %v4000 = vpack.c.b16 %v3862, %v3859
    %v4001 = vpack.c.b16 %v3863, %v3860
    %v4002 = vpack.c.b16 %v3867, %v3864
    %v4003 = vpack.c.b16 %v3868, %v3865
    %v4004 = vpack.c.b16 %v3869, %v3866
    %v4005 = vpack.c.b16 %v3873, %v3870
    %v4006 = vpack.c.b16 %v3874, %v3871
    %v4007 = vpack.c.b16 %v3875, %v3872
    %v4008 = vpack.c.b16 %v3879, %v3876
    %v4009 = vpack.c.b16 %v3880, %v3877
    %v4010 = vpack.c.b16 %v3881, %v3878
    %v4011 = vpack.c.b16 %v3885, %v3882
    %v4012 = vpack.c.b16 %v3886, %v3883
    %v4013 = vpack.c.b16 %v3887, %v3884
    %v4014 = vpack.c.b16 %v3891, %v3888
    %v4015 = vpack.c.b16 %v3892, %v3889
    %v4016 = vpack.c.b16 %v3893, %v3890
    %v4017 = vpack.c.b16 %v3897, %v3894
    %v4018 = vpack.c.b16 %v3898, %v3895
    %v4019 = vpack.c.b16 %v3899, %v3896
    %v4020 = vpack.c.b16 %v3903, %v3900
    %v4021 = vpack.c.b16 %v3904, %v3901
    %v4022 = vpack.c.b16 %v3905, %v3902
    %v4023 = vpack.c.b16 %v3909, %v3906
    %v4024 = vpack.c.b16 %v3910, %v3907
    %v4025 = vpack.c.b16 %v3911, %v3908
    %v4026 = vpack.c.b16 %v3915, %v3912
    %v4027 = vpack.c.b16 %v3916, %v3913
    %v4028 = vpack.c.b16 %v3917, %v3914
    %v4029 = vpack.c.b16 %v3921, %v3918
    %v4030 = vpack.c.b16 %v3922, %v3919
    %v4031 = vpack.c.b16 %v3923, %v3920
    %v4032 = vpack.c.b16 %v3927, %v3924
    %v4033 = vpack.c.b16 %v3928, %v3925
    %v4034 = vpack.c.b16 %v3929, %v3926
    %v4035 = vpack.c.b16 %v3933, %v3930
    %v4036 = vpack.c.b16 %v3934, %v3931
    %v4037 = vpack.c.b16 %v3935, %v3932
    %v4038 = vpack.c.b16 %v3939, %v3936
    %v4039 = vpack.c.b16 %v3940, %v3937
    %v4040 = vpack.c.b16 %v3941, %v3938
    %v4041 = vpack.c.b16 %v3945, %v3942
    %v4042 = vpack.c.b16 %v3946, %v3943
    %v4043 = vpack.c.b16 %v3947, %v3944
    %v4044 = vpack.c.b16 %v3951, %v3948
    %v4045 = vpack.c.b16 %v3952, %v3949
    %v4046 = vpack.c.b16 %v3953, %v3950
    %v4047 = vpack.c.b16 %v3957, %v3954
    %v4048 = vpack.c.b16 %v3958, %v3955
    %v4049 = vpack.c.b16 %v3959, %v3956
    %v4050 = vpack.c.b16 %v3963, %v3960
    %v4051 = vpack.c.b16 %v3964, %v3961
    %v4052 = vpack.c.b16 %v3965, %v3962
    %v4053 = vpack.c.b16 %v3969, %v3966
    %v4054 = vpack.c.b16 %v3970, %v3967
    %v4055 = vpack.c.b16 %v3971, %v3968
    %v4056 = vpack.c.b16 %v3975, %v3972
    %v4057 = vpack.c.b16 %v3976, %v3973
    %v4058 = vpack.c.b16 %v3977, %v3974
    %v4059 = vpack.c.b16 %v3981, %v3978
    %v4060 = vpack.c.b16 %v3982, %v3979
    %v4061 = vpack.c.b16 %v3983, %v3980
    %v4062 = vpack.c.b16 %v3987, %v3984
    %v4063 = vpack.c.b16 %v3988, %v3985
    %v4064 = vpack.c.b16 %v3989, %v3986
    %v4065 = vpack.c.b16 %v3993, %v3990
    %v4066 = vpack.c.b16 %v3994, %v3991
    %v4067 = vpack.c.b16 %v3995, %v3992
    %4140 = vmatprep.subr.bf16.mxu0 %v3997
    %4141 = vmatpush1.bf16.msra.mxu0 %v3996
    %4142 = vmatprep.subr.bf16.mxu0 %v4000
    %4143 = vmatpush1.bf16.msra.mxu0 %v3999
    %4144 = vmatprep.subr.bf16.mxu0 %v4003
    %4145 = vmatpush1.bf16.msra.mxu0 %v4002
    %4146 = vmatprep.subr.bf16.mxu0 %v4006
    %4147 = vmatpush1.bf16.msra.mxu0 %v4005
    %4148 = vmatprep.subr.bf16.mxu0 %v4009
    %4149 = vmatpush1.bf16.msra.mxu0 %v4008
    %4150 = vmatprep.subr.bf16.mxu0 %v4012
    %4151 = vmatpush1.bf16.msra.mxu0 %v4011
    %4152 = vmatprep.subr.bf16.mxu0 %v4015
    %4153 = vmatpush1.bf16.msra.mxu0 %v4014
    %4154 = vmatprep.subr.bf16.mxu0 %v4018
    %4155 = vmatpush1.bf16.msra.mxu0 %v4017
    %4156 = vmatprep.subr.bf16.mxu0 %v4021
    %4157 = vmatpush1.bf16.msra.mxu0 %v4020
    %4158 = vmatprep.subr.bf16.mxu0 %v4024
    %4159 = vmatpush1.bf16.msra.mxu0 %v4023
    %4160 = vmatprep.subr.bf16.mxu0 %v4027
    %4161 = vmatpush1.bf16.msra.mxu0 %v4026
    %4162 = vmatprep.subr.bf16.mxu0 %v4030
    %4163 = vmatpush1.bf16.msra.mxu0 %v4029
    %4164 = vmatprep.subr.bf16.mxu0 %v4033
    %4165 = vmatpush1.bf16.msra.mxu0 %v4032
    %4166 = vmatprep.subr.bf16.mxu0 %v4036
    %4167 = vmatpush1.bf16.msra.mxu0 %v4035
    %4168 = vmatprep.subr.bf16.mxu0 %v4039
    %4169 = vmatpush1.bf16.msra.mxu0 %v4038
    %4170 = vmatprep.subr.bf16.mxu0 %v4042
    %4171 = vmatpush1.bf16.msra.mxu0 %v4041
    %4172 = vmatprep.mubr.bf16.mxu0 %v3639
    %4173 = vmatmul.mubr.bf16.gmra.mrb[0].mxu0 %v3638
    %v4174 = vpop.f32.mrb[0].mxu0
    %v4175 = vadd.f32 %v3744, %v4174
    %v4176 = vpop.f32.mrb[0].mxu0
    %v4177 = vadd.f32 %v3748, %v4176
    %v4178 = vpop.f32.mrb[0].mxu0
    %v4179 = vpop.f32.mrb[0].mxu0
    %4180 = vdwg.mxu0
    %4181 = vmatprep.subr.bf16.mxu0 %v4045
    %4182 = vmatpush1.bf16.msra.mxu0 %v4044
    %4183 = vmatprep.subr.bf16.mxu0 %v4048
    %4184 = vmatpush1.bf16.msra.mxu0 %v4047
    %4185 = vmatprep.subr.bf16.mxu0 %v4051
    %4186 = vmatpush1.bf16.msra.mxu0 %v4050
    %4187 = vmatprep.subr.bf16.mxu0 %v4054
    %4188 = vmatpush1.bf16.msra.mxu0 %v4053
    %4189 = vmatprep.subr.bf16.mxu0 %v4057
    %4190 = vmatpush1.bf16.msra.mxu0 %v4056
    %4191 = vmatprep.subr.bf16.mxu0 %v4060
    %4192 = vmatpush1.bf16.msra.mxu0 %v4059
    %4193 = vmatprep.subr.bf16.mxu0 %v4063
    %4194 = vmatpush1.bf16.msra.mxu0 %v4062
    %4195 = vmatprep.subr.bf16.mxu0 %v4066
    %4196 = vmatpush1.bf16.msra.mxu0 %v4065
    %4197 = vmatprep.subr.bf16.mxu0 0
    %4198 = vmatpush1.bf16.msra.mxu0 0
    %4199 = vmatprep.subr.bf16.mxu0 0
    %4200 = vmatpush1.bf16.msra.mxu0 0
    %4201 = vmatprep.subr.bf16.mxu0 0
    %4202 = vmatpush1.bf16.msra.mxu0 0
    %4203 = vmatprep.subr.bf16.mxu0 0
    %4204 = vmatpush1.bf16.msra.mxu0 0
    %4205 = vmatprep.subr.bf16.mxu0 0
    %4206 = vmatpush1.bf16.msra.mxu0 0
    %4207 = vmatprep.subr.bf16.mxu0 0
    %4208 = vmatpush1.bf16.msra.mxu0 0
    %4209 = vmatprep.subr.bf16.mxu0 0
    %4210 = vmatpush1.bf16.msra.mxu0 0
    %4211 = vmatprep.subr.bf16.mxu0 0
    %4212 = vmatpush1.bf16.msra.mxu0 0
    %4213 = vmatprep.mubr.bf16.mxu0 0
    %4214 = vmatmul.mubr.bf16.gmra.mrb[0].mxu0 %v3640
    %v4215 = vpop.f32.mrb[0].mxu0
    %v4216 = vadd.f32 %v4175, %v4215
    %v4217 = vpop.f32.mrb[0].mxu0
    %v4218 = vadd.f32 %v4177, %v4217
    %v4219 = vpop.f32.mrb[0].mxu0
    %v4220 = vpop.f32.mrb[0].mxu0
    %4221 = vdwg.mxu0
    %4222 = vmatprep.subr.bf16.mxu0 0
    %4223 = vmatpush1.bf16.msra.mxu0 %v3998
    %4224 = vmatprep.subr.bf16.mxu0 0
    %4225 = vmatpush1.bf16.msra.mxu0 %v4001
    %4226 = vmatprep.subr.bf16.mxu0 0
    %4227 = vmatpush1.bf16.msra.mxu0 %v4004
    %4228 = vmatprep.subr.bf16.mxu0 0
    %4229 = vmatpush1.bf16.msra.mxu0 %v4007
    %4230 = vmatprep.subr.bf16.mxu0 0
    %4231 = vmatpush1.bf16.msra.mxu0 %v4010
    %4232 = vmatprep.subr.bf16.mxu0 0
    %4233 = vmatpush1.bf16.msra.mxu0 %v4013
    %4234 = vmatprep.subr.bf16.mxu0 0
    %4235 = vmatpush1.bf16.msra.mxu0 %v4016
    %4236 = vmatprep.subr.bf16.mxu0 0
    %4237 = vmatpush1.bf16.msra.mxu0 %v4019
    %4238 = vmatprep.subr.bf16.mxu0 0
    %4239 = vmatpush1.bf16.msra.mxu0 %v4022
    %4240 = vmatprep.subr.bf16.mxu0 0
    %4241 = vmatpush1.bf16.msra.mxu0 %v4025
    %4242 = vmatprep.subr.bf16.mxu0 0
    %4243 = vmatpush1.bf16.msra.mxu0 %v4028
    %4244 = vmatprep.subr.bf16.mxu0 0
    %4245 = vmatpush1.bf16.msra.mxu0 %v4031
    %4246 = vmatprep.subr.bf16.mxu0 0
    %4247 = vmatpush1.bf16.msra.mxu0 %v4034
    %4248 = vmatprep.subr.bf16.mxu0 0
    %4249 = vmatpush1.bf16.msra.mxu0 %v4037
    %4250 = vmatprep.subr.bf16.mxu0 0
    %4251 = vmatpush1.bf16.msra.mxu0 %v4040
    %4252 = vmatprep.subr.bf16.mxu0 0
    %4253 = vmatpush1.bf16.msra.mxu0 %v4043
    %4254 = vmatprep.mubr.bf16.mxu0 %v3639
    %4255 = vmatmul.mubr.bf16.gmra.mrb[0].mxu0 %v3638
    %v4256 = vpop.f32.mrb[0].mxu0
    %v4257 = vadd.f32 %v3752, %v4256
    %v4258 = vpop.f32.mrb[0].mxu0
    %v4259 = vpop.f32.mrb[0].mxu0
    %v4260 = vpop.f32.mrb[0].mxu0
    %4261 = vdwg.mxu0
    %4262 = vmatprep.subr.bf16.mxu0 0
    %4263 = vmatpush1.bf16.msra.mxu0 %v4046
    %4264 = vmatprep.subr.bf16.mxu0 0
    %4265 = vmatpush1.bf16.msra.mxu0 %v4049
    %4266 = vmatprep.subr.bf16.mxu0 0
    %4267 = vmatpush1.bf16.msra.mxu0 %v4052
    %4268 = vmatprep.subr.bf16.mxu0 0
    %4269 = vmatpush1.bf16.msra.mxu0 %v4055
    %4270 = vmatprep.subr.bf16.mxu0 0
    %4271 = vmatpush1.bf16.msra.mxu0 %v4058
    %4272 = vmatprep.subr.bf16.mxu0 0
    %4273 = vmatpush1.bf16.msra.mxu0 %v4061
    %4274 = vmatprep.subr.bf16.mxu0 0
    %4275 = vmatpush1.bf16.msra.mxu0 %v4064
    %4276 = vmatprep.subr.bf16.mxu0 0
    %4277 = vmatpush1.bf16.msra.mxu0 %v4067
    %4278 = vmatprep.subr.bf16.mxu0 0
    %4279 = vmatpush1.bf16.msra.mxu0 0
    %4280 = vmatprep.subr.bf16.mxu0 0
    %4281 = vmatpush1.bf16.msra.mxu0 0
    %4282 = vmatprep.subr.bf16.mxu0 0
    %4283 = vmatpush1.bf16.msra.mxu0 0
    %4284 = vmatprep.subr.bf16.mxu0 0
    %4285 = vmatpush1.bf16.msra.mxu0 0
    %4286 = vmatprep.subr.bf16.mxu0 0
    %4287 = vmatpush1.bf16.msra.mxu0 0
    %4288 = vmatprep.subr.bf16.mxu0 0
    %4289 = vmatpush1.bf16.msra.mxu0 0
    %4290 = vmatprep.subr.bf16.mxu0 0
    %4291 = vmatpush1.bf16.msra.mxu0 0
    %4292 = vmatprep.subr.bf16.mxu0 0
    %4293 = vmatpush1.bf16.msra.mxu0 0
    %4294 = vmatprep.mubr.bf16.mxu0 0
    %4295 = vmatmul.mubr.bf16.gmra.mrb[0].mxu0 %v3640
    %v4296 = vpop.f32.mrb[0].mxu0
    %v4297 = vadd.f32 %v4257, %v4296
    %v4298 = vpop.f32.mrb[0].mxu0
    %v4299 = vpop.f32.mrb[0].mxu0
    %v4300 = vpop.f32.mrb[0].mxu0
    %4301 = vdwg.mxu0
    %v4302 = vmax.f32 %v4216, 0.0
    %v4303 = vmax.f32 %v4218, 0.0
    %v4304 = vmax.f32 %v4297, 0.0
    %v4305 = vpack.c.bf16 %v4302, %v4302
    %v4306 = vpack.c.bf16 %v4303, %v4303
    %v4307 = vpack.c.bf16 %v4304, %v4304
    %s4308 = scalar_lea.vmem [#allocation9], 576
    %v4309 = vld [vmem:[%s4308] sm:$0xff]
    %v4310 = vld [vmem:[%s4308 + $0x8] sm:$0xf]
    %v4311 = vld [vmem:[%s4308 + $0xc] sm:$0xff]
    %v4312 = vld [vmem:[%s4308 + $0x14] sm:$0xf]
    %v4313 = vld [vmem:[%s4308 + $0x18] sm:$0xff]
    %v4314 = vld [vmem:[%s4308 + $0x20] sm:$0xf]
    %v4315 = vld [vmem:[%s4308 + $0x24] sm:$0xff]
    %v4316 = vld [vmem:[%s4308 + $0x2c] sm:$0xf]
    %v4317 = vld [vmem:[%s4308 + $0x30] sm:$0xff]
    %v4318 = vld [vmem:[%s4308 + $0x38] sm:$0xf]
    %v4319 = vld [vmem:[%s4308 + $0x3c] sm:$0xff]
    %v4320 = vld [vmem:[%s4308 + $0x44] sm:$0xf]
    %v4321 = vld [vmem:[%s4308 + $0x48] sm:$0xff]
    %v4322 = vld [vmem:[%s4308 + $0x50] sm:$0xf]
    %v4323 = vld [vmem:[%s4308 + $0x54] sm:$0xff]
    %v4324 = vld [vmem:[%s4308 + $0x5c] sm:$0xf]
    %v4325 = vld [vmem:[%s4308 + $0x60] sm:$0xff]
    %v4326 = vld [vmem:[%s4308 + $0x68] sm:$0xf]
    %v4327 = vld [vmem:[%s4308 + $0x6c] sm:$0xff]
    %v4328 = vld [vmem:[%s4308 + $0x74] sm:$0xf]
    %v4329 = vld [vmem:[%s4308 + $0x78] sm:$0xff]
    %v4330 = vld [vmem:[%s4308 + $0x80] sm:$0xf]
    %v4331 = vld [vmem:[%s4308 + $0x84] sm:$0xff]
    %v4332 = vld [vmem:[%s4308 + $0x8c] sm:$0xf]
    %v4333 = vld [vmem:[%s4308 + $0x90] sm:$0xff]
    %v4334 = vld [vmem:[%s4308 + $0x98] sm:$0xf]
    %v4335 = vld [vmem:[%s4308 + $0x9c] sm:$0xff]
    %v4336 = vld [vmem:[%s4308 + $0xa4] sm:$0xf]
    %v4337 = vld [vmem:[%s4308 + $0xa8] sm:$0xff]
    %v4338 = vld [vmem:[%s4308 + $0xb0] sm:$0xf]
    %v4339 = vld [vmem:[%s4308 + $0xb4] sm:$0xff]
    %v4340 = vld [vmem:[%s4308 + $0xbc] sm:$0xf]
    %v4341 = vld [vmem:[%s4308 + $0xc0] sm:$0xff]
    %v4342 = vld [vmem:[%s4308 + $0xc8] sm:$0xf]
    %v4343 = vld [vmem:[%s4308 + $0xcc] sm:$0xff]
    %v4344 = vld [vmem:[%s4308 + $0xd4] sm:$0xf]
    %v4345 = vld [vmem:[%s4308 + $0xd8] sm:$0xff]
    %v4346 = vld [vmem:[%s4308 + $0xe0] sm:$0xf]
    %v4347 = vld [vmem:[%s4308 + $0xe4] sm:$0xff]
    %v4348 = vld [vmem:[%s4308 + $0xec] sm:$0xf]
    %v4349 = vld [vmem:[%s4308 + $0xf0] sm:$0xff]
    %v4350 = vld [vmem:[%s4308 + $0xf8] sm:$0xf]
    %v4351 = vld [vmem:[%s4308 + $0xfc] sm:$0xff]
    %v4352 = vld [vmem:[%s4308 + $0x104] sm:$0xf]
    %v4353 = vld [vmem:[%s4308 + $0x108] sm:$0xff]
    %v4354 = vld [vmem:[%s4308 + $0x110] sm:$0xf]
    %v4355 = vld [vmem:[%s4308 + $0x114] sm:$0xff]
    %v4356 = vld [vmem:[%s4308 + $0x11c] sm:$0xf]
    %v4357 = vld [vmem:[%s4308 + $0x120] sm:$0xff]
    %v4358 = vld [vmem:[%s4308 + $0x128] sm:$0xf]
    %v4359 = vld [vmem:[%s4308 + $0x12c] sm:$0xff]
    %v4360 = vld [vmem:[%s4308 + $0x134] sm:$0xf]
    %v4361 = vld [vmem:[%s4308 + $0x138] sm:$0xff]
    %v4362 = vld [vmem:[%s4308 + $0x140] sm:$0xf]
    %v4363 = vld [vmem:[%s4308 + $0x144] sm:$0xff]
    %v4364 = vld [vmem:[%s4308 + $0x14c] sm:$0xf]
    %v4365 = vld [vmem:[%s4308 + $0x150] sm:$0xff]
    %v4366 = vld [vmem:[%s4308 + $0x158] sm:$0xf]
    %v4367 = vld [vmem:[%s4308 + $0x15c] sm:$0xff]
    %v4368 = vld [vmem:[%s4308 + $0x164] sm:$0xf]
    %v4369 = vld [vmem:[%s4308 + $0x168] sm:$0xff]
    %v4370 = vld [vmem:[%s4308 + $0x170] sm:$0xf]
    %v4371 = vld [vmem:[%s4308 + $0x174] sm:$0xff]
    %v4372 = vld [vmem:[%s4308 + $0x17c] sm:$0xf]
    %v4373 = vld [vmem:[%s4308 + $0x180] sm:$0xff]
    %v4374 = vld [vmem:[%s4308 + $0x188] sm:$0xf]
    %v4375 = vld [vmem:[%s4308 + $0x18c] sm:$0xff]
    %v4376 = vld [vmem:[%s4308 + $0x194] sm:$0xf]
    %v4377 = vld [vmem:[%s4308 + $0x198] sm:$0xff]
    %v4378 = vld [vmem:[%s4308 + $0x1a0] sm:$0xf]
    %v4379 = vld [vmem:[%s4308 + $0x1a4] sm:$0xff]
    %v4380 = vld [vmem:[%s4308 + $0x1ac] sm:$0xf]
    %v4381 = vld [vmem:[%s4308 + $0x1b0] sm:$0xff]
    %v4382 = vld [vmem:[%s4308 + $0x1b8] sm:$0xf]
    %v4383 = vld [vmem:[%s4308 + $0x1bc] sm:$0xff]
    %v4384 = vld [vmem:[%s4308 + $0x1c4] sm:$0xf]
    %v4385 = vld [vmem:[%s4308 + $0x1c8] sm:$0xff]
    %v4386 = vld [vmem:[%s4308 + $0x1d0] sm:$0xf]
    %v4387 = vld [vmem:[%s4308 + $0x1d4] sm:$0xff]
    %v4388 = vld [vmem:[%s4308 + $0x1dc] sm:$0xf]
    %v4389 = vld [vmem:[%s4308 + $0x1e0] sm:$0xff]
    %v4390 = vld [vmem:[%s4308 + $0x1e8] sm:$0xf]
    %v4391 = vld [vmem:[%s4308 + $0x1ec] sm:$0xff]
    %v4392 = vld [vmem:[%s4308 + $0x1f4] sm:$0xf]
    %v4393 = vld [vmem:[%s4308 + $0x1f8] sm:$0xff]
    %v4394 = vld [vmem:[%s4308 + $0x200] sm:$0xf]
    %v4395 = vld [vmem:[%s4308 + $0x204] sm:$0xff]
    %v4396 = vld [vmem:[%s4308 + $0x20c] sm:$0xf]
    %v4397 = vld [vmem:[%s4308 + $0x210] sm:$0xff]
    %v4398 = vld [vmem:[%s4308 + $0x218] sm:$0xf]
    %v4399 = vld [vmem:[%s4308 + $0x21c] sm:$0xff]
    %v4400 = vld [vmem:[%s4308 + $0x224] sm:$0xf]
    %v4401 = vld [vmem:[%s4308 + $0x228] sm:$0xff]
    %v4402 = vld [vmem:[%s4308 + $0x230] sm:$0xf]
    %v4403 = vld [vmem:[%s4308 + $0x234] sm:$0xff]
    %v4404 = vld [vmem:[%s4308 + $0x23c] sm:$0xf]
    %s4405 = scalar_lea.vmem %s14, 3
    %v4406 = vld [vmem:[%s4405] sm:$0x7]
    %v4408 = vlaneseq
    %v4409 = vshrl.u32 %v4408, 7
    %v4410 = vsub.s32 0, %v4409
    %v4411 = vrot.slane %v4406, %v4410
    %v4412 = vlaneseq
    %v4413 = vshrl.u32 %v4412, 7
    %v4414 = vsub.s32 1, %v4413
    %v4415 = vrot.slane %v4406, %v4414
    %v4416 = vlaneseq
    %v4417 = vshrl.u32 %v4416, 7
    %v4418 = vsub.s32 2, %v4417
    %v4419 = vrot.slane %v4406, %v4418
    %v4519 = vunpack.c.l.b16 %v4309
    %v4520 = vunpack.c.h.b16 %v4309
    %v4521 = vunpack.c.l.b16 %v4310
    %v4522 = vunpack.c.l.b16 %v4311
    %v4523 = vunpack.c.h.b16 %v4311
    %v4524 = vunpack.c.l.b16 %v4312
    %v4525 = vunpack.c.l.b16 %v4313
    %v4526 = vunpack.c.h.b16 %v4313
    %v4527 = vunpack.c.l.b16 %v4314
    %v4528 = vunpack.c.l.b16 %v4315
    %v4529 = vunpack.c.h.b16 %v4315
    %v4530 = vunpack.c.l.b16 %v4316
    %v4531 = vunpack.c.l.b16 %v4317
    %v4532 = vunpack.c.h.b16 %v4317
    %v4533 = vunpack.c.l.b16 %v4318
    %v4534 = vunpack.c.l.b16 %v4319
    %v4535 = vunpack.c.h.b16 %v4319
    %v4536 = vunpack.c.l.b16 %v4320
    %v4537 = vunpack.c.l.b16 %v4321
    %v4538 = vunpack.c.h.b16 %v4321
    %v4539 = vunpack.c.l.b16 %v4322
    %v4540 = vunpack.c.l.b16 %v4323
    %v4541 = vunpack.c.h.b16 %v4323
    %v4542 = vunpack.c.l.b16 %v4324
    %v4543 = vunpack.c.l.b16 %v4325
    %v4544 = vunpack.c.h.b16 %v4325
    %v4545 = vunpack.c.l.b16 %v4326
    %v4546 = vunpack.c.l.b16 %v4327
    %v4547 = vunpack.c.h.b16 %v4327
    %v4548 = vunpack.c.l.b16 %v4328
    %v4549 = vunpack.c.l.b16 %v4329
    %v4550 = vunpack.c.h.b16 %v4329
    %v4551 = vunpack.c.l.b16 %v4330
    %v4552 = vunpack.c.l.b16 %v4331
    %v4553 = vunpack.c.h.b16 %v4331
    %v4554 = vunpack.c.l.b16 %v4332
    %v4555 = vunpack.c.l.b16 %v4333
    %v4556 = vunpack.c.h.b16 %v4333
    %v4557 = vunpack.c.l.b16 %v4334
    %v4558 = vunpack.c.l.b16 %v4335
    %v4559 = vunpack.c.h.b16 %v4335
    %v4560 = vunpack.c.l.b16 %v4336
    %v4561 = vunpack.c.l.b16 %v4337
    %v4562 = vunpack.c.h.b16 %v4337
    %v4563 = vunpack.c.l.b16 %v4338
    %v4564 = vunpack.c.l.b16 %v4339
    %v4565 = vunpack.c.h.b16 %v4339
    %v4566 = vunpack.c.l.b16 %v4340
    %v4567 = vunpack.c.l.b16 %v4341
    %v4568 = vunpack.c.h.b16 %v4341
    %v4569 = vunpack.c.l.b16 %v4342
    %v4570 = vunpack.c.l.b16 %v4343
    %v4571 = vunpack.c.h.b16 %v4343
    %v4572 = vunpack.c.l.b16 %v4344
    %v4573 = vunpack.c.l.b16 %v4345
    %v4574 = vunpack.c.h.b16 %v4345
    %v4575 = vunpack.c.l.b16 %v4346
    %v4576 = vunpack.c.l.b16 %v4347
    %v4577 = vunpack.c.h.b16 %v4347
    %v4578 = vunpack.c.l.b16 %v4348
    %v4579 = vunpack.c.l.b16 %v4349
    %v4580 = vunpack.c.h.b16 %v4349
    %v4581 = vunpack.c.l.b16 %v4350
    %v4582 = vunpack.c.l.b16 %v4351
    %v4583 = vunpack.c.h.b16 %v4351
    %v4584 = vunpack.c.l.b16 %v4352
    %v4585 = vunpack.c.l.b16 %v4353
    %v4586 = vunpack.c.h.b16 %v4353
    %v4587 = vunpack.c.l.b16 %v4354
    %v4588 = vunpack.c.l.b16 %v4355
    %v4589 = vunpack.c.h.b16 %v4355
    %v4590 = vunpack.c.l.b16 %v4356
    %v4591 = vunpack.c.l.b16 %v4357
    %v4592 = vunpack.c.h.b16 %v4357
    %v4593 = vunpack.c.l.b16 %v4358
    %v4594 = vunpack.c.l.b16 %v4359
    %v4595 = vunpack.c.h.b16 %v4359
    %v4596 = vunpack.c.l.b16 %v4360
    %v4597 = vunpack.c.l.b16 %v4361
    %v4598 = vunpack.c.h.b16 %v4361
    %v4599 = vunpack.c.l.b16 %v4362
    %v4600 = vunpack.c.l.b16 %v4363
    %v4601 = vunpack.c.h.b16 %v4363
    %v4602 = vunpack.c.l.b16 %v4364
    %v4603 = vunpack.c.l.b16 %v4365
    %v4604 = vunpack.c.h.b16 %v4365
    %v4605 = vunpack.c.l.b16 %v4366
    %v4606 = vunpack.c.l.b16 %v4367
    %v4607 = vunpack.c.h.b16 %v4367
    %v4608 = vunpack.c.l.b16 %v4368
    %v4609 = vunpack.c.l.b16 %v4369
    %v4610 = vunpack.c.h.b16 %v4369
    %v4611 = vunpack.c.l.b16 %v4370
    %v4612 = vunpack.c.l.b16 %v4371
    %v4613 = vunpack.c.h.b16 %v4371
    %v4614 = vunpack.c.l.b16 %v4372
    %v4615 = vunpack.c.l.b16 %v4373
    %v4616 = vunpack.c.h.b16 %v4373
    %v4617 = vunpack.c.l.b16 %v4374
    %v4618 = vunpack.c.l.b16 %v4375
    %v4619 = vunpack.c.h.b16 %v4375
    %v4620 = vunpack.c.l.b16 %v4376
    %v4621 = vunpack.c.l.b16 %v4377
    %v4622 = vunpack.c.h.b16 %v4377
    %v4623 = vunpack.c.l.b16 %v4378
    %v4624 = vunpack.c.l.b16 %v4379
    %v4625 = vunpack.c.h.b16 %v4379
    %v4626 = vunpack.c.l.b16 %v4380
    %v4627 = vunpack.c.l.b16 %v4381
    %v4628 = vunpack.c.h.b16 %v4381
    %v4629 = vunpack.c.l.b16 %v4382
    %v4630 = vunpack.c.l.b16 %v4383
    %v4631 = vunpack.c.h.b16 %v4383
    %v4632 = vunpack.c.l.b16 %v4384
    %v4633 = vunpack.c.l.b16 %v4385
    %v4634 = vunpack.c.h.b16 %v4385
    %v4635 = vunpack.c.l.b16 %v4386
    %v4636 = vunpack.c.l.b16 %v4387
    %v4637 = vunpack.c.h.b16 %v4387
    %v4638 = vunpack.c.l.b16 %v4388
    %v4639 = vunpack.c.l.b16 %v4389
    %v4640 = vunpack.c.h.b16 %v4389
    %v4641 = vunpack.c.l.b16 %v4390
    %v4642 = vunpack.c.l.b16 %v4391
    %v4643 = vunpack.c.h.b16 %v4391
    %v4644 = vunpack.c.l.b16 %v4392
    %v4645 = vunpack.c.l.b16 %v4393
    %v4646 = vunpack.c.h.b16 %v4393
    %v4647 = vunpack.c.l.b16 %v4394
    %v4648 = vunpack.c.l.b16 %v4395
    %v4649 = vunpack.c.h.b16 %v4395
    %v4650 = vunpack.c.l.b16 %v4396
    %v4651 = vunpack.c.l.b16 %v4397
    %v4652 = vunpack.c.h.b16 %v4397
    %v4653 = vunpack.c.l.b16 %v4398
    %v4654 = vunpack.c.l.b16 %v4399
    %v4655 = vunpack.c.h.b16 %v4399
    %v4656 = vunpack.c.l.b16 %v4400
    %v4657 = vunpack.c.l.b16 %v4401
    %v4658 = vunpack.c.h.b16 %v4401
    %v4659 = vunpack.c.l.b16 %v4402
    %v4660 = vunpack.c.l.b16 %v4403
    %v4661 = vunpack.c.h.b16 %v4403
    %v4662 = vunpack.c.l.b16 %v4404
    %v4663 = vpack.c.b16 %v4522, %v4519
    %v4664 = vpack.c.b16 %v4523, %v4520
    %v4665 = vpack.c.b16 %v4524, %v4521
    %v4666 = vpack.c.b16 %v4528, %v4525
    %v4667 = vpack.c.b16 %v4529, %v4526
    %v4668 = vpack.c.b16 %v4530, %v4527
    %v4669 = vpack.c.b16 %v4534, %v4531
    %v4670 = vpack.c.b16 %v4535, %v4532
    %v4671 = vpack.c.b16 %v4536, %v4533
    %v4672 = vpack.c.b16 %v4540, %v4537
    %v4673 = vpack.c.b16 %v4541, %v4538
    %v4674 = vpack.c.b16 %v4542, %v4539
    %v4675 = vpack.c.b16 %v4546, %v4543
    %v4676 = vpack.c.b16 %v4547, %v4544
    %v4677 = vpack.c.b16 %v4548, %v4545
    %v4678 = vpack.c.b16 %v4552, %v4549
    %v4679 = vpack.c.b16 %v4553, %v4550
    %v4680 = vpack.c.b16 %v4554, %v4551
    %v4681 = vpack.c.b16 %v4558, %v4555
    %v4682 = vpack.c.b16 %v4559, %v4556
    %v4683 = vpack.c.b16 %v4560, %v4557
    %v4684 = vpack.c.b16 %v4564, %v4561
    %v4685 = vpack.c.b16 %v4565, %v4562
    %v4686 = vpack.c.b16 %v4566, %v4563
    %v4687 = vpack.c.b16 %v4570, %v4567
    %v4688 = vpack.c.b16 %v4571, %v4568
    %v4689 = vpack.c.b16 %v4572, %v4569
    %v4690 = vpack.c.b16 %v4576, %v4573
    %v4691 = vpack.c.b16 %v4577, %v4574
    %v4692 = vpack.c.b16 %v4578, %v4575
    %v4693 = vpack.c.b16 %v4582, %v4579
    %v4694 = vpack.c.b16 %v4583, %v4580
    %v4695 = vpack.c.b16 %v4584, %v4581
    %v4696 = vpack.c.b16 %v4588, %v4585
    %v4697 = vpack.c.b16 %v4589, %v4586
    %v4698 = vpack.c.b16 %v4590, %v4587
    %v4699 = vpack.c.b16 %v4594, %v4591
    %v4700 = vpack.c.b16 %v4595, %v4592
    %v4701 = vpack.c.b16 %v4596, %v4593
    %v4702 = vpack.c.b16 %v4600, %v4597
    %v4703 = vpack.c.b16 %v4601, %v4598
    %v4704 = vpack.c.b16 %v4602, %v4599
    %v4705 = vpack.c.b16 %v4606, %v4603
    %v4706 = vpack.c.b16 %v4607, %v4604
    %v4707 = vpack.c.b16 %v4608, %v4605
    %v4708 = vpack.c.b16 %v4612, %v4609
    %v4709 = vpack.c.b16 %v4613, %v4610
    %v4710 = vpack.c.b16 %v4614, %v4611
    %v4711 = vpack.c.b16 %v4618, %v4615
    %v4712 = vpack.c.b16 %v4619, %v4616
    %v4713 = vpack.c.b16 %v4620, %v4617
    %v4714 = vpack.c.b16 %v4624, %v4621
    %v4715 = vpack.c.b16 %v4625, %v4622
    %v4716 = vpack.c.b16 %v4626, %v4623
    %v4717 = vpack.c.b16 %v4630, %v4627
    %v4718 = vpack.c.b16 %v4631, %v4628
    %v4719 = vpack.c.b16 %v4632, %v4629
    %v4720 = vpack.c.b16 %v4636, %v4633
    %v4721 = vpack.c.b16 %v4637, %v4634
    %v4722 = vpack.c.b16 %v4638, %v4635
    %v4723 = vpack.c.b16 %v4642, %v4639
    %v4724 = vpack.c.b16 %v4643, %v4640
    %v4725 = vpack.c.b16 %v4644, %v4641
    %v4726 = vpack.c.b16 %v4648, %v4645
    %v4727 = vpack.c.b16 %v4649, %v4646
    %v4728 = vpack.c.b16 %v4650, %v4647
    %v4729 = vpack.c.b16 %v4654, %v4651
    %v4730 = vpack.c.b16 %v4655, %v4652
    %v4731 = vpack.c.b16 %v4656, %v4653
    %v4732 = vpack.c.b16 %v4660, %v4657
    %v4733 = vpack.c.b16 %v4661, %v4658
    %v4734 = vpack.c.b16 %v4662, %v4659
    %4807 = vmatprep.subr.bf16.mxu0 %v4664
    %4808 = vmatpush1.bf16.msra.mxu0 %v4663
    %4809 = vmatprep.subr.bf16.mxu0 %v4667
    %4810 = vmatpush1.bf16.msra.mxu0 %v4666
    %4811 = vmatprep.subr.bf16.mxu0 %v4670
    %4812 = vmatpush1.bf16.msra.mxu0 %v4669
    %4813 = vmatprep.subr.bf16.mxu0 %v4673
    %4814 = vmatpush1.bf16.msra.mxu0 %v4672
    %4815 = vmatprep.subr.bf16.mxu0 %v4676
    %4816 = vmatpush1.bf16.msra.mxu0 %v4675
    %4817 = vmatprep.subr.bf16.mxu0 %v4679
    %4818 = vmatpush1.bf16.msra.mxu0 %v4678
    %4819 = vmatprep.subr.bf16.mxu0 %v4682
    %4820 = vmatpush1.bf16.msra.mxu0 %v4681
    %4821 = vmatprep.subr.bf16.mxu0 %v4685
    %4822 = vmatpush1.bf16.msra.mxu0 %v4684
    %4823 = vmatprep.subr.bf16.mxu0 %v4688
    %4824 = vmatpush1.bf16.msra.mxu0 %v4687
    %4825 = vmatprep.subr.bf16.mxu0 %v4691
    %4826 = vmatpush1.bf16.msra.mxu0 %v4690
    %4827 = vmatprep.subr.bf16.mxu0 %v4694
    %4828 = vmatpush1.bf16.msra.mxu0 %v4693
    %4829 = vmatprep.subr.bf16.mxu0 %v4697
    %4830 = vmatpush1.bf16.msra.mxu0 %v4696
    %4831 = vmatprep.subr.bf16.mxu0 %v4700
    %4832 = vmatpush1.bf16.msra.mxu0 %v4699
    %4833 = vmatprep.subr.bf16.mxu0 %v4703
    %4834 = vmatpush1.bf16.msra.mxu0 %v4702
    %4835 = vmatprep.subr.bf16.mxu0 %v4706
    %4836 = vmatpush1.bf16.msra.mxu0 %v4705
    %4837 = vmatprep.subr.bf16.mxu0 %v4709
    %4838 = vmatpush1.bf16.msra.mxu0 %v4708
    %4839 = vmatprep.mubr.bf16.mxu0 %v4306
    %4840 = vmatmul.mubr.bf16.gmra.mrb[0].mxu0 %v4305
    %v4841 = vpop.f32.mrb[0].mxu0
    %v4842 = vadd.f32 %v4411, %v4841
    %v4843 = vpop.f32.mrb[0].mxu0
    %v4844 = vadd.f32 %v4415, %v4843
    %v4845 = vpop.f32.mrb[0].mxu0
    %v4846 = vpop.f32.mrb[0].mxu0
    %4847 = vdwg.mxu0
    %4848 = vmatprep.subr.bf16.mxu0 %v4712
    %4849 = vmatpush1.bf16.msra.mxu0 %v4711
    %4850 = vmatprep.subr.bf16.mxu0 %v4715
    %4851 = vmatpush1.bf16.msra.mxu0 %v4714
    %4852 = vmatprep.subr.bf16.mxu0 %v4718
    %4853 = vmatpush1.bf16.msra.mxu0 %v4717
    %4854 = vmatprep.subr.bf16.mxu0 %v4721
    %4855 = vmatpush1.bf16.msra.mxu0 %v4720
    %4856 = vmatprep.subr.bf16.mxu0 %v4724
    %4857 = vmatpush1.bf16.msra.mxu0 %v4723
    %4858 = vmatprep.subr.bf16.mxu0 %v4727
    %4859 = vmatpush1.bf16.msra.mxu0 %v4726
    %4860 = vmatprep.subr.bf16.mxu0 %v4730
    %4861 = vmatpush1.bf16.msra.mxu0 %v4729
    %4862 = vmatprep.subr.bf16.mxu0 %v4733
    %4863 = vmatpush1.bf16.msra.mxu0 %v4732
    %4864 = vmatprep.subr.bf16.mxu0 0
    %4865 = vmatpush1.bf16.msra.mxu0 0
    %4866 = vmatprep.subr.bf16.mxu0 0
    %4867 = vmatpush1.bf16.msra.mxu0 0
    %4868 = vmatprep.subr.bf16.mxu0 0
    %4869 = vmatpush1.bf16.msra.mxu0 0
    %4870 = vmatprep.subr.bf16.mxu0 0
    %4871 = vmatpush1.bf16.msra.mxu0 0
    %4872 = vmatprep.subr.bf16.mxu0 0
    %4873 = vmatpush1.bf16.msra.mxu0 0
    %4874 = vmatprep.subr.bf16.mxu0 0
    %4875 = vmatpush1.bf16.msra.mxu0 0
    %4876 = vmatprep.subr.bf16.mxu0 0
    %4877 = vmatpush1.bf16.msra.mxu0 0
    %4878 = vmatprep.subr.bf16.mxu0 0
    %4879 = vmatpush1.bf16.msra.mxu0 0
    %4880 = vmatprep.mubr.bf16.mxu0 0
    %4881 = vmatmul.mubr.bf16.gmra.mrb[0].mxu0 %v4307
    %v4882 = vpop.f32.mrb[0].mxu0
    %v4883 = vadd.f32 %v4842, %v4882
    %v4884 = vpop.f32.mrb[0].mxu0
    %v4885 = vadd.f32 %v4844, %v4884
    %v4886 = vpop.f32.mrb[0].mxu0
    %v4887 = vpop.f32.mrb[0].mxu0
    %4888 = vdwg.mxu0
    %4889 = vmatprep.subr.bf16.mxu0 0
    %4890 = vmatpush1.bf16.msra.mxu0 %v4665
    %4891 = vmatprep.subr.bf16.mxu0 0
    %4892 = vmatpush1.bf16.msra.mxu0 %v4668
    %4893 = vmatprep.subr.bf16.mxu0 0
    %4894 = vmatpush1.bf16.msra.mxu0 %v4671
    %4895 = vmatprep.subr.bf16.mxu0 0
    %4896 = vmatpush1.bf16.msra.mxu0 %v4674
    %4897 = vmatprep.subr.bf16.mxu0 0
    %4898 = vmatpush1.bf16.msra.mxu0 %v4677
    %4899 = vmatprep.subr.bf16.mxu0 0
    %4900 = vmatpush1.bf16.msra.mxu0 %v4680
    %4901 = vmatprep.subr.bf16.mxu0 0
    %4902 = vmatpush1.bf16.msra.mxu0 %v4683
    %4903 = vmatprep.subr.bf16.mxu0 0
    %4904 = vmatpush1.bf16.msra.mxu0 %v4686
    %4905 = vmatprep.subr.bf16.mxu0 0
    %4906 = vmatpush1.bf16.msra.mxu0 %v4689
    %4907 = vmatprep.subr.bf16.mxu0 0
    %4908 = vmatpush1.bf16.msra.mxu0 %v4692
    %4909 = vmatprep.subr.bf16.mxu0 0
    %4910 = vmatpush1.bf16.msra.mxu0 %v4695
    %4911 = vmatprep.subr.bf16.mxu0 0
    %4912 = vmatpush1.bf16.msra.mxu0 %v4698
    %4913 = vmatprep.subr.bf16.mxu0 0
    %4914 = vmatpush1.bf16.msra.mxu0 %v4701
    %4915 = vmatprep.subr.bf16.mxu0 0
    %4916 = vmatpush1.bf16.msra.mxu0 %v4704
    %4917 = vmatprep.subr.bf16.mxu0 0
    %4918 = vmatpush1.bf16.msra.mxu0 %v4707
    %4919 = vmatprep.subr.bf16.mxu0 0
    %4920 = vmatpush1.bf16.msra.mxu0 %v4710
    %4921 = vmatprep.mubr.bf16.mxu0 %v4306
    %4922 = vmatmul.mubr.bf16.gmra.mrb[0].mxu0 %v4305
    %v4923 = vpop.f32.mrb[0].mxu0
    %v4924 = vadd.f32 %v4419, %v4923
    %v4925 = vpop.f32.mrb[0].mxu0
    %v4926 = vpop.f32.mrb[0].mxu0
    %v4927 = vpop.f32.mrb[0].mxu0
    %4928 = vdwg.mxu0
    %4929 = vmatprep.subr.bf16.mxu0 0
    %4930 = vmatpush1.bf16.msra.mxu0 %v4713
    %4931 = vmatprep.subr.bf16.mxu0 0
    %4932 = vmatpush1.bf16.msra.mxu0 %v4716
    %4933 = vmatprep.subr.bf16.mxu0 0
    %4934 = vmatpush1.bf16.msra.mxu0 %v4719
    %4935 = vmatprep.subr.bf16.mxu0 0
    %4936 = vmatpush1.bf16.msra.mxu0 %v4722
    %4937 = vmatprep.subr.bf16.mxu0 0
    %4938 = vmatpush1.bf16.msra.mxu0 %v4725
    %4939 = vmatprep.subr.bf16.mxu0 0
    %4940 = vmatpush1.bf16.msra.mxu0 %v4728
    %4941 = vmatprep.subr.bf16.mxu0 0
    %4942 = vmatpush1.bf16.msra.mxu0 %v4731
    %4943 = vmatprep.subr.bf16.mxu0 0
    %4944 = vmatpush1.bf16.msra.mxu0 %v4734
    %4945 = vmatprep.subr.bf16.mxu0 0
    %4946 = vmatpush1.bf16.msra.mxu0 0
    %4947 = vmatprep.subr.bf16.mxu0 0
    %4948 = vmatpush1.bf16.msra.mxu0 0
    %4949 = vmatprep.subr.bf16.mxu0 0
    %4950 = vmatpush1.bf16.msra.mxu0 0
    %4951 = vmatprep.subr.bf16.mxu0 0
    %4952 = vmatpush1.bf16.msra.mxu0 0
    %4953 = vmatprep.subr.bf16.mxu0 0
    %4954 = vmatpush1.bf16.msra.mxu0 0
    %4955 = vmatprep.subr.bf16.mxu0 0
    %4956 = vmatpush1.bf16.msra.mxu0 0
    %4957 = vmatprep.subr.bf16.mxu0 0
    %4958 = vmatpush1.bf16.msra.mxu0 0
    %4959 = vmatprep.subr.bf16.mxu0 0
    %4960 = vmatpush1.bf16.msra.mxu0 0
    %4961 = vmatprep.mubr.bf16.mxu0 0
    %4962 = vmatmul.mubr.bf16.gmra.mrb[0].mxu0 %v4307
    %v4963 = vpop.f32.mrb[0].mxu0
    %v4964 = vadd.f32 %v4924, %v4963
    %v4965 = vpop.f32.mrb[0].mxu0
    %v4966 = vpop.f32.mrb[0].mxu0
    %v4967 = vpop.f32.mrb[0].mxu0
    %4968 = vdwg.mxu0
    %v4969 = vadd.f32 %v3635, %v4883
    %v4970 = vadd.f32 %v3636, %v4885
    %v4971 = vadd.f32 %v3637, %v4964
    %s4972 = scalar_lea.vmem %s15, 3
    %v4973 = vld [vmem:[%s4972] sm:$0x7]
    %s4974 = scalar_lea.vmem %s16, 3
    %v4975 = vld [vmem:[%s4974] sm:$0x7]
    %v4976 = vadd.f32 %v4969, %v4970
    %v4977 = vadd.f32 %v4976, %v4971
    %4978 = vadd.xlane.f32.xlu0 %v4977
    %v4979 = vpop.xlane.xlu0 %4978
    %v4980 = vmul.f32 %v4979, %v2125
    %v4981 = vsub.f32 %v4969, %v4980
    %v4982 = vsub.f32 %v4970, %v4980
    %v4983 = vsub.f32 %v4971, %v4980
    %v4984 = vmul.f32 %v4981, %v4981
    %v4985 = vmul.f32 %v4982, %v4982
    %v4986 = vmul.f32 %v4983, %v4983
    %v4987 = vadd.f32 %v4984, %v4985
    %v4988 = vadd.f32 %v4987, %v4986
    %4989 = vadd.xlane.f32.xlu0 %v4988
    %v4990 = vpop.xlane.xlu0 %4989
    %v4991 = vmul.f32 %v4990, %v2125
    %v4992 = vadd.f32 %v4991, 1e-05
    %v4993 = vrsqrt.pop %v4992
    %v4994 = vmul.f32 %v4981, %v4993
    %v4995 = vmul.f32 %v4982, %v4993
    %v4996 = vmul.f32 %v4983, %v4993
    %v4998 = vlaneseq
    %v4999 = vshrl.u32 %v4998, 7
    %v5000 = vsub.s32 0, %v4999
    %v5001 = vrot.slane %v4973, %v5000
    %v5002 = vlaneseq
    %v5003 = vshrl.u32 %v5002, 7
    %v5004 = vsub.s32 1, %v5003
    %v5005 = vrot.slane %v4973, %v5004
    %v5006 = vlaneseq
    %v5007 = vshrl.u32 %v5006, 7
    %v5008 = vsub.s32 2, %v5007
    %v5009 = vrot.slane %v4973, %v5008
    %v5013 = vmul.f32 %v4994, %v5001
    %v5014 = vmul.f32 %v4995, %v5005
    %v5015 = vmul.f32 %v4996, %v5009
    %v5017 = vlaneseq
    %v5018 = vshrl.u32 %v5017, 7
    %v5019 = vsub.s32 0, %v5018
    %v5020 = vrot.slane %v4975, %v5019
    %v5021 = vlaneseq
    %v5022 = vshrl.u32 %v5021, 7
    %v5023 = vsub.s32 1, %v5022
    %v5024 = vrot.slane %v4975, %v5023
    %v5025 = vlaneseq
    %v5026 = vshrl.u32 %v5025, 7
    %v5027 = vsub.s32 2, %v5026
    %v5028 = vrot.slane %v4975, %v5027
    %v5032 = vadd.f32 %v5013, %v5020
    %v5033 = vadd.f32 %v5014, %v5024
    %v5034 = vadd.f32 %v5015, %v5028
    %v5035 = vld [vmem:[%s18] sm:$0x3f]
    %v5036 = vld [vmem:[%s2] sm:$0xff]
    %v5037 = vld [vmem:[%s17] sm:$0x3f]
    %5039 = vset.pattern.permute.xlu0 0
    %5040 = vperm.xlu0 %5039, %v5036
    %v5041 = vpop.permute.xlu0 %5040
    %v5044 = vlaneseq
    %v5045 = vshrl.u32 %v5044, 7
    %v5046 = vsub.s32 0, %v5045
    %v5047 = vrot.slane %v5037, %v5046
    %v5048 = vlaneseq
    %v5049 = vshrl.u32 %v5048, 7
    %v5050 = vsub.s32 1, %v5049
    %v5051 = vrot.slane %v5037, %v5050
    %v5052 = vlaneseq
    %v5053 = vshrl.u32 %v5052, 7
    %v5054 = vsub.s32 2, %v5053
    %v5055 = vrot.slane %v5037, %v5054
    %v5056 = vlaneseq
    %v5057 = vshrl.u32 %v5056, 7
    %v5058 = vsub.s32 3, %v5057
    %v5059 = vrot.slane %v5037, %v5058
    %v5060 = vlaneseq
    %v5061 = vshrl.u32 %v5060, 7
    %v5062 = vsub.s32 4, %v5061
    %v5063 = vrot.slane %v5037, %v5062
    %v5064 = vlaneseq
    %v5065 = vshrl.u32 %v5064, 7
    %v5066 = vsub.s32 5, %v5065
    %v5067 = vrot.slane %v5037, %v5066
    %v5074 = vmul.f32 %v5041, %v5047
    %v5075 = vmul.f32 %v5041, %v5051
    %v5076 = vmul.f32 %v5041, %v5055
    %v5077 = vmul.f32 %v5041, %v5059
    %v5078 = vmul.f32 %v5041, %v5063
    %v5079 = vmul.f32 %v5041, %v5067
    %v5081 = vlaneseq
    %v5082 = vshrl.u32 %v5081, 7
    %v5083 = vsub.s32 0, %v5082
    %v5084 = vrot.slane %v5035, %v5083
    %v5085 = vlaneseq
    %v5086 = vshrl.u32 %v5085, 7
    %v5087 = vsub.s32 1, %v5086
    %v5088 = vrot.slane %v5035, %v5087
    %v5089 = vlaneseq
    %v5090 = vshrl.u32 %v5089, 7
    %v5091 = vsub.s32 2, %v5090
    %v5092 = vrot.slane %v5035, %v5091
    %v5093 = vlaneseq
    %v5094 = vshrl.u32 %v5093, 7
    %v5095 = vsub.s32 3, %v5094
    %v5096 = vrot.slane %v5035, %v5095
    %v5097 = vlaneseq
    %v5098 = vshrl.u32 %v5097, 7
    %v5099 = vsub.s32 4, %v5098
    %v5100 = vrot.slane %v5035, %v5099
    %v5101 = vlaneseq
    %v5102 = vshrl.u32 %v5101, 7
    %v5103 = vsub.s32 5, %v5102
    %v5104 = vrot.slane %v5035, %v5103
    %v5111 = vadd.f32 %v5084, %v5074
    %v5112 = vadd.f32 %v5088, %v5075
    %v5113 = vadd.f32 %v5092, %v5076
    %v5114 = vadd.f32 %v5096, %v5077
    %v5115 = vadd.f32 %v5100, %v5078
    %v5116 = vadd.f32 %v5104, %v5079
    %v5117 = vmul.f32 %v5032, %v5111
    %v5118 = vmul.f32 %v5033, %v5112
    %v5119 = vmul.f32 %v5034, %v5113
    %v5120 = vadd.f32 %v5117, %v5114
    %v5121 = vadd.f32 %v5118, %v5115
    %v5122 = vadd.f32 %v5119, %v5116
    %v5123 = vld [vmem:[%s19] sm:$0xff]
    %v5124 = vld [vmem:[%s19 + $0x8] sm:$0xff]
    %v5125 = vld [vmem:[%s19 + $0x10] sm:$0xff]
    %v5126 = vld [vmem:[%s19 + $0x18] sm:$0xff]
    %v5127 = vld [vmem:[%s19 + $0x20] sm:$0xff]
    %v5128 = vld [vmem:[%s19 + $0x28] sm:$0xff]
    %v5129 = vld [vmem:[%s19 + $0x30] sm:$0xff]
    %v5130 = vld [vmem:[%s19 + $0x38] sm:$0xff]
    %v5131 = vld [vmem:[%s19 + $0x40] sm:$0xff]
    %v5132 = vld [vmem:[%s19 + $0x48] sm:$0xff]
    %v5133 = vld [vmem:[%s19 + $0x50] sm:$0xff]
    %v5134 = vld [vmem:[%s19 + $0x58] sm:$0xff]
    %v5135 = vld [vmem:[%s19 + $0x60] sm:$0xff]
    %v5136 = vld [vmem:[%s19 + $0x68] sm:$0xff]
    %v5137 = vld [vmem:[%s19 + $0x70] sm:$0xff]
    %v5138 = vld [vmem:[%s19 + $0x78] sm:$0xff]
    %v5139 = vld [vmem:[%s19 + $0x80] sm:$0xff]
    %v5140 = vld [vmem:[%s19 + $0x88] sm:$0xff]
    %v5141 = vld [vmem:[%s19 + $0x90] sm:$0xff]
    %v5142 = vld [vmem:[%s19 + $0x98] sm:$0xff]
    %v5143 = vld [vmem:[%s19 + $0xa0] sm:$0xff]
    %v5144 = vld [vmem:[%s19 + $0xa8] sm:$0xff]
    %v5145 = vld [vmem:[%s19 + $0xb0] sm:$0xff]
    %v5146 = vld [vmem:[%s19 + $0xb8] sm:$0xff]
    %v5147 = vld [vmem:[%s19 + $0xc0] sm:$0xff]
    %v5148 = vld [vmem:[%s19 + $0xc8] sm:$0xff]
    %v5149 = vld [vmem:[%s19 + $0xd0] sm:$0xff]
    %v5150 = vld [vmem:[%s19 + $0xd8] sm:$0xff]
    %v5151 = vld [vmem:[%s19 + $0xe0] sm:$0xff]
    %v5152 = vld [vmem:[%s19 + $0xe8] sm:$0xff]
    %v5153 = vld [vmem:[%s19 + $0xf0] sm:$0xff]
    %v5154 = vld [vmem:[%s19 + $0xf8] sm:$0xff]
    %v5155 = vld [vmem:[%s19 + $0x100] sm:$0xff]
    %v5156 = vld [vmem:[%s19 + $0x108] sm:$0xff]
    %v5157 = vld [vmem:[%s19 + $0x110] sm:$0xff]
    %v5158 = vld [vmem:[%s19 + $0x118] sm:$0xff]
    %v5159 = vld [vmem:[%s19 + $0x120] sm:$0xff]
    %v5160 = vld [vmem:[%s19 + $0x128] sm:$0xff]
    %v5161 = vld [vmem:[%s19 + $0x130] sm:$0xff]
    %v5162 = vld [vmem:[%s19 + $0x138] sm:$0xff]
    %v5163 = vld [vmem:[%s19 + $0x140] sm:$0xff]
    %v5164 = vld [vmem:[%s19 + $0x148] sm:$0xff]
    %v5165 = vld [vmem:[%s19 + $0x150] sm:$0xff]
    %v5166 = vld [vmem:[%s19 + $0x158] sm:$0xff]
    %v5167 = vld [vmem:[%s19 + $0x160] sm:$0xff]
    %v5168 = vld [vmem:[%s19 + $0x168] sm:$0xff]
    %v5169 = vld [vmem:[%s19 + $0x170] sm:$0xff]
    %v5170 = vld [vmem:[%s19 + $0x178] sm:$0xff]
    %v5171 = vld [vmem:[#allocation2] sm:$0x1]
    %v5173 = vlaneseq
    %v5174 = vshrl.u32 %v5173, 7
    %v5175 = vsub.s32 0, %v5174
    %v5176 = vrot.slane %v5171, %v5175
    %5178 = vmatprep.subr.mxu0 0.0
    %5179 = vmatpush1.msra.mxu0 %v5123
    %5180 = vmatprep.subr.mxu0 0.0
    %5181 = vmatpush1.msra.mxu0 %v5124
    %5182 = vmatprep.subr.mxu0 0.0
    %5183 = vmatpush1.msra.mxu0 %v5125
    %5184 = vmatprep.subr.mxu0 0.0
    %5185 = vmatpush1.msra.mxu0 %v5126
    %5186 = vmatprep.subr.mxu0 0.0
    %5187 = vmatpush1.msra.mxu0 %v5127
    %5188 = vmatprep.subr.mxu0 0.0
    %5189 = vmatpush1.msra.mxu0 %v5128
    %5190 = vmatprep.subr.mxu0 0.0
    %5191 = vmatpush1.msra.mxu0 %v5129
    %5192 = vmatprep.subr.mxu0 0.0
    %5193 = vmatpush1.msra.mxu0 %v5130
    %5194 = vmatprep.subr.mxu0 0.0
    %5195 = vmatpush1.msra.mxu0 %v5131
    %5196 = vmatprep.subr.mxu0 0.0
    %5197 = vmatpush1.msra.mxu0 %v5132
    %5198 = vmatprep.subr.mxu0 0.0
    %5199 = vmatpush1.msra.mxu0 %v5133
    %5200 = vmatprep.subr.mxu0 0.0
    %5201 = vmatpush1.msra.mxu0 %v5134
    %5202 = vmatprep.subr.mxu0 0.0
    %5203 = vmatpush1.msra.mxu0 %v5135
    %5204 = vmatprep.subr.mxu0 0.0
    %5205 = vmatpush1.msra.mxu0 %v5136
    %5206 = vmatprep.subr.mxu0 0.0
    %5207 = vmatpush1.msra.mxu0 %v5137
    %5208 = vmatprep.subr.mxu0 0.0
    %5209 = vmatpush1.msra.mxu0 %v5138
    %5210 = vmatprep.subr.mxu0 0.0
    %5211 = vmatpush1.msra.mxu0 %v5139
    %5212 = vmatprep.subr.mxu0 0.0
    %5213 = vmatpush1.msra.mxu0 %v5140
    %5214 = vmatprep.subr.mxu0 0.0
    %5215 = vmatpush1.msra.mxu0 %v5141
    %5216 = vmatprep.subr.mxu0 0.0
    %5217 = vmatpush1.msra.mxu0 %v5142
    %5218 = vmatprep.subr.mxu0 0.0
    %5219 = vmatpush1.msra.mxu0 %v5143
    %5220 = vmatprep.subr.mxu0 0.0
    %5221 = vmatpush1.msra.mxu0 %v5144
    %5222 = vmatprep.subr.mxu0 0.0
    %5223 = vmatpush1.msra.mxu0 %v5145
    %5224 = vmatprep.subr.mxu0 0.0
    %5225 = vmatpush1.msra.mxu0 %v5146
    %5226 = vmatprep.subr.mxu0 0.0
    %5227 = vmatpush1.msra.mxu0 %v5147
    %5228 = vmatprep.subr.mxu0 0.0
    %5229 = vmatpush1.msra.mxu0 %v5148
    %5230 = vmatprep.subr.mxu0 0.0
    %5231 = vmatpush1.msra.mxu0 %v5149
    %5232 = vmatprep.subr.mxu0 0.0
    %5233 = vmatpush1.msra.mxu0 %v5150
    %5234 = vmatprep.subr.mxu0 0.0
    %5235 = vmatpush1.msra.mxu0 %v5151
    %5236 = vmatprep.subr.mxu0 0.0
    %5237 = vmatpush1.msra.mxu0 %v5152
    %5238 = vmatprep.subr.mxu0 0.0
    %5239 = vmatpush1.msra.mxu0 %v5153
    %5240 = vmatprep.subr.mxu0 0.0
    %5241 = vmatpush1.msra.mxu0 %v5154
    %5242 = vmatprep.mubr.f32.mxu0 %v5121
    %5243 = vmatmul.mubr.f32.gmra.mrb[0].mxu0 %v5120
    %v5244 = vpop.f32.mrb[0].mxu0
    %v5245 = vadd.f32 %v5176, %v5244
    %v5246 = vpop.f32.mrb[0].mxu0
    %5247 = vdwg.mxu0
    %5248 = vmatprep.subr.mxu0 0.0
    %5249 = vmatpush1.msra.mxu0 %v5155
    %5250 = vmatprep.subr.mxu0 0.0
    %5251 = vmatpush1.msra.mxu0 %v5156
    %5252 = vmatprep.subr.mxu0 0.0
    %5253 = vmatpush1.msra.mxu0 %v5157
    %5254 = vmatprep.subr.mxu0 0.0
    %5255 = vmatpush1.msra.mxu0 %v5158
    %5256 = vmatprep.subr.mxu0 0.0
    %5257 = vmatpush1.msra.mxu0 %v5159
    %5258 = vmatprep.subr.mxu0 0.0
    %5259 = vmatpush1.msra.mxu0 %v5160
    %5260 = vmatprep.subr.mxu0 0.0
    %5261 = vmatpush1.msra.mxu0 %v5161
    %5262 = vmatprep.subr.mxu0 0.0
    %5263 = vmatpush1.msra.mxu0 %v5162
    %5264 = vmatprep.subr.mxu0 0.0
    %5265 = vmatpush1.msra.mxu0 %v5163
    %5266 = vmatprep.subr.mxu0 0.0
    %5267 = vmatpush1.msra.mxu0 %v5164
    %5268 = vmatprep.subr.mxu0 0.0
    %5269 = vmatpush1.msra.mxu0 %v5165
    %5270 = vmatprep.subr.mxu0 0.0
    %5271 = vmatpush1.msra.mxu0 %v5166
    %5272 = vmatprep.subr.mxu0 0.0
    %5273 = vmatpush1.msra.mxu0 %v5167
    %5274 = vmatprep.subr.mxu0 0.0
    %5275 = vmatpush1.msra.mxu0 %v5168
    %5276 = vmatprep.subr.mxu0 0.0
    %5277 = vmatpush1.msra.mxu0 %v5169
    %5278 = vmatprep.subr.mxu0 0.0
    %5279 = vmatpush1.msra.mxu0 %v5170
    %5280 = vmatprep.subr.mxu0 0.0
    %5281 = vmatpush1.msra.mxu0 0.0
    %5282 = vmatprep.subr.mxu0 0.0
    %5283 = vmatpush1.msra.mxu0 0.0
    %5284 = vmatprep.subr.mxu0 0.0
    %5285 = vmatpush1.msra.mxu0 0.0
    %5286 = vmatprep.subr.mxu0 0.0
    %5287 = vmatpush1.msra.mxu0 0.0
    %5288 = vmatprep.subr.mxu0 0.0
    %5289 = vmatpush1.msra.mxu0 0.0
    %5290 = vmatprep.subr.mxu0 0.0
    %5291 = vmatpush1.msra.mxu0 0.0
    %5292 = vmatprep.subr.mxu0 0.0
    %5293 = vmatpush1.msra.mxu0 0.0
    %5294 = vmatprep.subr.mxu0 0.0
    %5295 = vmatpush1.msra.mxu0 0.0
    %5296 = vmatprep.subr.mxu0 0.0
    %5297 = vmatpush1.msra.mxu0 0.0
    %5298 = vmatprep.subr.mxu0 0.0
    %5299 = vmatpush1.msra.mxu0 0.0
    %5300 = vmatprep.subr.mxu0 0.0
    %5301 = vmatpush1.msra.mxu0 0.0
    %5302 = vmatprep.subr.mxu0 0.0
    %5303 = vmatpush1.msra.mxu0 0.0
    %5304 = vmatprep.subr.mxu0 0.0
    %5305 = vmatpush1.msra.mxu0 0.0
    %5306 = vmatprep.subr.mxu0 0.0
    %5307 = vmatpush1.msra.mxu0 0.0
    %5308 = vmatprep.subr.mxu0 0.0
    %5309 = vmatpush1.msra.mxu0 0.0
    %5310 = vmatprep.subr.mxu0 0.0
    %5311 = vmatpush1.msra.mxu0 0.0
    %5312 = vmatprep.mubr.f32.mxu0 0.0
    %5313 = vmatmul.mubr.f32.gmra.mrb[0].mxu0 %v5122
    %v5314 = vpop.f32.mrb[0].mxu0
    %v5315 = vadd.f32 %v5245, %v5314
    %v5316 = vpop.f32.mrb[0].mxu0
    %5317 = vdwg.mxu0
    %vm5318 = vcmask 7168
    %5319 = vst.msk [vmem:[%s21] sm:$0xff] %vm5318, %v5315
    %v5320 = vld [vmem:[%s3] sm:$0xff]
    %v5321 = vsub.f32 %v5315, %v5320
    %v5322 = vld [vmem:[%s4] sm:$0xff]
    %v5323 = vmul.f32 %v5322, %v5321
    %v5324 = vmul.f32 %v5323, %v5321
    %v5325 = vsel %vm5318, %v5324, 0.0
    %5326 = vadd.xlane.f32.xlu0 %v5325
    %v5327 = vpop.xlane.xlu0 %5326
    %v5328 = vrot.slane %v5327, 4
    %v5329 = vadd.f32 %v5327, %v5328
    %v5330 = vrot.slane %v5329, 2
    %v5331 = vadd.f32 %v5329, %v5330
    %v5332 = vrot.slane %v5331, 1
    %v5333 = vadd.f32 %v5331, %v5332
    %s5334 = vtos %v5333
    %v5335 = vstv %s5334
    %vm5336 = vcmask 0
    %5337 = vst.msk [vmem:[#allocation11] sm:$0x1] %vm5336, %v5335
    // Predicated region
    $region102: #{tpu_custom_call.1} parent=1 // pred_check
      _
    $region103: #{tpu_custom_call.1} parent=1 // pred_check_branch
      %5339 = sbr.rel (0) target = $region105
    $region104: #{tpu_custom_call.1} parent=1 // pred_region
      _
    $region105: #{tpu_custom_call.1} parent=1 // pred_fallthru
      _
    // Predicated region
    $region106: #{tpu_custom_call.1} parent=1 // pred_check
      _
    $region107: #{tpu_custom_call.1} parent=1 // pred_check_branch
      %5341 = sbr.rel (0) target = $region109
    $region108: #{tpu_custom_call.1} parent=1 // pred_region
      %s5343 = ssub.s32 16, 16
      %5344 = vsyncadd [#allocation5], %s5343
      %s5346 = sshll.u32 [#allocation11], 4
      %s5347 = int_to_ptr.vmem [resolvable:$true] %s5346
      %5349 = dma.vmem_to_hbm [thread:$0]  %s5347, 16, %s22, [#allocation5]
    $region109: #{tpu_custom_call.1} parent=1 // pred_fallthru
      _
    // Predicated region
    $region110: #{tpu_custom_call.1} parent=1 // pred_check
      _
    $region111: #{tpu_custom_call.1} parent=1 // pred_check_branch
      %5351 = sbr.rel (0) target = $region113
    $region112: #{tpu_custom_call.1} parent=1 // pred_region
      _
    $region113: #{tpu_custom_call.1} parent=1 // pred_fallthru
      _
    // Predicated region
    $region114: #{tpu_custom_call.1} parent=1 // pred_check
      _
    $region115: #{tpu_custom_call.1} parent=1 // pred_check_branch
      %5353 = sbr.rel (0) target = $region117
    $region116: #{tpu_custom_call.1} parent=1 // pred_region
      %5354 = dma.done [#allocation5], 16
    $region117: #{tpu_custom_call.1} parent=1 // pred_fallthru
      _
    %5355 = vsyncpa [#allocation4], 1
    %5356 = vsyncpa [#allocation7], 1
    %5357 = vsyncpa [#allocation10], 1
    %5358 = vsyncpa [#allocation5], 1

</llo_original>
